<compile_context>
chip_gen: v7x
topology: tpu7x:2x2x1
jax: 0.10.0
libtpu: 0.0.40
codegen_flags: <defaults>
</compile_context>

<pallas_src>
import functools

import numpy as np
import jax
import jax.numpy as jnp
from jax import lax
from jax.experimental import pallas as pl
from jax.experimental.pallas import tpu as pltpu


# ------------------------------- kernel ------------------------------------


def _conv3x3_relu(x_flat, w_ref, b_ref, pad_ref, mask_l, mask_r, H, W):
    """3x3 conv, stride 1, padding 1, on a flattened (H*W, Cin) image.

    A zero-margined flat copy of the image lives in VMEM scratch `pad_ref`
    (shape (H*W + 2*(W+1), Cin), bf16).  Each of the 9 taps is a shifted static
    slice of that buffer (row over/underflow lands in the zero margins)
    combined with a hoisted column-validity mask and fed to an MXU matmul
    accumulating in f32.
    """
    HW = H * W
    cin = pad_ref.shape[-1]
    cout = w_ref.shape[-1]
    margin = W + 1

    # Zero only the top/bottom margins; the interior is fully overwritten.
    zeros = jnp.zeros((margin, cin), pad_ref.dtype)
    pad_ref[pl.ds(0, margin), :] = zeros
    pad_ref[pl.ds(margin + HW, margin), :] = zeros
    pad_ref[pl.ds(margin, HW), :] = x_flat.astype(pad_ref.dtype)

    zero = jnp.zeros((), pad_ref.dtype)
    acc = jnp.zeros((HW, cout), jnp.float32)
    for oy in (-1, 0, 1):
        for ox in (-1, 0, 1):
            start = margin + oy * W + ox            # static offset
            patch = pad_ref[pl.ds(start, HW), :]    # (HW, cin) bf16
            if ox == -1:
                patch = jnp.where(mask_l, patch, zero)
            elif ox == 1:
                patch = jnp.where(mask_r, patch, zero)
            acc = acc + jnp.dot(patch, w_ref[oy + 1, ox + 1],
                                preferred_element_type=jnp.float32)
    return jnp.maximum(acc + b_ref[...], 0.0)


def block35_kernel(x_ref,
                   ws_ref, bs_ref,
                   wf_ref, bf_ref,
                   w2c_ref, b2c_ref,
                   wu_ref, bu_ref,
                   out_ref,
                   pad64_ref, pad48_ref,
                   *, H, W):
    HW = H * W
    x = x_ref[0].astype(jnp.float32)                        # (HW, 320)

    # Fused stem: one (HW,320)x(320,96) bf16 matmul covers the three 1x1 convs.
    stem = jnp.dot(x.astype(jnp.bfloat16), ws_ref[...],
                   preferred_element_type=jnp.float32)
    stem = jnp.maximum(stem + bs_ref[...], 0.0)             # (HW, 96) f32

    x0 = stem[:, 0:32]        # branch0 output
    s12 = stem[:, 32:96]      # branch1 stem ++ branch2 stem (adjacent lanes)

    # Hoisted column-edge masks, shared by every 3x3 conv.
    col = lax.broadcasted_iota(jnp.int32, (HW, 1), 0) % W
    mask_l = col >= 1
    mask_r = col <= W - 2

    # Fused 3x3: branch1 (32->32) and branch2 first 3x3 (32->48) via a
    # block-diagonal (3,3,64,80) weight — one padded buffer, 9 taps total.
    y = _conv3x3_relu(s12, wf_ref, bf_ref, pad64_ref, mask_l, mask_r, H, W)
    x1 = y[:, 0:32]           # branch1 output
    t2 = y[:, 32:80]          # branch2 intermediate (48 ch)

    # branch2 second 3x3: 48 -> 64
    x2 = _conv3x3_relu(t2, w2c_ref, b2c_ref, pad48_ref, mask_l, mask_r, H, W)

    # Fused up-projection: concat([x0,x1,x2], lane) @ (128, 320) in one matmul.
    # (scale is folded into wu/bu by the wrapper.)
    cat = jnp.concatenate([x0.astype(jnp.bfloat16),
                           x1.astype(jnp.bfloat16),
                           x2.astype(jnp.bfloat16)], axis=-1)   # (HW, 128)
    up = jnp.dot(cat, wu_ref[...],
                 preferred_element_type=jnp.float32) + bu_ref[...]

    out = jnp.maximum(up + x, 0.0)                          # residual + ReLU
    out_ref[0] = out.astype(out_ref.dtype)


# ------------------------------- wrapper ------------------------------------


def block35_forward(x_nchw, params, scale=1.0):
    N, C, H, W = x_nchw.shape
    assert C == 320, "Block35 expects 320 input channels"
    HW = H * W
    x_flat = jnp.transpose(x_nchw, (0, 2, 3, 1)).reshape(N, HW, C)

    bf16 = jnp.bfloat16
    # Fold the three stem 1x1 weights into one (320, 96) matrix / (1, 96) bias.
    w_stem = jnp.concatenate(
        [params["w0"], params["w1a"], params["w2a"]], axis=1).astype(bf16)
    b_stem = jnp.concatenate(
        [params["b0"], params["b1a"], params["b2a"]], axis=1)

    # Block-diagonal fused weight for branch1 3x3 and branch2's first 3x3.
    wf = jnp.zeros((3, 3, 64, 80), jnp.float32)
    wf = wf.at[:, :, 0:32, 0:32].set(params["w1b"])
    wf = wf.at[:, :, 32:64, 32:80].set(params["w2b"])
    wf = wf.astype(bf16)
    bfused = jnp.concatenate([params["b1b"], params["b2b"]], axis=1)   # (1, 80)

    # Pre-concatenated up-projection weight (128, 320) with scale folded in.
    wu = (jnp.concatenate([params["wu0"], params["wu1"], params["wu2"]],
                          axis=0) * scale).astype(bf16)
    bu = params["bu"] * scale

    plist = [w_stem, b_stem,
             wf, bfused,
             params["w2c"].astype(bf16), params["b2c"],
             wu, bu]

    def full_spec(p):
        nd = p.ndim
        return pl.BlockSpec(p.shape, lambda n, _nd=nd: (0,) * _nd)

    in_specs = [pl.BlockSpec((1, HW, C), lambda n: (n, 0, 0))]
    in_specs += [full_spec(p) for p in plist]

    out_flat = pl.pallas_call(
        functools.partial(block35_kernel, H=H, W=W),
        out_shape=jax.ShapeDtypeStruct((N, HW, C), x_nchw.dtype),
        grid=(N,),
        in_specs=in_specs,
        out_specs=pl.BlockSpec((1, HW, C), lambda n: (n, 0, 0)),
        scratch_shapes=[
            pltpu.VMEM((HW + 2 * (W + 1), 64), jnp.bfloat16),
            pltpu.VMEM((HW + 2 * (W + 1), 48), jnp.bfloat16),
        ],
        compiler_params=pltpu.CompilerParams(
            dimension_semantics=("parallel",)),   # batch is truly independent
    )(x_flat, *plist)

    return jnp.transpose(out_flat.reshape(N, H, W, C), (0, 3, 1, 2))


# ------------------------- parameter construction ---------------------------


def init_params(key):
    """Deterministic synthetic parameters with BN folded (eval mode)."""
    eps = 1e-3

    def conv_w(k, shape, fan_in):
        return jax.random.normal(k, shape, jnp.float32) / np.sqrt(fan_in)

    def fold_bn(w, k_bn, cout):
        kg, kb, km, kv = jax.random.split(k_bn, 4)
        gamma = jax.random.uniform(kg, (cout,), jnp.float32, 0.5, 1.5)
        beta = 0.1 * jax.random.normal(kb, (cout,), jnp.float32)
        mean = 0.1 * jax.random.normal(km, (cout,), jnp.float32)
        var = jax.random.uniform(kv, (cout,), jnp.float32, 0.5, 1.5)
        s = gamma / jnp.sqrt(var + eps)
        return w * s, (beta - mean * s).reshape(1, cout)

    ks = jax.random.split(key, 14)

    w0, b0 = fold_bn(conv_w(ks[0], (320, 32), 320), ks[1], 32)
    w1a, b1a = fold_bn(conv_w(ks[2], (320, 32), 320), ks[3], 32)
    w1b, b1b = fold_bn(conv_w(ks[4], (3, 3, 32, 32), 9 * 32), ks[5], 32)
    w2a, b2a = fold_bn(conv_w(ks[6], (320, 32), 320), ks[7], 32)
    w2b, b2b = fold_bn(conv_w(ks[8], (3, 3, 32, 48), 9 * 32), ks[9], 48)
    w2c, b2c = fold_bn(conv_w(ks[10], (3, 3, 48, 64), 9 * 48), ks[11], 64)

    wu = conv_w(ks[12], (128, 320), 128)                   # final 1x1, has bias
    bu = (0.1 * jax.random.normal(ks[13], (320,), jnp.float32)).reshape(1, 320)

    return dict(w0=w0, b0=b0,
                w1a=w1a, b1a=b1a, w1b=w1b, b1b=b1b,
                w2a=w2a, b2a=b2a, w2b=w2b, b2b=b2b, w2c=w2c, b2c=b2c,
                wu0=wu[:32], wu1=wu[32:64], wu2=wu[64:], bu=bu)


# ---------------------------- pure-JAX reference -----------------------------


def block35_reference(x_nchw, p, scale=1.0):
    x = jnp.transpose(x_nchw, (0, 2, 3, 1))                # NHWC

    def c1(h, w, b):
        return jnp.maximum(jnp.einsum("nhwc,cd->nhwd", h, w) + b.reshape(-1), 0.0)

    def c3(h, w, b):
        y = lax.conv_general_dilated(
            h, w, window_strides=(1, 1), padding=((1, 1), (1, 1)),
            dimension_numbers=("NHWC", "HWIO", "NHWC"))
        return jnp.maximum(y + b.reshape(-1), 0.0)

    x0 = c1(x, p["w0"], p["b0"])
    x1 = c3(c1(x, p["w1a"], p["b1a"]), p["w1b"], p["b1b"])
    x2 = c3(c3(c1(x, p["w2a"], p["b2a"]), p["w2b"], p["b2b"]), p["w2c"], p["b2c"])
    cat = jnp.concatenate([x0, x1, x2], axis=-1)
    wu = jnp.concatenate([p["wu0"], p["wu1"], p["wu2"]], axis=0)
    up = jnp.einsum("nhwc,cd->nhwd", cat, wu) + p["bu"].reshape(-1)
    out = jnp.maximum(up * scale + x, 0.0)
    return jnp.transpose(out, (0, 3, 1, 2))


# ----------------------------------- main ------------------------------------

if __name__ == "__main__":
    key = jax.random.PRNGKey(0)
    kx, kp = jax.random.split(key)

    # Small but module-consistent shape: channels are fixed at 320 by Block35.
    N, C, H, W = 2, 320, 8, 8
    x = jax.random.normal(kx, (N, C, H, W), jnp.float32)
    params = init_params(kp)
    scale = 0.17

    out = jax.block_until_ready(block35_forward(x, params, scale))
    ref = jax.block_until_ready(block35_reference(x, params, scale))

    assert out.shape == x.shape and out.dtype == x.dtype
    # Tolerance accommodates bf16 MXU operands in the kernel (f32 accumulation).
    if not np.allclose(np.asarray(out), np.asarray(ref), atol=3e-2, rtol=3e-2):
        raise AssertionError(
            f"kernel/reference mismatch, max abs err = "
            f"{float(jnp.max(jnp.abs(out - ref)))}")

    print("KERNEL_OK")
</pallas_src>

<mosaic_0001>
module attributes {stable_mosaic.version = 11 : i64} {
  func.func @block35_kernel(%arg0: i32, %arg1: memref<1x64x320xf32, #tpu.memory_space<vmem>>, %arg2: memref<320x96xbf16, #tpu.memory_space<vmem>>, %arg3: memref<1x96xf32, #tpu.memory_space<vmem>>, %arg4: memref<3x3x64x80xbf16, #tpu.memory_space<vmem>>, %arg5: memref<1x80xf32, #tpu.memory_space<vmem>>, %arg6: memref<3x3x48x64xbf16, #tpu.memory_space<vmem>>, %arg7: memref<1x64xf32, #tpu.memory_space<vmem>>, %arg8: memref<128x320xbf16, #tpu.memory_space<vmem>>, %arg9: memref<1x320xf32, #tpu.memory_space<vmem>>, %arg10: memref<1x64x320xf32, #tpu.memory_space<vmem>>, %arg11: memref<82x64xbf16, #tpu.memory_space<vmem>>, %arg12: memref<82x48xbf16, #tpu.memory_space<vmem>>) attributes {dimension_semantics = [#tpu.dimension_semantics<parallel>], iteration_bounds = array<i64: 2>, scalar_prefetch = 0 : i64, scratch_operands = 2 : i64, tpu.core_type = #tpu.core_type<tc>, window_params = [{transform_indices = @transform_0, window_bounds = array<i64: 1, 64, 320>}, {pipeline_mode = #tpu.pipeline_mode<synchronous>, transform_indices = @transform_1, window_bounds = array<i64: 320, 96>}, {pipeline_mode = #tpu.pipeline_mode<synchronous>, transform_indices = @transform_2, window_bounds = array<i64: 1, 96>}, {pipeline_mode = #tpu.pipeline_mode<synchronous>, transform_indices = @transform_3, window_bounds = array<i64: 3, 3, 64, 80>}, {pipeline_mode = #tpu.pipeline_mode<synchronous>, transform_indices = @transform_4, window_bounds = array<i64: 1, 80>}, {pipeline_mode = #tpu.pipeline_mode<synchronous>, transform_indices = @transform_5, window_bounds = array<i64: 3, 3, 48, 64>}, {pipeline_mode = #tpu.pipeline_mode<synchronous>, transform_indices = @transform_6, window_bounds = array<i64: 1, 64>}, {pipeline_mode = #tpu.pipeline_mode<synchronous>, transform_indices = @transform_7, window_bounds = array<i64: 128, 320>}, {pipeline_mode = #tpu.pipeline_mode<synchronous>, transform_indices = @transform_8, window_bounds = array<i64: 1, 320>}, {transform_indices = @transform_9, window_bounds = array<i64: 1, 64, 320>}]} {
    %c0 = arith.constant 0 : index
    %c0_0 = arith.constant 0 : index
    %c0_1 = arith.constant 0 : index
    %0 = vector.load %arg1[%c0, %c0_0, %c0_1] : memref<1x64x320xf32, #tpu.memory_space<vmem>>, vector<1x64x320xf32>
    %1 = vector.shape_cast %0 : vector<1x64x320xf32> to vector<64x320xf32>
    %2 = arith.truncf %1 : vector<64x320xf32> to vector<64x320xbf16>
    %c0_2 = arith.constant 0 : index
    %c0_3 = arith.constant 0 : index
    %3 = vector.load %arg2[%c0_2, %c0_3] : memref<320x96xbf16, #tpu.memory_space<vmem>>, vector<320x96xbf16>
    %cst = arith.constant dense<0.000000e+00> : vector<64x96xf32>
    %4 = tpu.matmul %2, %3, %cst {dimension_numbers = #tpu.dot_dimension_numbers<[1], [0], [0], [1], [0, 0, 1, 1], [], []>} : vector<64x320xbf16>, vector<320x96xbf16>, vector<64x96xf32> -> vector<64x96xf32>
    %c0_4 = arith.constant 0 : index
    %c0_5 = arith.constant 0 : index
    %5 = vector.load %arg3[%c0_4, %c0_5] : memref<1x96xf32, #tpu.memory_space<vmem>>, vector<1x96xf32>
    %6 = vector.broadcast %5 : vector<1x96xf32> to vector<64x96xf32>
    %7 = arith.addf %4, %6 : vector<64x96xf32>
    %cst_6 = arith.constant 0.000000e+00 : f32
    %8 = vector.broadcast %cst_6 : f32 to vector<64x96xf32>
    %9 = arith.maximumf %7, %8 : vector<64x96xf32>
    %10 = vector.extract_strided_slice %9 {offsets = [0, 0], sizes = [64, 32], strides = [1, 1]} : vector<64x96xf32> to vector<64x32xf32>
    %11 = vector.extract_strided_slice %9 {offsets = [0, 32], sizes = [64, 64], strides = [1, 1]} : vector<64x96xf32> to vector<64x64xf32>
    %12 = tpu.iota {dimensions = array<i32: 0>} : vector<64x1xi32>
    %c8_i32 = arith.constant 8 : i32
    %c0_i32 = arith.constant 0 : i32
    %13 = arith.cmpi eq, %c8_i32, %c0_i32 : i32
    %c1_i32 = arith.constant 1 : i32
    %14 = arith.select %13, %c1_i32, %c8_i32 : i32
    %15 = vector.broadcast %14 : i32 to vector<64x1xi32>
    %16 = arith.remsi %12, %15 : vector<64x1xi32>
    %c0_i32_7 = arith.constant 0 : i32
    %17 = vector.broadcast %c0_i32_7 : i32 to vector<64x1xi32>
    %18 = arith.cmpi ne, %16, %17 : vector<64x1xi32>
    %c0_i32_8 = arith.constant 0 : i32
    %19 = vector.broadcast %c0_i32_8 : i32 to vector<64x1xi32>
    %20 = arith.cmpi slt, %16, %19 : vector<64x1xi32>
    %c0_i32_9 = arith.constant 0 : i32
    %21 = arith.cmpi slt, %14, %c0_i32_9 : i32
    %22 = vector.broadcast %21 : i1 to vector<64x1xi1>
    %23 = vector.broadcast %22 : vector<64x1xi1> to vector<64x1xi1>
    %24 = arith.xori %20, %23 : vector<64x1xi1>
    %25 = arith.andi %24, %18 : vector<64x1xi1>
    %26 = vector.broadcast %14 : i32 to vector<64x1xi32>
    %27 = arith.addi %16, %26 : vector<64x1xi32>
    %28 = arith.select %25, %27, %16 : vector<64x1xi1>, vector<64x1xi32>
    %c1_i32_10 = arith.constant 1 : i32
    %29 = vector.broadcast %c1_i32_10 : i32 to vector<64x1xi32>
    %30 = arith.cmpi sge, %28, %29 : vector<64x1xi32>
    %c6_i32 = arith.constant 6 : i32
    %31 = vector.broadcast %c6_i32 : i32 to vector<64x1xi32>
    %32 = arith.cmpi sle, %28, %31 : vector<64x1xi32>
    %cst_11 = arith.constant 0.000000e+00 : bf16
    %33 = vector.broadcast %cst_11 : bf16 to vector<9x64xbf16>
    %c0_12 = arith.constant 0 : index
    %c0_13 = arith.constant 0 : index
    %34 = vector.load %arg11[%c0_12, %c0_13] : memref<82x64xbf16, #tpu.memory_space<vmem>>, vector<9x64xbf16>
    tpu.vector_store %arg11[%c0_12, %c0_13], %33 {strides = array<i32>} : memref<82x64xbf16, #tpu.memory_space<vmem>>, vector<9x64xbf16>,
    %c73 = arith.constant 73 : index
    %c0_14 = arith.constant 0 : index
    %35 = vector.load %arg11[%c73, %c0_14] : memref<82x64xbf16, #tpu.memory_space<vmem>>, vector<9x64xbf16>
    tpu.vector_store %arg11[%c73, %c0_14], %33 {strides = array<i32>} : memref<82x64xbf16, #tpu.memory_space<vmem>>, vector<9x64xbf16>,
    %36 = arith.truncf %11 : vector<64x64xf32> to vector<64x64xbf16>
    %c9 = arith.constant 9 : index
    %c0_15 = arith.constant 0 : index
    %37 = vector.load %arg11[%c9, %c0_15] : memref<82x64xbf16, #tpu.memory_space<vmem>>, vector<64x64xbf16>
    tpu.vector_store %arg11[%c9, %c0_15], %36 {strides = array<i32>} : memref<82x64xbf16, #tpu.memory_space<vmem>>, vector<64x64xbf16>,
    %cst_16 = arith.constant 0.000000e+00 : f32
    %38 = vector.broadcast %cst_16 : f32 to vector<64x80xf32>
    %c0_17 = arith.constant 0 : index
    %c0_18 = arith.constant 0 : index
    %39 = vector.load %arg11[%c0_17, %c0_18] : memref<82x64xbf16, #tpu.memory_space<vmem>>, vector<64x64xbf16>
    %cst_19 = arith.constant 0.000000e+00 : bf16
    %40 = vector.shape_cast %30 : vector<64x1xi1> to vector<64x1xi1>
    %41 = vector.broadcast %40 : vector<64x1xi1> to vector<64x64xi1>
    %42 = vector.broadcast %cst_19 : bf16 to vector<64x64xbf16>
    %43 = arith.select %41, %39, %42 : vector<64x64xi1>, vector<64x64xbf16>
    %c0_20 = arith.constant 0 : index
    %c0_21 = arith.constant 0 : index
    %c0_22 = arith.constant 0 : index
    %c0_23 = arith.constant 0 : index
    %44 = vector.load %arg4[%c0_20, %c0_21, %c0_22, %c0_23] : memref<3x3x64x80xbf16, #tpu.memory_space<vmem>>, vector<1x1x64x80xbf16>
    %45 = vector.shape_cast %44 : vector<1x1x64x80xbf16> to vector<64x80xbf16>
    %cst_24 = arith.constant dense<0.000000e+00> : vector<64x80xf32>
    %46 = tpu.matmul %43, %45, %cst_24 {dimension_numbers = #tpu.dot_dimension_numbers<[1], [0], [0], [1], [0, 0, 1, 1], [], []>} : vector<64x64xbf16>, vector<64x80xbf16>, vector<64x80xf32> -> vector<64x80xf32>
    %47 = arith.addf %38, %46 : vector<64x80xf32>
    %c1 = arith.constant 1 : index
    %c0_25 = arith.constant 0 : index
    %48 = vector.load %arg11[%c1, %c0_25] : memref<82x64xbf16, #tpu.memory_space<vmem>>, vector<64x64xbf16>
    %c0_26 = arith.constant 0 : index
    %c1_27 = arith.constant 1 : index
    %c0_28 = arith.constant 0 : index
    %c0_29 = arith.constant 0 : index
    %49 = vector.load %arg4[%c0_26, %c1_27, %c0_28, %c0_29] : memref<3x3x64x80xbf16, #tpu.memory_space<vmem>>, vector<1x1x64x80xbf16>
    %50 = vector.shape_cast %49 : vector<1x1x64x80xbf16> to vector<64x80xbf16>
    %cst_30 = arith.constant dense<0.000000e+00> : vector<64x80xf32>
    %51 = tpu.matmul %48, %50, %cst_30 {dimension_numbers = #tpu.dot_dimension_numbers<[1], [0], [0], [1], [0, 0, 1, 1], [], []>} : vector<64x64xbf16>, vector<64x80xbf16>, vector<64x80xf32> -> vector<64x80xf32>
    %52 = arith.addf %47, %51 : vector<64x80xf32>
    %c2 = arith.constant 2 : index
    %c0_31 = arith.constant 0 : index
    %53 = vector.load %arg11[%c2, %c0_31] : memref<82x64xbf16, #tpu.memory_space<vmem>>, vector<64x64xbf16>
    %cst_32 = arith.constant 0.000000e+00 : bf16
    %54 = vector.shape_cast %32 : vector<64x1xi1> to vector<64x1xi1>
    %55 = vector.broadcast %54 : vector<64x1xi1> to vector<64x64xi1>
    %56 = vector.broadcast %cst_32 : bf16 to vector<64x64xbf16>
    %57 = arith.select %55, %53, %56 : vector<64x64xi1>, vector<64x64xbf16>
    %c0_33 = arith.constant 0 : index
    %c2_34 = arith.constant 2 : index
    %c0_35 = arith.constant 0 : index
    %c0_36 = arith.constant 0 : index
    %58 = vector.load %arg4[%c0_33, %c2_34, %c0_35, %c0_36] : memref<3x3x64x80xbf16, #tpu.memory_space<vmem>>, vector<1x1x64x80xbf16>
    %59 = vector.shape_cast %58 : vector<1x1x64x80xbf16> to vector<64x80xbf16>
    %cst_37 = arith.constant dense<0.000000e+00> : vector<64x80xf32>
    %60 = tpu.matmul %57, %59, %cst_37 {dimension_numbers = #tpu.dot_dimension_numbers<[1], [0], [0], [1], [0, 0, 1, 1], [], []>} : vector<64x64xbf16>, vector<64x80xbf16>, vector<64x80xf32> -> vector<64x80xf32>
    %61 = arith.addf %52, %60 : vector<64x80xf32>
    %c8 = arith.constant 8 : index
    %c0_38 = arith.constant 0 : index
    %62 = vector.load %arg11[%c8, %c0_38] : memref<82x64xbf16, #tpu.memory_space<vmem>>, vector<64x64xbf16>
    %cst_39 = arith.constant 0.000000e+00 : bf16
    %63 = vector.shape_cast %30 : vector<64x1xi1> to vector<64x1xi1>
    %64 = vector.broadcast %63 : vector<64x1xi1> to vector<64x64xi1>
    %65 = vector.broadcast %cst_39 : bf16 to vector<64x64xbf16>
    %66 = arith.select %64, %62, %65 : vector<64x64xi1>, vector<64x64xbf16>
    %c1_40 = arith.constant 1 : index
    %c0_41 = arith.constant 0 : index
    %c0_42 = arith.constant 0 : index
    %c0_43 = arith.constant 0 : index
    %67 = vector.load %arg4[%c1_40, %c0_41, %c0_42, %c0_43] : memref<3x3x64x80xbf16, #tpu.memory_space<vmem>>, vector<1x1x64x80xbf16>
    %68 = vector.shape_cast %67 : vector<1x1x64x80xbf16> to vector<64x80xbf16>
    %cst_44 = arith.constant dense<0.000000e+00> : vector<64x80xf32>
    %69 = tpu.matmul %66, %68, %cst_44 {dimension_numbers = #tpu.dot_dimension_numbers<[1], [0], [0], [1], [0, 0, 1, 1], [], []>} : vector<64x64xbf16>, vector<64x80xbf16>, vector<64x80xf32> -> vector<64x80xf32>
    %70 = arith.addf %61, %69 : vector<64x80xf32>
    %c9_45 = arith.constant 9 : index
    %c0_46 = arith.constant 0 : index
    %71 = vector.load %arg11[%c9_45, %c0_46] : memref<82x64xbf16, #tpu.memory_space<vmem>>, vector<64x64xbf16>
    %c1_47 = arith.constant 1 : index
    %c1_48 = arith.constant 1 : index
    %c0_49 = arith.constant 0 : index
    %c0_50 = arith.constant 0 : index
    %72 = vector.load %arg4[%c1_47, %c1_48, %c0_49, %c0_50] : memref<3x3x64x80xbf16, #tpu.memory_space<vmem>>, vector<1x1x64x80xbf16>
    %73 = vector.shape_cast %72 : vector<1x1x64x80xbf16> to vector<64x80xbf16>
    %cst_51 = arith.constant dense<0.000000e+00> : vector<64x80xf32>
    %74 = tpu.matmul %71, %73, %cst_51 {dimension_numbers = #tpu.dot_dimension_numbers<[1], [0], [0], [1], [0, 0, 1, 1], [], []>} : vector<64x64xbf16>, vector<64x80xbf16>, vector<64x80xf32> -> vector<64x80xf32>
    %75 = arith.addf %70, %74 : vector<64x80xf32>
    %c10 = arith.constant 10 : index
    %c0_52 = arith.constant 0 : index
    %76 = vector.load %arg11[%c10, %c0_52] : memref<82x64xbf16, #tpu.memory_space<vmem>>, vector<64x64xbf16>
    %cst_53 = arith.constant 0.000000e+00 : bf16
    %77 = vector.shape_cast %32 : vector<64x1xi1> to vector<64x1xi1>
    %78 = vector.broadcast %77 : vector<64x1xi1> to vector<64x64xi1>
    %79 = vector.broadcast %cst_53 : bf16 to vector<64x64xbf16>
    %80 = arith.select %78, %76, %79 : vector<64x64xi1>, vector<64x64xbf16>
    %c1_54 = arith.constant 1 : index
    %c2_55 = arith.constant 2 : index
    %c0_56 = arith.constant 0 : index
    %c0_57 = arith.constant 0 : index
    %81 = vector.load %arg4[%c1_54, %c2_55, %c0_56, %c0_57] : memref<3x3x64x80xbf16, #tpu.memory_space<vmem>>, vector<1x1x64x80xbf16>
    %82 = vector.shape_cast %81 : vector<1x1x64x80xbf16> to vector<64x80xbf16>
    %cst_58 = arith.constant dense<0.000000e+00> : vector<64x80xf32>
    %83 = tpu.matmul %80, %82, %cst_58 {dimension_numbers = #tpu.dot_dimension_numbers<[1], [0], [0], [1], [0, 0, 1, 1], [], []>} : vector<64x64xbf16>, vector<64x80xbf16>, vector<64x80xf32> -> vector<64x80xf32>
    %84 = arith.addf %75, %83 : vector<64x80xf32>
    %c16 = arith.constant 16 : index
    %c0_59 = arith.constant 0 : index
    %85 = vector.load %arg11[%c16, %c0_59] : memref<82x64xbf16, #tpu.memory_space<vmem>>, vector<64x64xbf16>
    %cst_60 = arith.constant 0.000000e+00 : bf16
    %86 = vector.shape_cast %30 : vector<64x1xi1> to vector<64x1xi1>
    %87 = vector.broadcast %86 : vector<64x1xi1> to vector<64x64xi1>
    %88 = vector.broadcast %cst_60 : bf16 to vector<64x64xbf16>
    %89 = arith.select %87, %85, %88 : vector<64x64xi1>, vector<64x64xbf16>
    %c2_61 = arith.constant 2 : index
    %c0_62 = arith.constant 0 : index
    %c0_63 = arith.constant 0 : index
    %c0_64 = arith.constant 0 : index
    %90 = vector.load %arg4[%c2_61, %c0_62, %c0_63, %c0_64] : memref<3x3x64x80xbf16, #tpu.memory_space<vmem>>, vector<1x1x64x80xbf16>
    %91 = vector.shape_cast %90 : vector<1x1x64x80xbf16> to vector<64x80xbf16>
    %cst_65 = arith.constant dense<0.000000e+00> : vector<64x80xf32>
    %92 = tpu.matmul %89, %91, %cst_65 {dimension_numbers = #tpu.dot_dimension_numbers<[1], [0], [0], [1], [0, 0, 1, 1], [], []>} : vector<64x64xbf16>, vector<64x80xbf16>, vector<64x80xf32> -> vector<64x80xf32>
    %93 = arith.addf %84, %92 : vector<64x80xf32>
    %c17 = arith.constant 17 : index
    %c0_66 = arith.constant 0 : index
    %94 = vector.load %arg11[%c17, %c0_66] : memref<82x64xbf16, #tpu.memory_space<vmem>>, vector<64x64xbf16>
    %c2_67 = arith.constant 2 : index
    %c1_68 = arith.constant 1 : index
    %c0_69 = arith.constant 0 : index
    %c0_70 = arith.constant 0 : index
    %95 = vector.load %arg4[%c2_67, %c1_68, %c0_69, %c0_70] : memref<3x3x64x80xbf16, #tpu.memory_space<vmem>>, vector<1x1x64x80xbf16>
    %96 = vector.shape_cast %95 : vector<1x1x64x80xbf16> to vector<64x80xbf16>
    %cst_71 = arith.constant dense<0.000000e+00> : vector<64x80xf32>
    %97 = tpu.matmul %94, %96, %cst_71 {dimension_numbers = #tpu.dot_dimension_numbers<[1], [0], [0], [1], [0, 0, 1, 1], [], []>} : vector<64x64xbf16>, vector<64x80xbf16>, vector<64x80xf32> -> vector<64x80xf32>
    %98 = arith.addf %93, %97 : vector<64x80xf32>
    %c18 = arith.constant 18 : index
    %c0_72 = arith.constant 0 : index
    %99 = vector.load %arg11[%c18, %c0_72] : memref<82x64xbf16, #tpu.memory_space<vmem>>, vector<64x64xbf16>
    %cst_73 = arith.constant 0.000000e+00 : bf16
    %100 = vector.shape_cast %32 : vector<64x1xi1> to vector<64x1xi1>
    %101 = vector.broadcast %100 : vector<64x1xi1> to vector<64x64xi1>
    %102 = vector.broadcast %cst_73 : bf16 to vector<64x64xbf16>
    %103 = arith.select %101, %99, %102 : vector<64x64xi1>, vector<64x64xbf16>
    %c2_74 = arith.constant 2 : index
    %c2_75 = arith.constant 2 : index
    %c0_76 = arith.constant 0 : index
    %c0_77 = arith.constant 0 : index
    %104 = vector.load %arg4[%c2_74, %c2_75, %c0_76, %c0_77] : memref<3x3x64x80xbf16, #tpu.memory_space<vmem>>, vector<1x1x64x80xbf16>
    %105 = vector.shape_cast %104 : vector<1x1x64x80xbf16> to vector<64x80xbf16>
    %cst_78 = arith.constant dense<0.000000e+00> : vector<64x80xf32>
    %106 = tpu.matmul %103, %105, %cst_78 {dimension_numbers = #tpu.dot_dimension_numbers<[1], [0], [0], [1], [0, 0, 1, 1], [], []>} : vector<64x64xbf16>, vector<64x80xbf16>, vector<64x80xf32> -> vector<64x80xf32>
    %107 = arith.addf %98, %106 : vector<64x80xf32>
    %c0_79 = arith.constant 0 : index
    %c0_80 = arith.constant 0 : index
    %108 = vector.load %arg5[%c0_79, %c0_80] : memref<1x80xf32, #tpu.memory_space<vmem>>, vector<1x80xf32>
    %109 = vector.broadcast %108 : vector<1x80xf32> to vector<64x80xf32>
    %110 = arith.addf %107, %109 : vector<64x80xf32>
    %cst_81 = arith.constant 0.000000e+00 : f32
    %111 = vector.broadcast %cst_81 : f32 to vector<64x80xf32>
    %112 = arith.maximumf %110, %111 : vector<64x80xf32>
    %113 = vector.extract_strided_slice %112 {offsets = [0, 0], sizes = [64, 32], strides = [1, 1]} : vector<64x80xf32> to vector<64x32xf32>
    %114 = vector.extract_strided_slice %112 {offsets = [0, 32], sizes = [64, 48], strides = [1, 1]} : vector<64x80xf32> to vector<64x48xf32>
    %cst_82 = arith.constant 0.000000e+00 : bf16
    %115 = vector.broadcast %cst_82 : bf16 to vector<9x48xbf16>
    %c0_83 = arith.constant 0 : index
    %c0_84 = arith.constant 0 : index
    %116 = vector.load %arg12[%c0_83, %c0_84] : memref<82x48xbf16, #tpu.memory_space<vmem>>, vector<9x48xbf16>
    tpu.vector_store %arg12[%c0_83, %c0_84], %115 {strides = array<i32>} : memref<82x48xbf16, #tpu.memory_space<vmem>>, vector<9x48xbf16>,
    %c73_85 = arith.constant 73 : index
    %c0_86 = arith.constant 0 : index
    %117 = vector.load %arg12[%c73_85, %c0_86] : memref<82x48xbf16, #tpu.memory_space<vmem>>, vector<9x48xbf16>
    tpu.vector_store %arg12[%c73_85, %c0_86], %115 {strides = array<i32>} : memref<82x48xbf16, #tpu.memory_space<vmem>>, vector<9x48xbf16>,
    %118 = arith.truncf %114 : vector<64x48xf32> to vector<64x48xbf16>
    %c9_87 = arith.constant 9 : index
    %c0_88 = arith.constant 0 : index
    %119 = vector.load %arg12[%c9_87, %c0_88] : memref<82x48xbf16, #tpu.memory_space<vmem>>, vector<64x48xbf16>
    tpu.vector_store %arg12[%c9_87, %c0_88], %118 {strides = array<i32>} : memref<82x48xbf16, #tpu.memory_space<vmem>>, vector<64x48xbf16>,
    %cst_89 = arith.constant 0.000000e+00 : f32
    %120 = vector.broadcast %cst_89 : f32 to vector<64x64xf32>
    %c0_90 = arith.constant 0 : index
    %c0_91 = arith.constant 0 : index
    %121 = vector.load %arg12[%c0_90, %c0_91] : memref<82x48xbf16, #tpu.memory_space<vmem>>, vector<64x48xbf16>
    %cst_92 = arith.constant 0.000000e+00 : bf16
    %122 = vector.shape_cast %30 : vector<64x1xi1> to vector<64x1xi1>
    %123 = vector.broadcast %122 : vector<64x1xi1> to vector<64x48xi1>
    %124 = vector.broadcast %cst_92 : bf16 to vector<64x48xbf16>
    %125 = arith.select %123, %121, %124 : vector<64x48xi1>, vector<64x48xbf16>
    %c0_93 = arith.constant 0 : index
    %c0_94 = arith.constant 0 : index
    %c0_95 = arith.constant 0 : index
    %c0_96 = arith.constant 0 : index
    %126 = vector.load %arg6[%c0_93, %c0_94, %c0_95, %c0_96] : memref<3x3x48x64xbf16, #tpu.memory_space<vmem>>, vector<1x1x48x64xbf16>
    %127 = vector.shape_cast %126 : vector<1x1x48x64xbf16> to vector<48x64xbf16>
    %cst_97 = arith.constant dense<0.000000e+00> : vector<64x64xf32>
    %128 = tpu.matmul %125, %127, %cst_97 {dimension_numbers = #tpu.dot_dimension_numbers<[1], [0], [0], [1], [0, 0, 1, 1], [], []>} : vector<64x48xbf16>, vector<48x64xbf16>, vector<64x64xf32> -> vector<64x64xf32>
    %129 = arith.addf %120, %128 : vector<64x64xf32>
    %c1_98 = arith.constant 1 : index
    %c0_99 = arith.constant 0 : index
    %130 = vector.load %arg12[%c1_98, %c0_99] : memref<82x48xbf16, #tpu.memory_space<vmem>>, vector<64x48xbf16>
    %c0_100 = arith.constant 0 : index
    %c1_101 = arith.constant 1 : index
    %c0_102 = arith.constant 0 : index
    %c0_103 = arith.constant 0 : index
    %131 = vector.load %arg6[%c0_100, %c1_101, %c0_102, %c0_103] : memref<3x3x48x64xbf16, #tpu.memory_space<vmem>>, vector<1x1x48x64xbf16>
    %132 = vector.shape_cast %131 : vector<1x1x48x64xbf16> to vector<48x64xbf16>
    %cst_104 = arith.constant dense<0.000000e+00> : vector<64x64xf32>
    %133 = tpu.matmul %130, %132, %cst_104 {dimension_numbers = #tpu.dot_dimension_numbers<[1], [0], [0], [1], [0, 0, 1, 1], [], []>} : vector<64x48xbf16>, vector<48x64xbf16>, vector<64x64xf32> -> vector<64x64xf32>
    %134 = arith.addf %129, %133 : vector<64x64xf32>
    %c2_105 = arith.constant 2 : index
    %c0_106 = arith.constant 0 : index
    %135 = vector.load %arg12[%c2_105, %c0_106] : memref<82x48xbf16, #tpu.memory_space<vmem>>, vector<64x48xbf16>
    %cst_107 = arith.constant 0.000000e+00 : bf16
    %136 = vector.shape_cast %32 : vector<64x1xi1> to vector<64x1xi1>
    %137 = vector.broadcast %136 : vector<64x1xi1> to vector<64x48xi1>
    %138 = vector.broadcast %cst_107 : bf16 to vector<64x48xbf16>
    %139 = arith.select %137, %135, %138 : vector<64x48xi1>, vector<64x48xbf16>
    %c0_108 = arith.constant 0 : index
    %c2_109 = arith.constant 2 : index
    %c0_110 = arith.constant 0 : index
    %c0_111 = arith.constant 0 : index
    %140 = vector.load %arg6[%c0_108, %c2_109, %c0_110, %c0_111] : memref<3x3x48x64xbf16, #tpu.memory_space<vmem>>, vector<1x1x48x64xbf16>
    %141 = vector.shape_cast %140 : vector<1x1x48x64xbf16> to vector<48x64xbf16>
    %cst_112 = arith.constant dense<0.000000e+00> : vector<64x64xf32>
    %142 = tpu.matmul %139, %141, %cst_112 {dimension_numbers = #tpu.dot_dimension_numbers<[1], [0], [0], [1], [0, 0, 1, 1], [], []>} : vector<64x48xbf16>, vector<48x64xbf16>, vector<64x64xf32> -> vector<64x64xf32>
    %143 = arith.addf %134, %142 : vector<64x64xf32>
    %c8_113 = arith.constant 8 : index
    %c0_114 = arith.constant 0 : index
    %144 = vector.load %arg12[%c8_113, %c0_114] : memref<82x48xbf16, #tpu.memory_space<vmem>>, vector<64x48xbf16>
    %cst_115 = arith.constant 0.000000e+00 : bf16
    %145 = vector.shape_cast %30 : vector<64x1xi1> to vector<64x1xi1>
    %146 = vector.broadcast %145 : vector<64x1xi1> to vector<64x48xi1>
    %147 = vector.broadcast %cst_115 : bf16 to vector<64x48xbf16>
    %148 = arith.select %146, %144, %147 : vector<64x48xi1>, vector<64x48xbf16>
    %c1_116 = arith.constant 1 : index
    %c0_117 = arith.constant 0 : index
    %c0_118 = arith.constant 0 : index
    %c0_119 = arith.constant 0 : index
    %149 = vector.load %arg6[%c1_116, %c0_117, %c0_118, %c0_119] : memref<3x3x48x64xbf16, #tpu.memory_space<vmem>>, vector<1x1x48x64xbf16>
    %150 = vector.shape_cast %149 : vector<1x1x48x64xbf16> to vector<48x64xbf16>
    %cst_120 = arith.constant dense<0.000000e+00> : vector<64x64xf32>
    %151 = tpu.matmul %148, %150, %cst_120 {dimension_numbers = #tpu.dot_dimension_numbers<[1], [0], [0], [1], [0, 0, 1, 1], [], []>} : vector<64x48xbf16>, vector<48x64xbf16>, vector<64x64xf32> -> vector<64x64xf32>
    %152 = arith.addf %143, %151 : vector<64x64xf32>
    %c9_121 = arith.constant 9 : index
    %c0_122 = arith.constant 0 : index
    %153 = vector.load %arg12[%c9_121, %c0_122] : memref<82x48xbf16, #tpu.memory_space<vmem>>, vector<64x48xbf16>
    %c1_123 = arith.constant 1 : index
    %c1_124 = arith.constant 1 : index
    %c0_125 = arith.constant 0 : index
    %c0_126 = arith.constant 0 : index
    %154 = vector.load %arg6[%c1_123, %c1_124, %c0_125, %c0_126] : memref<3x3x48x64xbf16, #tpu.memory_space<vmem>>, vector<1x1x48x64xbf16>
    %155 = vector.shape_cast %154 : vector<1x1x48x64xbf16> to vector<48x64xbf16>
    %cst_127 = arith.constant dense<0.000000e+00> : vector<64x64xf32>
    %156 = tpu.matmul %153, %155, %cst_127 {dimension_numbers = #tpu.dot_dimension_numbers<[1], [0], [0], [1], [0, 0, 1, 1], [], []>} : vector<64x48xbf16>, vector<48x64xbf16>, vector<64x64xf32> -> vector<64x64xf32>
    %157 = arith.addf %152, %156 : vector<64x64xf32>
    %c10_128 = arith.constant 10 : index
    %c0_129 = arith.constant 0 : index
    %158 = vector.load %arg12[%c10_128, %c0_129] : memref<82x48xbf16, #tpu.memory_space<vmem>>, vector<64x48xbf16>
    %cst_130 = arith.constant 0.000000e+00 : bf16
    %159 = vector.shape_cast %32 : vector<64x1xi1> to vector<64x1xi1>
    %160 = vector.broadcast %159 : vector<64x1xi1> to vector<64x48xi1>
    %161 = vector.broadcast %cst_130 : bf16 to vector<64x48xbf16>
    %162 = arith.select %160, %158, %161 : vector<64x48xi1>, vector<64x48xbf16>
    %c1_131 = arith.constant 1 : index
    %c2_132 = arith.constant 2 : index
    %c0_133 = arith.constant 0 : index
    %c0_134 = arith.constant 0 : index
    %163 = vector.load %arg6[%c1_131, %c2_132, %c0_133, %c0_134] : memref<3x3x48x64xbf16, #tpu.memory_space<vmem>>, vector<1x1x48x64xbf16>
    %164 = vector.shape_cast %163 : vector<1x1x48x64xbf16> to vector<48x64xbf16>
    %cst_135 = arith.constant dense<0.000000e+00> : vector<64x64xf32>
    %165 = tpu.matmul %162, %164, %cst_135 {dimension_numbers = #tpu.dot_dimension_numbers<[1], [0], [0], [1], [0, 0, 1, 1], [], []>} : vector<64x48xbf16>, vector<48x64xbf16>, vector<64x64xf32> -> vector<64x64xf32>
    %166 = arith.addf %157, %165 : vector<64x64xf32>
    %c16_136 = arith.constant 16 : index
    %c0_137 = arith.constant 0 : index
    %167 = vector.load %arg12[%c16_136, %c0_137] : memref<82x48xbf16, #tpu.memory_space<vmem>>, vector<64x48xbf16>
    %cst_138 = arith.constant 0.000000e+00 : bf16
    %168 = vector.shape_cast %30 : vector<64x1xi1> to vector<64x1xi1>
    %169 = vector.broadcast %168 : vector<64x1xi1> to vector<64x48xi1>
    %170 = vector.broadcast %cst_138 : bf16 to vector<64x48xbf16>
    %171 = arith.select %169, %167, %170 : vector<64x48xi1>, vector<64x48xbf16>
    %c2_139 = arith.constant 2 : index
    %c0_140 = arith.constant 0 : index
    %c0_141 = arith.constant 0 : index
    %c0_142 = arith.constant 0 : index
    %172 = vector.load %arg6[%c2_139, %c0_140, %c0_141, %c0_142] : memref<3x3x48x64xbf16, #tpu.memory_space<vmem>>, vector<1x1x48x64xbf16>
    %173 = vector.shape_cast %172 : vector<1x1x48x64xbf16> to vector<48x64xbf16>
    %cst_143 = arith.constant dense<0.000000e+00> : vector<64x64xf32>
    %174 = tpu.matmul %171, %173, %cst_143 {dimension_numbers = #tpu.dot_dimension_numbers<[1], [0], [0], [1], [0, 0, 1, 1], [], []>} : vector<64x48xbf16>, vector<48x64xbf16>, vector<64x64xf32> -> vector<64x64xf32>
    %175 = arith.addf %166, %174 : vector<64x64xf32>
    %c17_144 = arith.constant 17 : index
    %c0_145 = arith.constant 0 : index
    %176 = vector.load %arg12[%c17_144, %c0_145] : memref<82x48xbf16, #tpu.memory_space<vmem>>, vector<64x48xbf16>
    %c2_146 = arith.constant 2 : index
    %c1_147 = arith.constant 1 : index
    %c0_148 = arith.constant 0 : index
    %c0_149 = arith.constant 0 : index
    %177 = vector.load %arg6[%c2_146, %c1_147, %c0_148, %c0_149] : memref<3x3x48x64xbf16, #tpu.memory_space<vmem>>, vector<1x1x48x64xbf16>
    %178 = vector.shape_cast %177 : vector<1x1x48x64xbf16> to vector<48x64xbf16>
    %cst_150 = arith.constant dense<0.000000e+00> : vector<64x64xf32>
    %179 = tpu.matmul %176, %178, %cst_150 {dimension_numbers = #tpu.dot_dimension_numbers<[1], [0], [0], [1], [0, 0, 1, 1], [], []>} : vector<64x48xbf16>, vector<48x64xbf16>, vector<64x64xf32> -> vector<64x64xf32>
    %180 = arith.addf %175, %179 : vector<64x64xf32>
    %c18_151 = arith.constant 18 : index
    %c0_152 = arith.constant 0 : index
    %181 = vector.load %arg12[%c18_151, %c0_152] : memref<82x48xbf16, #tpu.memory_space<vmem>>, vector<64x48xbf16>
    %cst_153 = arith.constant 0.000000e+00 : bf16
    %182 = vector.shape_cast %32 : vector<64x1xi1> to vector<64x1xi1>
    %183 = vector.broadcast %182 : vector<64x1xi1> to vector<64x48xi1>
    %184 = vector.broadcast %cst_153 : bf16 to vector<64x48xbf16>
    %185 = arith.select %183, %181, %184 : vector<64x48xi1>, vector<64x48xbf16>
    %c2_154 = arith.constant 2 : index
    %c2_155 = arith.constant 2 : index
    %c0_156 = arith.constant 0 : index
    %c0_157 = arith.constant 0 : index
    %186 = vector.load %arg6[%c2_154, %c2_155, %c0_156, %c0_157] : memref<3x3x48x64xbf16, #tpu.memory_space<vmem>>, vector<1x1x48x64xbf16>
    %187 = vector.shape_cast %186 : vector<1x1x48x64xbf16> to vector<48x64xbf16>
    %cst_158 = arith.constant dense<0.000000e+00> : vector<64x64xf32>
    %188 = tpu.matmul %185, %187, %cst_158 {dimension_numbers = #tpu.dot_dimension_numbers<[1], [0], [0], [1], [0, 0, 1, 1], [], []>} : vector<64x48xbf16>, vector<48x64xbf16>, vector<64x64xf32> -> vector<64x64xf32>
    %189 = arith.addf %180, %188 : vector<64x64xf32>
    %c0_159 = arith.constant 0 : index
    %c0_160 = arith.constant 0 : index
    %190 = vector.load %arg7[%c0_159, %c0_160] : memref<1x64xf32, #tpu.memory_space<vmem>>, vector<1x64xf32>
    %191 = vector.broadcast %190 : vector<1x64xf32> to vector<64x64xf32>
    %192 = arith.addf %189, %191 : vector<64x64xf32>
    %cst_161 = arith.constant 0.000000e+00 : f32
    %193 = vector.broadcast %cst_161 : f32 to vector<64x64xf32>
    %194 = arith.maximumf %192, %193 : vector<64x64xf32>
    %195 = arith.truncf %10 : vector<64x32xf32> to vector<64x32xbf16>
    %196 = arith.truncf %113 : vector<64x32xf32> to vector<64x32xbf16>
    %197 = arith.truncf %194 : vector<64x64xf32> to vector<64x64xbf16>
    %198 = tpu.concatenate %195, %196, %197 in 1 : vector<64x32xbf16>, vector<64x32xbf16>, vector<64x64xbf16> -> vector<64x128xbf16>
    %c0_162 = arith.constant 0 : index
    %c0_163 = arith.constant 0 : index
    %199 = vector.load %arg8[%c0_162, %c0_163] : memref<128x320xbf16, #tpu.memory_space<vmem>>, vector<128x320xbf16>
    %cst_164 = arith.constant dense<0.000000e+00> : vector<64x320xf32>
    %200 = tpu.matmul %198, %199, %cst_164 {dimension_numbers = #tpu.dot_dimension_numbers<[1], [0], [0], [1], [0, 0, 1, 1], [], []>} : vector<64x128xbf16>, vector<128x320xbf16>, vector<64x320xf32> -> vector<64x320xf32>
    %c0_165 = arith.constant 0 : index
    %c0_166 = arith.constant 0 : index
    %201 = vector.load %arg9[%c0_165, %c0_166] : memref<1x320xf32, #tpu.memory_space<vmem>>, vector<1x320xf32>
    %202 = vector.broadcast %201 : vector<1x320xf32> to vector<64x320xf32>
    %203 = arith.addf %200, %202 : vector<64x320xf32>
    %204 = arith.addf %203, %1 : vector<64x320xf32>
    %cst_167 = arith.constant 0.000000e+00 : f32
    %205 = vector.broadcast %cst_167 : f32 to vector<64x320xf32>
    %206 = arith.maximumf %204, %205 : vector<64x320xf32>
    %c0_168 = arith.constant 0 : index
    %c0_169 = arith.constant 0 : index
    %c0_170 = arith.constant 0 : index
    %207 = vector.load %arg10[%c0_168, %c0_169, %c0_170] : memref<1x64x320xf32, #tpu.memory_space<vmem>>, vector<1x64x320xf32>
    %208 = vector.shape_cast %207 : vector<1x64x320xf32> to vector<64x320xf32>
    %209 = vector.shape_cast %206 : vector<64x320xf32> to vector<1x64x320xf32>
    tpu.vector_store %arg10[%c0_168, %c0_169, %c0_170], %209 {strides = array<i32>} : memref<1x64x320xf32, #tpu.memory_space<vmem>>, vector<1x64x320xf32>,
    return
  }
  func.func @transform_0(%arg0: i32) -> (i32, i32, i32) {
    %c0_i32 = arith.constant 0 : i32
    %c0_i32_0 = arith.constant 0 : i32
    %c0_i32_1 = arith.constant 0 : i32
    return %arg0, %c0_i32, %c0_i32_0 : i32, i32, i32
  }
  func.func @transform_1(%arg0: i32) -> (i32, i32) {
    %c0_i32 = arith.constant 0 : i32
    %c0_i32_0 = arith.constant 0 : i32
    %c0_i32_1 = arith.constant 0 : i32
    return %c0_i32, %c0_i32_0 : i32, i32
  }
  func.func @transform_2(%arg0: i32) -> (i32, i32) {
    %c0_i32 = arith.constant 0 : i32
    %c0_i32_0 = arith.constant 0 : i32
    %c0_i32_1 = arith.constant 0 : i32
    return %c0_i32, %c0_i32_0 : i32, i32
  }
  func.func @transform_3(%arg0: i32) -> (i32, i32, i32, i32) {
    %c0_i32 = arith.constant 0 : i32
    %c0_i32_0 = arith.constant 0 : i32
    %c0_i32_1 = arith.constant 0 : i32
    %c0_i32_2 = arith.constant 0 : i32
    %c0_i32_3 = arith.constant 0 : i32
    return %c0_i32, %c0_i32_0, %c0_i32_1, %c0_i32_2 : i32, i32, i32, i32
  }
  func.func @transform_4(%arg0: i32) -> (i32, i32) {
    %c0_i32 = arith.constant 0 : i32
    %c0_i32_0 = arith.constant 0 : i32
    %c0_i32_1 = arith.constant 0 : i32
    return %c0_i32, %c0_i32_0 : i32, i32
  }
  func.func @transform_5(%arg0: i32) -> (i32, i32, i32, i32) {
    %c0_i32 = arith.constant 0 : i32
    %c0_i32_0 = arith.constant 0 : i32
    %c0_i32_1 = arith.constant 0 : i32
    %c0_i32_2 = arith.constant 0 : i32
    %c0_i32_3 = arith.constant 0 : i32
    return %c0_i32, %c0_i32_0, %c0_i32_1, %c0_i32_2 : i32, i32, i32, i32
  }
  func.func @transform_6(%arg0: i32) -> (i32, i32) {
    %c0_i32 = arith.constant 0 : i32
    %c0_i32_0 = arith.constant 0 : i32
    %c0_i32_1 = arith.constant 0 : i32
    return %c0_i32, %c0_i32_0 : i32, i32
  }
  func.func @transform_7(%arg0: i32) -> (i32, i32) {
    %c0_i32 = arith.constant 0 : i32
    %c0_i32_0 = arith.constant 0 : i32
    %c0_i32_1 = arith.constant 0 : i32
    return %c0_i32, %c0_i32_0 : i32, i32
  }
  func.func @transform_8(%arg0: i32) -> (i32, i32) {
    %c0_i32 = arith.constant 0 : i32
    %c0_i32_0 = arith.constant 0 : i32
    %c0_i32_1 = arith.constant 0 : i32
    return %c0_i32, %c0_i32_0 : i32, i32
  }
  func.func @transform_9(%arg0: i32) -> (i32, i32, i32) {
    %c0_i32 = arith.constant 0 : i32
    %c0_i32_0 = arith.constant 0 : i32
    %c0_i32_1 = arith.constant 0 : i32
    return %arg0, %c0_i32, %c0_i32_0 : i32, i32, i32
  }
}

</mosaic_0001>

<llo_original>
// kernel: tpu_custom_call.1
$region0: #{tpu_custom_call.1}
  #allocation0 [shape = 'u32[]', space=smem, size = 0x4, offset = 0x4, fixed_abs, tag = 'smem constant byte address 0x4 - core index']
  #allocation1 [shape = 'u32[144,128]{1,0:T(1,128)}', space=vmem, size = 0x12000, scoped, tag = 'internal scratch']
  #allocation2 [shape = 'bf16[82,64]{1,0:T(8,128)(2,1)}', space=vmem, size = 0x5800, scoped, tag = 'scratch operand']
  #allocation3 [shape = 'bf16[82,48]{1,0:T(8,128)(2,1)}', space=vmem, size = 0x5800, scoped, tag = 'scratch operand']
  %s0 = inlined_call_operand.vmem [shape: f32[2,64,320], index: 0, kind: input, shape index: {}]
  %s1 = inlined_call_operand.vmem [shape: bf16[320,96], index: 1, kind: input, shape index: {}]
  %s2 = inlined_call_operand.vmem [shape: f32[1,96], index: 2, kind: input, shape index: {}]
  %s3 = inlined_call_operand.hbm [shape: bf16[3,3,64,80], index: 3, kind: input, shape index: {}]
  %s4 = inlined_call_operand.vmem [shape: f32[1,80], index: 4, kind: input, shape index: {}]
  %s5 = inlined_call_operand.vmem [shape: bf16[3,3,48,64], index: 5, kind: input, shape index: {}]
  %s6 = inlined_call_operand.vmem [shape: f32[1,64], index: 6, kind: input, shape index: {}]
  %s7 = inlined_call_operand.vmem [shape: bf16[128,320], index: 7, kind: input, shape index: {}]
  %s8 = inlined_call_operand.vmem [shape: f32[1,320], index: 8, kind: input, shape index: {}]
  %s9 = inlined_call_operand.hbm [shape: f32[2,64,320], index: 9, kind: output, shape index: {}]
  %s10 = sld [smem:[#allocation0]]
  $region73: #{tpu_custom_call.1} parent=0
    _
  %s12 = ssub.s32 1, %s10
  %s13 = scalar_select 0, %s12, %s10
  $region1: #{tpu_custom_call.1} parent=0
    #allocation4 [shape = 'u8[147456]{0}', space=vmem, size = 0x24000, scoped, tag = 'input window, operand 3, single buffered']
    #allocation5 [shape = 's32[2]{0}', space=sflag, size = 0x8, scoped, tag = 'scoped memory for tpu_custom_call.1']
    #allocation6 [shape = 's32[2]{0}', space=sflag, size = 0x8, scoped, tag = 'scoped memory for tpu_custom_call.1']
    #allocation7 [shape = 'u8[196608]{0}', space=vmem, size = 0x30000, scoped, tag = 'output window, operand 0']
    %14 = vsyncpa [#allocation5], 0
    %15 = vsyncpa [#allocation6], 0
    %s16 = scalar_lea.sflag [#allocation6], 1
    %17 = vsyncpa %s16, 0
    loop: start=0, step=1, limit=4
    $region2: #{tpu_custom_call.1} parent=1 // loop_pre_header
      _
    $region3: #{tpu_custom_call.1} parent=1 // loop_header
      %s19 = sphi 0, %s23
      %p20 = scmp.ge.s32.totalorder %s19, 4
      %s29 = sphi 0, %s31
      %s32 = sphi 0, %s29
      %s33 = sphi 0, %s32
      %s49 = sphi 0, %s33
      %s53 = sphi 0, %s53
      %s55 = sphi 0, %s53
      %s56 = sphi 0, %s55
      %s70 = sphi 0, %s56
      %s74 = sphi 0, %s74
      %s76 = sphi 0, %s74
      %s77 = sphi 0, %s76
      %s91 = sphi 0, %s77
      %s95 = sphi 0, %s95
      %s97 = sphi 0, %s95
      %s98 = sphi 0, %s97
      %s112 = sphi 0, %s98
      %s116 = sphi 0, %s116
      %s118 = sphi 0, %s116
      %s119 = sphi 0, %s118
      %s133 = sphi 0, %s119
      %s137 = sphi 0, %s137
      %s139 = sphi 0, %s137
      %s140 = sphi 0, %s139
      %s154 = sphi 0, %s140
      %s158 = sphi 0, %s158
      %s160 = sphi 0, %s158
      %s161 = sphi 0, %s160
      %s175 = sphi 0, %s161
      %s179 = sphi 0, %s179
      %s181 = sphi 0, %s179
      %s182 = sphi 0, %s181
      %s196 = sphi 0, %s182
      %s200 = sphi 0, %s200
      %s202 = sphi 0, %s200
      %s203 = sphi 0, %s202
      %s217 = sphi 0, %s203
      %s223 = sphi 0, %s225
      %s226 = sphi 0, %s223
      %s227 = sphi 0, %s226
      %s243 = sphi 0, %s227
    $region4: #{tpu_custom_call.1} parent=1 // loop_header_branch
      %22 = sbr.rel (%p20) target = $region8
    $region5: #{tpu_custom_call.1} parent=1 // loop_body
      %s24 = ssub.s32 %s19, 1
      %s25 = ssub.s32 %s19, 2
      %s26 = sadd.s32 %s19, 1
      %s27 = ssub.s32 %s19, %s26
      %p28 = scmp.eq.s32.totalorder %s27, 0
      %s30 = sadd.s32 %s29, 1
      %s31 = scalar_select %p28, %s29, %s30
      %p34 = pneg %p28
      %p35 = scmp.eq.s32.totalorder %s19, 1
      %p36 = por %p34, %p35
      %p37 = scmp.ne.s32.totalorder %s29, %s32
      %p38 = scmp.eq.s32.totalorder %s19, 0
      %p39 = por %p37, %p38
      %p40 = scmp.ne.s32.totalorder %s29, %s32
      %p41 = scmp.eq.s32.totalorder %s24, 1
      %p42 = por %p40, %p41
      %p43 = scmp.ne.s32.totalorder %s32, %s33
      %p44 = scmp.eq.s32.totalorder %s24, 0
      %p45 = por %p43, %p44
      %p46 = scmp.ne.s32.totalorder %s32, %s33
      %p47 = scmp.eq.s32.totalorder %s25, 1
      %p48 = por %p46, %p47
      %p50 = scmp.ne.s32.totalorder %s33, %s49
      %p51 = scmp.eq.s32.totalorder %s25, 0
      %p52 = por %p50, %p51
      %s54 = sadd.s32 %s53, 1
      %p57 = scmp.eq.s32.totalorder %s19, 1
      %p58 = scmp.ne.s32.totalorder %s53, %s55
      %p59 = scmp.eq.s32.totalorder %s19, 0
      %p60 = por %p58, %p59
      %p61 = scmp.ne.s32.totalorder %s53, %s55
      %p62 = scmp.eq.s32.totalorder %s24, 1
      %p63 = por %p61, %p62
      %p64 = scmp.ne.s32.totalorder %s55, %s56
      %p65 = scmp.eq.s32.totalorder %s24, 0
      %p66 = por %p64, %p65
      %p67 = scmp.ne.s32.totalorder %s55, %s56
      %p68 = scmp.eq.s32.totalorder %s25, 1
      %p69 = por %p67, %p68
      %p71 = scmp.ne.s32.totalorder %s56, %s70
      %p72 = scmp.eq.s32.totalorder %s25, 0
      %p73 = por %p71, %p72
      %s75 = sadd.s32 %s74, 1
      %p78 = scmp.eq.s32.totalorder %s19, 1
      %p79 = scmp.ne.s32.totalorder %s74, %s76
      %p80 = scmp.eq.s32.totalorder %s19, 0
      %p81 = por %p79, %p80
      %p82 = scmp.ne.s32.totalorder %s74, %s76
      %p83 = scmp.eq.s32.totalorder %s24, 1
      %p84 = por %p82, %p83
      %p85 = scmp.ne.s32.totalorder %s76, %s77
      %p86 = scmp.eq.s32.totalorder %s24, 0
      %p87 = por %p85, %p86
      %p88 = scmp.ne.s32.totalorder %s76, %s77
      %p89 = scmp.eq.s32.totalorder %s25, 1
      %p90 = por %p88, %p89
      %p92 = scmp.ne.s32.totalorder %s77, %s91
      %p93 = scmp.eq.s32.totalorder %s25, 0
      %p94 = por %p92, %p93
      %s96 = sadd.s32 %s95, 1
      %p99 = scmp.eq.s32.totalorder %s19, 1
      %p100 = scmp.ne.s32.totalorder %s95, %s97
      %p101 = scmp.eq.s32.totalorder %s19, 0
      %p102 = por %p100, %p101
      %p103 = scmp.ne.s32.totalorder %s95, %s97
      %p104 = scmp.eq.s32.totalorder %s24, 1
      %p105 = por %p103, %p104
      %p106 = scmp.ne.s32.totalorder %s97, %s98
      %p107 = scmp.eq.s32.totalorder %s24, 0
      %p108 = por %p106, %p107
      %p109 = scmp.ne.s32.totalorder %s97, %s98
      %p110 = scmp.eq.s32.totalorder %s25, 1
      %p111 = por %p109, %p110
      %p113 = scmp.ne.s32.totalorder %s98, %s112
      %p114 = scmp.eq.s32.totalorder %s25, 0
      %p115 = por %p113, %p114
      %s117 = sadd.s32 %s116, 1
      %p120 = scmp.eq.s32.totalorder %s19, 1
      %p121 = scmp.ne.s32.totalorder %s116, %s118
      %p122 = scmp.eq.s32.totalorder %s19, 0
      %p123 = por %p121, %p122
      %p124 = scmp.ne.s32.totalorder %s116, %s118
      %p125 = scmp.eq.s32.totalorder %s24, 1
      %p126 = por %p124, %p125
      %p127 = scmp.ne.s32.totalorder %s118, %s119
      %p128 = scmp.eq.s32.totalorder %s24, 0
      %p129 = por %p127, %p128
      %p130 = scmp.ne.s32.totalorder %s118, %s119
      %p131 = scmp.eq.s32.totalorder %s25, 1
      %p132 = por %p130, %p131
      %p134 = scmp.ne.s32.totalorder %s119, %s133
      %p135 = scmp.eq.s32.totalorder %s25, 0
      %p136 = por %p134, %p135
      %s138 = sadd.s32 %s137, 1
      %p141 = scmp.eq.s32.totalorder %s19, 1
      %p142 = scmp.ne.s32.totalorder %s137, %s139
      %p143 = scmp.eq.s32.totalorder %s19, 0
      %p144 = por %p142, %p143
      %p145 = scmp.ne.s32.totalorder %s137, %s139
      %p146 = scmp.eq.s32.totalorder %s24, 1
      %p147 = por %p145, %p146
      %p148 = scmp.ne.s32.totalorder %s139, %s140
      %p149 = scmp.eq.s32.totalorder %s24, 0
      %p150 = por %p148, %p149
      %p151 = scmp.ne.s32.totalorder %s139, %s140
      %p152 = scmp.eq.s32.totalorder %s25, 1
      %p153 = por %p151, %p152
      %p155 = scmp.ne.s32.totalorder %s140, %s154
      %p156 = scmp.eq.s32.totalorder %s25, 0
      %p157 = por %p155, %p156
      %s159 = sadd.s32 %s158, 1
      %p162 = scmp.eq.s32.totalorder %s19, 1
      %p163 = scmp.ne.s32.totalorder %s158, %s160
      %p164 = scmp.eq.s32.totalorder %s19, 0
      %p165 = por %p163, %p164
      %p166 = scmp.ne.s32.totalorder %s158, %s160
      %p167 = scmp.eq.s32.totalorder %s24, 1
      %p168 = por %p166, %p167
      %p169 = scmp.ne.s32.totalorder %s160, %s161
      %p170 = scmp.eq.s32.totalorder %s24, 0
      %p171 = por %p169, %p170
      %p172 = scmp.ne.s32.totalorder %s160, %s161
      %p173 = scmp.eq.s32.totalorder %s25, 1
      %p174 = por %p172, %p173
      %p176 = scmp.ne.s32.totalorder %s161, %s175
      %p177 = scmp.eq.s32.totalorder %s25, 0
      %p178 = por %p176, %p177
      %s180 = sadd.s32 %s179, 1
      %p183 = scmp.eq.s32.totalorder %s19, 1
      %p184 = scmp.ne.s32.totalorder %s179, %s181
      %p185 = scmp.eq.s32.totalorder %s19, 0
      %p186 = por %p184, %p185
      %p187 = scmp.ne.s32.totalorder %s179, %s181
      %p188 = scmp.eq.s32.totalorder %s24, 1
      %p189 = por %p187, %p188
      %p190 = scmp.ne.s32.totalorder %s181, %s182
      %p191 = scmp.eq.s32.totalorder %s24, 0
      %p192 = por %p190, %p191
      %p193 = scmp.ne.s32.totalorder %s181, %s182
      %p194 = scmp.eq.s32.totalorder %s25, 1
      %p195 = por %p193, %p194
      %p197 = scmp.ne.s32.totalorder %s182, %s196
      %p198 = scmp.eq.s32.totalorder %s25, 0
      %p199 = por %p197, %p198
      %s201 = sadd.s32 %s200, 1
      %p204 = scmp.eq.s32.totalorder %s19, 1
      %p205 = scmp.ne.s32.totalorder %s200, %s202
      %p206 = scmp.eq.s32.totalorder %s19, 0
      %p207 = por %p205, %p206
      %p208 = scmp.ne.s32.totalorder %s200, %s202
      %p209 = scmp.eq.s32.totalorder %s24, 1
      %p210 = por %p208, %p209
      %p211 = scmp.ne.s32.totalorder %s202, %s203
      %p212 = scmp.eq.s32.totalorder %s24, 0
      %p213 = por %p211, %p212
      %p214 = scmp.ne.s32.totalorder %s202, %s203
      %p215 = scmp.eq.s32.totalorder %s25, 1
      %p216 = por %p214, %p215
      %p218 = scmp.ne.s32.totalorder %s203, %s217
      %p219 = scmp.eq.s32.totalorder %s25, 0
      %p220 = por %p218, %p219
      %s221 = ssub.s32 %s19, %s26
      %p222 = scmp.eq.s32.totalorder %s221, 0
      %s224 = sadd.s32 %s223, 1
      %s225 = scalar_select %p222, %s223, %s224
      %p228 = pneg %p222
      %p229 = scmp.eq.s32.totalorder %s19, 1
      %p230 = por %p228, %p229
      %p231 = scmp.ne.s32.totalorder %s223, %s226
      %p232 = scmp.eq.s32.totalorder %s19, 0
      %p233 = por %p231, %p232
      %p234 = scmp.ne.s32.totalorder %s223, %s226
      %p235 = scmp.eq.s32.totalorder %s24, 1
      %p236 = por %p234, %p235
      %p237 = scmp.ne.s32.totalorder %s226, %s227
      %p238 = scmp.eq.s32.totalorder %s24, 0
      %p239 = por %p237, %p238
      %p240 = scmp.ne.s32.totalorder %s226, %s227
      %p241 = scmp.eq.s32.totalorder %s25, 1
      %p242 = por %p240, %p241
      %p244 = scmp.ne.s32.totalorder %s227, %s243
      %p245 = scmp.eq.s32.totalorder %s25, 0
      %p246 = por %p244, %p245
      %p247 = scmp.le.s32.totalorder 1, %s19
      %p248 = scmp.lt.s32.totalorder %s19, 3
      %p249 = pnand %p247, %p248
      %p250 = pneg %p249
      // Predicated region
      $region9: #{tpu_custom_call.1} parent=5 // pred_check
        _
      $region10: #{tpu_custom_call.1} parent=5 // pred_check_branch
        %252 = sbr.rel (%p249) target = $region12
      $region11: #{tpu_custom_call.1} parent=5 // pred_region
        %s253 = ssub.s32 %s19, 1
        // Predicated region
        $region13: #{tpu_custom_call.1} parent=11 // pred_check
          %p254 = pneg %p66
        $region14: #{tpu_custom_call.1} parent=11 // pred_check_branch
          %256 = sbr.rel (%p254) target = $region16
        $region15: #{tpu_custom_call.1} parent=11 // pred_region
          _
        $region16: #{tpu_custom_call.1} parent=11 // pred_fallthru
          _
        // Predicated region
        $region17: #{tpu_custom_call.1} parent=11 // pred_check
          %p257 = pneg %p87
        $region18: #{tpu_custom_call.1} parent=11 // pred_check_branch
          %259 = sbr.rel (%p257) target = $region20
        $region19: #{tpu_custom_call.1} parent=11 // pred_region
          _
        $region20: #{tpu_custom_call.1} parent=11 // pred_fallthru
          _
        // Predicated region
        $region21: #{tpu_custom_call.1} parent=11 // pred_check
          %p260 = pneg %p108
        $region22: #{tpu_custom_call.1} parent=11 // pred_check_branch
          %262 = sbr.rel (%p260) target = $region24
        $region23: #{tpu_custom_call.1} parent=11 // pred_region
          %s264 = ssub.s32 4608, 4608
          %265 = vsyncadd [#allocation5], %s264
          %s266 = sshll.u32 [#allocation4], 4
          %s267 = int_to_ptr.vmem [resolvable:$true] %s266
          %272 = dma.hbm_to_vmem [thread:$0]  %s3, 4608, %s267, [#allocation5], 64, 64, 4
        $region24: #{tpu_custom_call.1} parent=11 // pred_fallthru
          _
        // Predicated region
        $region25: #{tpu_custom_call.1} parent=11 // pred_check
          %p273 = pneg %p129
        $region26: #{tpu_custom_call.1} parent=11 // pred_check_branch
          %275 = sbr.rel (%p273) target = $region28
        $region27: #{tpu_custom_call.1} parent=11 // pred_region
          _
        $region28: #{tpu_custom_call.1} parent=11 // pred_fallthru
          _
        // Predicated region
        $region29: #{tpu_custom_call.1} parent=11 // pred_check
          %p276 = pneg %p150
        $region30: #{tpu_custom_call.1} parent=11 // pred_check_branch
          %278 = sbr.rel (%p276) target = $region32
        $region31: #{tpu_custom_call.1} parent=11 // pred_region
          _
        $region32: #{tpu_custom_call.1} parent=11 // pred_fallthru
          _
        // Predicated region
        $region33: #{tpu_custom_call.1} parent=11 // pred_check
          %p279 = pneg %p171
        $region34: #{tpu_custom_call.1} parent=11 // pred_check_branch
          %281 = sbr.rel (%p279) target = $region36
        $region35: #{tpu_custom_call.1} parent=11 // pred_region
          _
        $region36: #{tpu_custom_call.1} parent=11 // pred_fallthru
          _
        // Predicated region
        $region37: #{tpu_custom_call.1} parent=11 // pred_check
          %p282 = pneg %p192
        $region38: #{tpu_custom_call.1} parent=11 // pred_check_branch
          %284 = sbr.rel (%p282) target = $region40
        $region39: #{tpu_custom_call.1} parent=11 // pred_region
          _
        $region40: #{tpu_custom_call.1} parent=11 // pred_fallthru
          _
        // Predicated region
        $region41: #{tpu_custom_call.1} parent=11 // pred_check
          %p285 = pneg %p213
        $region42: #{tpu_custom_call.1} parent=11 // pred_check_branch
          %287 = sbr.rel (%p285) target = $region44
        $region43: #{tpu_custom_call.1} parent=11 // pred_region
          _
        $region44: #{tpu_custom_call.1} parent=11 // pred_fallthru
          _
      $region12: #{tpu_custom_call.1} parent=5 // pred_fallthru
        _
      %p288 = scmp.lt.s32.totalorder %s19, 2
      // Predicated region
      $region45: #{tpu_custom_call.1} parent=5 // pred_check
        %p289 = pneg %p288
      $region46: #{tpu_custom_call.1} parent=5 // pred_check_branch
        %291 = sbr.rel (%p289) target = $region48
      $region47: #{tpu_custom_call.1} parent=5 // pred_region
        // Predicated region
        $region49: #{tpu_custom_call.1} parent=47 // pred_check
          %p292 = pneg %p39
        $region50: #{tpu_custom_call.1} parent=47 // pred_check_branch
          %294 = sbr.rel (%p292) target = $region52
        $region51: #{tpu_custom_call.1} parent=47 // pred_region
          %p295 = scmp.lt.s32.totalorder %s19, 1
          %s296 = scalar_select %p295, %s19, 1
          %s297 = smul.addr %s296, 24
          %s298 = smul.addr %s297, 8
          %s299 = scalar_lea.vmem %s0, %s298
        $region52: #{tpu_custom_call.1} parent=47 // pred_fallthru
          _
      $region48: #{tpu_custom_call.1} parent=5 // pred_fallthru
        _
      %p300 = scmp.le.s32.totalorder 1, %s19
      %p301 = scmp.lt.s32.totalorder %s19, 3
      %p302 = pnand %p300, %p301
      %p303 = pneg %p302
      // Predicated region
      $region53: #{tpu_custom_call.1} parent=5 // pred_check
        _
      $region54: #{tpu_custom_call.1} parent=5 // pred_check_branch
        %305 = sbr.rel (%p302) target = $region56
      $region55: #{tpu_custom_call.1} parent=5 // pred_region
        %s306 = ssub.s32 %s19, 1
        // Predicated region
        $region57: #{tpu_custom_call.1} parent=55 // pred_check
          %p307 = pneg %p108
        $region58: #{tpu_custom_call.1} parent=55 // pred_check_branch
          %309 = sbr.rel (%p307) target = $region60
        $region59: #{tpu_custom_call.1} parent=55 // pred_region
          %310 = dma.done [#allocation5], 4608
        $region60: #{tpu_custom_call.1} parent=55 // pred_fallthru
          _
        %p311 = scmp.lt.s32.totalorder %s24, 1
        %s312 = scalar_select %p311, %s24, 1
        %s313 = smul.addr %s312, 24
        %s314 = smul.addr %s313, 8
        %s315 = scalar_lea.vmem %s0, %s314
        %p316 = pneg %p45
        %p317 = pneg %p42
        %p318 = pneg %p66
        %p319 = pneg %p63
        %p320 = pneg %p87
        %p321 = pneg %p84
        %p322 = pneg %p108
        %p323 = pneg %p105
        %p324 = pneg %p129
        %p325 = pneg %p126
        %p326 = pneg %p150
        %p327 = pneg %p147
        %p328 = pneg %p171
        %p329 = pneg %p168
        %p330 = pneg %p192
        %p331 = pneg %p189
        %p332 = pneg %p213
        %p333 = pneg %p210
        %p334 = pneg %p239
        %p335 = pneg %p236
        %s336 = sand.u32 %s226, 1
        %s337 = scalar_lea.sflag [#allocation6], %s336
        %s338 = sand.u32 %s226, 1
        %s339 = smul.addr %s338, 192
        %s340 = scalar_lea.vmem [#allocation7], %s339
        %p341 = scmp.lt.s32.totalorder %s24, 1
        %s342 = scalar_select %p341, %s24, 1
        %s343 = smul.addr %s342, 24
        %s344 = smul.addr %s343, 8
        %s345 = scalar_lea.vmem %s0, %s344
        %v349 = vld [vmem:[%s345] sm:$0xff]
        %v350 = vld [vmem:[%s345 + $0x8] sm:$0xff]
        %v351 = vld [vmem:[%s345 + $0x10] sm:$0xff]
        %v352 = vld [vmem:[%s345 + $0x18] sm:$0xff]
        %v353 = vld [vmem:[%s345 + $0x20] sm:$0xff]
        %v354 = vld [vmem:[%s345 + $0x28] sm:$0xff]
        %v355 = vld [vmem:[%s345 + $0x30] sm:$0xff]
        %v356 = vld [vmem:[%s345 + $0x38] sm:$0xff]
        %v357 = vld [vmem:[%s345 + $0x40] sm:$0xff]
        %v358 = vld [vmem:[%s345 + $0x48] sm:$0xff]
        %v359 = vld [vmem:[%s345 + $0x50] sm:$0xff]
        %v360 = vld [vmem:[%s345 + $0x58] sm:$0xff]
        %v361 = vld [vmem:[%s345 + $0x60] sm:$0xff]
        %v362 = vld [vmem:[%s345 + $0x68] sm:$0xff]
        %v363 = vld [vmem:[%s345 + $0x70] sm:$0xff]
        %v364 = vld [vmem:[%s345 + $0x78] sm:$0xff]
        %v365 = vld [vmem:[%s345 + $0x80] sm:$0xff]
        %v366 = vld [vmem:[%s345 + $0x88] sm:$0xff]
        %v367 = vld [vmem:[%s345 + $0x90] sm:$0xff]
        %v368 = vld [vmem:[%s345 + $0x98] sm:$0xff]
        %v369 = vld [vmem:[%s345 + $0xa0] sm:$0xff]
        %v370 = vld [vmem:[%s345 + $0xa8] sm:$0xff]
        %v371 = vld [vmem:[%s345 + $0xb0] sm:$0xff]
        %v372 = vld [vmem:[%s345 + $0xb8] sm:$0xff]
        %v373 = vpack.c.bf16 %v352, %v349
        %v374 = vpack.c.bf16 %v353, %v350
        %v375 = vpack.c.bf16 %v354, %v351
        %v376 = vpack.c.bf16 %v358, %v355
        %v377 = vpack.c.bf16 %v359, %v356
        %v378 = vpack.c.bf16 %v360, %v357
        %v379 = vpack.c.bf16 %v364, %v361
        %v380 = vpack.c.bf16 %v365, %v362
        %v381 = vpack.c.bf16 %v366, %v363
        %v382 = vpack.c.bf16 %v370, %v367
        %v383 = vpack.c.bf16 %v371, %v368
        %v384 = vpack.c.bf16 %v372, %v369
        %v385 = vld [vmem:[%s1] sm:$0xf]
        %v386 = vld [vmem:[%s1 + $0x4] sm:$0xf]
        %v387 = vld [vmem:[%s1 + $0x8] sm:$0xf]
        %v388 = vld [vmem:[%s1 + $0xc] sm:$0xf]
        %v389 = vld [vmem:[%s1 + $0x10] sm:$0xf]
        %v390 = vld [vmem:[%s1 + $0x14] sm:$0xf]
        %v391 = vld [vmem:[%s1 + $0x18] sm:$0xf]
        %v392 = vld [vmem:[%s1 + $0x1c] sm:$0xf]
        %v393 = vld [vmem:[%s1 + $0x20] sm:$0xf]
        %v394 = vld [vmem:[%s1 + $0x24] sm:$0xf]
        %v395 = vld [vmem:[%s1 + $0x28] sm:$0xf]
        %v396 = vld [vmem:[%s1 + $0x2c] sm:$0xf]
        %v397 = vld [vmem:[%s1 + $0x30] sm:$0xf]
        %v398 = vld [vmem:[%s1 + $0x34] sm:$0xf]
        %v399 = vld [vmem:[%s1 + $0x38] sm:$0xf]
        %v400 = vld [vmem:[%s1 + $0x3c] sm:$0xf]
        %v401 = vld [vmem:[%s1 + $0x40] sm:$0xf]
        %v402 = vld [vmem:[%s1 + $0x44] sm:$0xf]
        %v403 = vld [vmem:[%s1 + $0x48] sm:$0xf]
        %v404 = vld [vmem:[%s1 + $0x4c] sm:$0xf]
        %v405 = vld [vmem:[%s1 + $0x50] sm:$0xf]
        %v406 = vld [vmem:[%s1 + $0x54] sm:$0xf]
        %v407 = vld [vmem:[%s1 + $0x58] sm:$0xf]
        %v408 = vld [vmem:[%s1 + $0x5c] sm:$0xf]
        %v409 = vld [vmem:[%s1 + $0x60] sm:$0xf]
        %v410 = vld [vmem:[%s1 + $0x64] sm:$0xf]
        %v411 = vld [vmem:[%s1 + $0x68] sm:$0xf]
        %v412 = vld [vmem:[%s1 + $0x6c] sm:$0xf]
        %v413 = vld [vmem:[%s1 + $0x70] sm:$0xf]
        %v414 = vld [vmem:[%s1 + $0x74] sm:$0xf]
        %v415 = vld [vmem:[%s1 + $0x78] sm:$0xf]
        %v416 = vld [vmem:[%s1 + $0x7c] sm:$0xf]
        %v417 = vld [vmem:[%s1 + $0x80] sm:$0xf]
        %v418 = vld [vmem:[%s1 + $0x84] sm:$0xf]
        %v419 = vld [vmem:[%s1 + $0x88] sm:$0xf]
        %v420 = vld [vmem:[%s1 + $0x8c] sm:$0xf]
        %v421 = vld [vmem:[%s1 + $0x90] sm:$0xf]
        %v422 = vld [vmem:[%s1 + $0x94] sm:$0xf]
        %v423 = vld [vmem:[%s1 + $0x98] sm:$0xf]
        %v424 = vld [vmem:[%s1 + $0x9c] sm:$0xf]
        %v425 = vld [vmem:[%s2] sm:$0x1]
        %v427 = vlaneseq
        %v428 = vshrl.u32 %v427, 7
        %v429 = vsub.s32 0, %v428
        %v430 = vrot.slane %v425, %v429
        %v472 = vunpack.c.l.b16 %v385
        %v473 = vunpack.c.l.b16 %v386
        %v474 = vunpack.c.l.b16 %v387
        %v475 = vunpack.c.l.b16 %v388
        %v476 = vunpack.c.l.b16 %v389
        %v477 = vunpack.c.l.b16 %v390
        %v478 = vunpack.c.l.b16 %v391
        %v479 = vunpack.c.l.b16 %v392
        %v480 = vunpack.c.l.b16 %v393
        %v481 = vunpack.c.l.b16 %v394
        %v482 = vunpack.c.l.b16 %v395
        %v483 = vunpack.c.l.b16 %v396
        %v484 = vunpack.c.l.b16 %v397
        %v485 = vunpack.c.l.b16 %v398
        %v486 = vunpack.c.l.b16 %v399
        %v487 = vunpack.c.l.b16 %v400
        %v488 = vunpack.c.l.b16 %v401
        %v489 = vunpack.c.l.b16 %v402
        %v490 = vunpack.c.l.b16 %v403
        %v491 = vunpack.c.l.b16 %v404
        %v492 = vunpack.c.l.b16 %v405
        %v493 = vunpack.c.l.b16 %v406
        %v494 = vunpack.c.l.b16 %v407
        %v495 = vunpack.c.l.b16 %v408
        %v496 = vunpack.c.l.b16 %v409
        %v497 = vunpack.c.l.b16 %v410
        %v498 = vunpack.c.l.b16 %v411
        %v499 = vunpack.c.l.b16 %v412
        %v500 = vunpack.c.l.b16 %v413
        %v501 = vunpack.c.l.b16 %v414
        %v502 = vunpack.c.l.b16 %v415
        %v503 = vunpack.c.l.b16 %v416
        %v504 = vunpack.c.l.b16 %v417
        %v505 = vunpack.c.l.b16 %v418
        %v506 = vunpack.c.l.b16 %v419
        %v507 = vunpack.c.l.b16 %v420
        %v508 = vunpack.c.l.b16 %v421
        %v509 = vunpack.c.l.b16 %v422
        %v510 = vunpack.c.l.b16 %v423
        %v511 = vunpack.c.l.b16 %v424
        %v512 = vpack.c.b16 %v473, %v472
        %v513 = vpack.c.b16 %v475, %v474
        %v514 = vpack.c.b16 %v477, %v476
        %v515 = vpack.c.b16 %v479, %v478
        %v516 = vpack.c.b16 %v481, %v480
        %v517 = vpack.c.b16 %v483, %v482
        %v518 = vpack.c.b16 %v485, %v484
        %v519 = vpack.c.b16 %v487, %v486
        %v520 = vpack.c.b16 %v489, %v488
        %v521 = vpack.c.b16 %v491, %v490
        %v522 = vpack.c.b16 %v493, %v492
        %v523 = vpack.c.b16 %v495, %v494
        %v524 = vpack.c.b16 %v497, %v496
        %v525 = vpack.c.b16 %v499, %v498
        %v526 = vpack.c.b16 %v501, %v500
        %v527 = vpack.c.b16 %v503, %v502
        %v528 = vpack.c.b16 %v505, %v504
        %v529 = vpack.c.b16 %v507, %v506
        %v530 = vpack.c.b16 %v509, %v508
        %v531 = vpack.c.b16 %v511, %v510
        %vm552 = vcmask 523264
        %v554 = vsel %vm552, %v375, 0
        %v557 = vsel %vm552, %v378, 0
        %v560 = vsel %vm552, %v381, 0
        %v563 = vsel %vm552, %v384, 0
        %565 = vmatprep.subr.bf16.mxu0 0
        %566 = vmatpush1.bf16.msra.mxu0 %v512
        %567 = vmatprep.subr.bf16.mxu0 0
        %568 = vmatpush1.bf16.msra.mxu0 %v513
        %569 = vmatprep.subr.bf16.mxu0 0
        %570 = vmatpush1.bf16.msra.mxu0 %v514
        %571 = vmatprep.subr.bf16.mxu0 0
        %572 = vmatpush1.bf16.msra.mxu0 %v515
        %573 = vmatprep.subr.bf16.mxu0 0
        %574 = vmatpush1.bf16.msra.mxu0 %v516
        %575 = vmatprep.subr.bf16.mxu0 0
        %576 = vmatpush1.bf16.msra.mxu0 %v517
        %577 = vmatprep.subr.bf16.mxu0 0
        %578 = vmatpush1.bf16.msra.mxu0 %v518
        %579 = vmatprep.subr.bf16.mxu0 0
        %580 = vmatpush1.bf16.msra.mxu0 %v519
        %581 = vmatprep.subr.bf16.mxu0 0
        %582 = vmatpush1.bf16.msra.mxu0 %v520
        %583 = vmatprep.subr.bf16.mxu0 0
        %584 = vmatpush1.bf16.msra.mxu0 %v521
        %585 = vmatprep.subr.bf16.mxu0 0
        %586 = vmatpush1.bf16.msra.mxu0 %v522
        %587 = vmatprep.subr.bf16.mxu0 0
        %588 = vmatpush1.bf16.msra.mxu0 %v523
        %589 = vmatprep.subr.bf16.mxu0 0
        %590 = vmatpush1.bf16.msra.mxu0 %v524
        %591 = vmatprep.subr.bf16.mxu0 0
        %592 = vmatpush1.bf16.msra.mxu0 %v525
        %593 = vmatprep.subr.bf16.mxu0 0
        %594 = vmatpush1.bf16.msra.mxu0 %v526
        %595 = vmatprep.subr.bf16.mxu0 0
        %596 = vmatpush1.bf16.msra.mxu0 %v527
        %597 = vmatprep.mubr.bf16.mxu0 %v374
        %598 = vmatmul.mubr.bf16.gmra.mrb[0].mxu0 %v373
        %v599 = vpop.f32.mrb[0].mxu0
        %v600 = vadd.f32 %v430, %v599
        %v601 = vpop.f32.mrb[0].mxu0
        %v602 = vpop.f32.mrb[0].mxu0
        %v603 = vadd.f32 %v430, %v602
        %v604 = vpop.f32.mrb[0].mxu0
        %605 = vmatprep.mubr.bf16.mxu0 %v377
        %606 = vmatmul.mubr.bf16.gmra.mrb[0].mxu0 %v376
        %v607 = vpop.f32.mrb[0].mxu0
        %v608 = vadd.f32 %v430, %v607
        %v609 = vpop.f32.mrb[0].mxu0
        %v610 = vpop.f32.mrb[0].mxu0
        %v611 = vadd.f32 %v430, %v610
        %v612 = vpop.f32.mrb[0].mxu0
        %613 = vmatprep.mubr.bf16.mxu0 %v380
        %614 = vmatmul.mubr.bf16.gmra.mrb[0].mxu0 %v379
        %v615 = vpop.f32.mrb[0].mxu0
        %v616 = vadd.f32 %v430, %v615
        %v617 = vpop.f32.mrb[0].mxu0
        %v618 = vpop.f32.mrb[0].mxu0
        %v619 = vadd.f32 %v430, %v618
        %v620 = vpop.f32.mrb[0].mxu0
        %621 = vmatprep.mubr.bf16.mxu0 %v383
        %622 = vmatmul.mubr.bf16.gmra.mrb[0].mxu0 %v382
        %v623 = vpop.f32.mrb[0].mxu0
        %v624 = vadd.f32 %v430, %v623
        %v625 = vpop.f32.mrb[0].mxu0
        %v626 = vpop.f32.mrb[0].mxu0
        %v627 = vadd.f32 %v430, %v626
        %v628 = vpop.f32.mrb[0].mxu0
        %629 = vdwg.mxu0
        %630 = vmatprep.subr.bf16.mxu0 0
        %631 = vmatpush1.bf16.msra.mxu0 %v528
        %632 = vmatprep.subr.bf16.mxu0 0
        %633 = vmatpush1.bf16.msra.mxu0 %v529
        %634 = vmatprep.subr.bf16.mxu0 0
        %635 = vmatpush1.bf16.msra.mxu0 %v530
        %636 = vmatprep.subr.bf16.mxu0 0
        %637 = vmatpush1.bf16.msra.mxu0 %v531
        %638 = vmatprep.subr.bf16.mxu0 0
        %639 = vmatpush1.bf16.msra.mxu0 0
        %640 = vmatprep.subr.bf16.mxu0 0
        %641 = vmatpush1.bf16.msra.mxu0 0
        %642 = vmatprep.subr.bf16.mxu0 0
        %643 = vmatpush1.bf16.msra.mxu0 0
        %644 = vmatprep.subr.bf16.mxu0 0
        %645 = vmatpush1.bf16.msra.mxu0 0
        %646 = vmatprep.subr.bf16.mxu0 0
        %647 = vmatpush1.bf16.msra.mxu0 0
        %648 = vmatprep.subr.bf16.mxu0 0
        %649 = vmatpush1.bf16.msra.mxu0 0
        %650 = vmatprep.subr.bf16.mxu0 0
        %651 = vmatpush1.bf16.msra.mxu0 0
        %652 = vmatprep.subr.bf16.mxu0 0
        %653 = vmatpush1.bf16.msra.mxu0 0
        %654 = vmatprep.subr.bf16.mxu0 0
        %655 = vmatpush1.bf16.msra.mxu0 0
        %656 = vmatprep.subr.bf16.mxu0 0
        %657 = vmatpush1.bf16.msra.mxu0 0
        %658 = vmatprep.subr.bf16.mxu0 0
        %659 = vmatpush1.bf16.msra.mxu0 0
        %660 = vmatprep.subr.bf16.mxu0 0
        %661 = vmatpush1.bf16.msra.mxu0 0
        %662 = vmatprep.mubr.bf16.mxu0 0
        %663 = vmatmul.mubr.bf16.gmra.mrb[0].mxu0 %v554
        %v664 = vpop.f32.mrb[0].mxu0
        %v665 = vadd.f32 %v600, %v664
        %v666 = vpop.f32.mrb[0].mxu0
        %v667 = vpop.f32.mrb[0].mxu0
        %v668 = vadd.f32 %v603, %v667
        %v669 = vpop.f32.mrb[0].mxu0
        %670 = vmatprep.mubr.bf16.mxu0 0
        %671 = vmatmul.mubr.bf16.gmra.mrb[0].mxu0 %v557
        %v672 = vpop.f32.mrb[0].mxu0
        %v673 = vadd.f32 %v608, %v672
        %v674 = vpop.f32.mrb[0].mxu0
        %v675 = vpop.f32.mrb[0].mxu0
        %v676 = vadd.f32 %v611, %v675
        %v677 = vpop.f32.mrb[0].mxu0
        %678 = vmatprep.mubr.bf16.mxu0 0
        %679 = vmatmul.mubr.bf16.gmra.mrb[0].mxu0 %v560
        %v680 = vpop.f32.mrb[0].mxu0
        %v681 = vadd.f32 %v616, %v680
        %v682 = vpop.f32.mrb[0].mxu0
        %v683 = vpop.f32.mrb[0].mxu0
        %v684 = vadd.f32 %v619, %v683
        %v685 = vpop.f32.mrb[0].mxu0
        %686 = vmatprep.mubr.bf16.mxu0 0
        %687 = vmatmul.mubr.bf16.gmra.mrb[0].mxu0 %v563
        %v688 = vpop.f32.mrb[0].mxu0
        %v689 = vadd.f32 %v624, %v688
        %v690 = vpop.f32.mrb[0].mxu0
        %v691 = vpop.f32.mrb[0].mxu0
        %v692 = vadd.f32 %v627, %v691
        %v693 = vpop.f32.mrb[0].mxu0
        %694 = vdwg.mxu0
        %v695 = vmax.f32 %v665, 0.0
        %v696 = vmax.f32 %v668, 0.0
        %v697 = vmax.f32 %v673, 0.0
        %v698 = vmax.f32 %v676, 0.0
        %v699 = vmax.f32 %v681, 0.0
        %v700 = vmax.f32 %v684, 0.0
        %v701 = vmax.f32 %v689, 0.0
        %v702 = vmax.f32 %v692, 0.0
        %v703 = vlaneseq
        %v704 = vshrl.u32 %v703, 7
        %v705 = vadd.s32 %v704, 8
        %v706 = vadd.s32 %v704, 16
        %v707 = vadd.s32 %v704, 24
        %v708 = vadd.s32 %v704, 32
        %v709 = vadd.s32 %v704, 40
        %v710 = vadd.s32 %v704, 48
        %v711 = vadd.s32 %v704, 56
        %vm712 = vcmp.lt.s32.totalorder %v704, 0
        %v713 = vsub.s32 0, %v704
        %v714 = vsel %vm712, %v713, %v704
        %v715 = vshrl.u32 %v714, 3
        %v716 = vand.u32 %v714, 7
        %v717 = vsub.s32 0, %v716
        %v718 = vsel %vm712, %v717, %v716
        %vm719 = vcmp.lt.s32.totalorder %v705, 0
        %v720 = vsub.s32 0, %v705
        %v721 = vsel %vm719, %v720, %v705
        %v722 = vshrl.u32 %v721, 3
        %v723 = vand.u32 %v721, 7
        %v724 = vsub.s32 0, %v723
        %v725 = vsel %vm719, %v724, %v723
        %vm726 = vcmp.lt.s32.totalorder %v706, 0
        %v727 = vsub.s32 0, %v706
        %v728 = vsel %vm726, %v727, %v706
        %v729 = vshrl.u32 %v728, 3
        %v730 = vand.u32 %v728, 7
        %v731 = vsub.s32 0, %v730
        %v732 = vsel %vm726, %v731, %v730
        %vm733 = vcmp.lt.s32.totalorder %v707, 0
        %v734 = vsub.s32 0, %v707
        %v735 = vsel %vm733, %v734, %v707
        %v736 = vshrl.u32 %v735, 3
        %v737 = vand.u32 %v735, 7
        %v738 = vsub.s32 0, %v737
        %v739 = vsel %vm733, %v738, %v737
        %vm740 = vcmp.lt.s32.totalorder %v708, 0
        %v741 = vsub.s32 0, %v708
        %v742 = vsel %vm740, %v741, %v708
        %v743 = vshrl.u32 %v742, 3
        %v744 = vand.u32 %v742, 7
        %v745 = vsub.s32 0, %v744
        %v746 = vsel %vm740, %v745, %v744
        %vm747 = vcmp.lt.s32.totalorder %v709, 0
        %v748 = vsub.s32 0, %v709
        %v749 = vsel %vm747, %v748, %v709
        %v750 = vshrl.u32 %v749, 3
        %v751 = vand.u32 %v749, 7
        %v752 = vsub.s32 0, %v751
        %v753 = vsel %vm747, %v752, %v751
        %vm754 = vcmp.lt.s32.totalorder %v710, 0
        %v755 = vsub.s32 0, %v710
        %v756 = vsel %vm754, %v755, %v710
        %v757 = vshrl.u32 %v756, 3
        %v758 = vand.u32 %v756, 7
        %v759 = vsub.s32 0, %v758
        %v760 = vsel %vm754, %v759, %v758
        %vm761 = vcmp.lt.s32.totalorder %v711, 0
        %v762 = vsub.s32 0, %v711
        %v763 = vsel %vm761, %v762, %v711
        %v764 = vshrl.u32 %v763, 3
        %v765 = vand.u32 %v763, 7
        %v766 = vsub.s32 0, %v765
        %v767 = vsel %vm761, %v766, %v765
        %vm768 = vcmp.ne.s32.totalorder %v718, 0
        %vm769 = vcmp.ne.s32.totalorder %v725, 0
        %vm770 = vcmp.ne.s32.totalorder %v732, 0
        %vm771 = vcmp.ne.s32.totalorder %v739, 0
        %vm772 = vcmp.ne.s32.totalorder %v746, 0
        %vm773 = vcmp.ne.s32.totalorder %v753, 0
        %vm774 = vcmp.ne.s32.totalorder %v760, 0
        %vm775 = vcmp.ne.s32.totalorder %v767, 0
        %vm776 = vcmp.lt.s32.totalorder %v718, 0
        %vm777 = vcmp.lt.s32.totalorder %v725, 0
        %vm778 = vcmp.lt.s32.totalorder %v732, 0
        %vm779 = vcmp.lt.s32.totalorder %v739, 0
        %vm780 = vcmp.lt.s32.totalorder %v746, 0
        %vm781 = vcmp.lt.s32.totalorder %v753, 0
        %vm782 = vcmp.lt.s32.totalorder %v760, 0
        %vm783 = vcmp.lt.s32.totalorder %v767, 0
        %vm784 = vmand %vm776, %vm768
        %vm785 = vmand %vm777, %vm769
        %vm786 = vmand %vm778, %vm770
        %vm787 = vmand %vm779, %vm771
        %vm788 = vmand %vm780, %vm772
        %vm789 = vmand %vm781, %vm773
        %vm790 = vmand %vm782, %vm774
        %vm791 = vmand %vm783, %vm775
        %v792 = vadd.s32 %v718, 8
        %v793 = vadd.s32 %v725, 8
        %v794 = vadd.s32 %v732, 8
        %v795 = vadd.s32 %v739, 8
        %v796 = vadd.s32 %v746, 8
        %v797 = vadd.s32 %v753, 8
        %v798 = vadd.s32 %v760, 8
        %v799 = vadd.s32 %v767, 8
        %v800 = vsel %vm784, %v792, %v718
        %v801 = vsel %vm785, %v793, %v725
        %v802 = vsel %vm786, %v794, %v732
        %v803 = vsel %vm787, %v795, %v739
        %v804 = vsel %vm788, %v796, %v746
        %v805 = vsel %vm789, %v797, %v753
        %v806 = vsel %vm790, %v798, %v760
        %v807 = vsel %vm791, %v799, %v767
        %vm808 = vcmp.ge.s32.totalorder %v800, 1
        %vm809 = vcmp.ge.s32.totalorder %v801, 1
        %vm810 = vcmp.ge.s32.totalorder %v802, 1
        %vm811 = vcmp.ge.s32.totalorder %v803, 1
        %vm812 = vcmp.ge.s32.totalorder %v804, 1
        %vm813 = vcmp.ge.s32.totalorder %v805, 1
        %vm814 = vcmp.ge.s32.totalorder %v806, 1
        %vm815 = vcmp.ge.s32.totalorder %v807, 1
        %vm816 = vcmp.le.s32.totalorder %v800, 6
        %vm817 = vcmp.le.s32.totalorder %v801, 6
        %vm818 = vcmp.le.s32.totalorder %v802, 6
        %vm819 = vcmp.le.s32.totalorder %v803, 6
        %vm820 = vcmp.le.s32.totalorder %v804, 6
        %vm821 = vcmp.le.s32.totalorder %v805, 6
        %vm822 = vcmp.le.s32.totalorder %v806, 6
        %vm823 = vcmp.le.s32.totalorder %v807, 6
        %vm824 = vcmask 519168
        %825 = vst.msk [vmem:[#allocation2] sm:$0xf] %vm824, 0
        %vm826 = vcmask 516096
        %vm827 = vsmask.f32 256
        %vm828 = vmand %vm826, %vm827
        %v829 = vld [vmem:[#allocation2 + $0x4] sm:$0x1]
        %v830 = vsel %vm828, 0, %v829
        %831 = vst [vmem:[#allocation2 + $0x4] sm:$0x1] %v830
        %vm832 = vcmask 519168
        %vm833 = vsmask.f32 7938
        %vm834 = vmand %vm832, %vm833
        %v835 = vld [vmem:[#allocation2 + $0x24] sm:$0xf]
        %v836 = vsel %vm834, 0, %v835
        %837 = vst [vmem:[#allocation2 + $0x24] sm:$0xf] %v836
        %vm838 = vcmask 516096
        %839 = vst.msk [vmem:[#allocation2 + $0x28] sm:$0x1] %vm838, 0
        %v840 = vpack.c.bf16 %v696, %v695
        %v841 = vpack.c.bf16 %v698, %v697
        %v842 = vpack.c.bf16 %v700, %v699
        %v843 = vpack.c.bf16 %v702, %v701
        %v848 = vunpack.c.l.b16 %v840
        %v849 = vunpack.c.h.b16 %v840
        %v850 = vunpack.c.l.b16 %v841
        %v851 = vunpack.c.h.b16 %v841
        %v852 = vunpack.c.l.b16 %v842
        %v853 = vunpack.c.h.b16 %v842
        %v854 = vunpack.c.l.b16 %v843
        %v855 = vunpack.c.h.b16 %v843
        %v856 = vpack.c.b16 %v848, %v848
        %v857 = vpack.c.b16 %v849, %v849
        %v858 = vpack.c.b16 %v850, %v850
        %v859 = vpack.c.b16 %v851, %v851
        %v860 = vpack.c.b16 %v852, %v852
        %v861 = vpack.c.b16 %v853, %v853
        %v862 = vpack.c.b16 %v854, %v854
        %v863 = vpack.c.b16 %v855, %v855
        %vm864 = vsmask.f32 4368
        %vm865 = vmor %vm827, %vm864
        %v867 = vshrl.u32 %v856, 16
        %v869 = vrot.slane %v867, 7
        %v870 = vshll.u32 %v856, 16
        %v872 = vor.u32 %v869, %v870
        %v873 = vrot.slane %v869, 4
        %v875 = vshrl.u32 %v857, 16
        %v877 = vrot.slane %v875, 7
        %v878 = vshll.u32 %v857, 16
        %v880 = vor.u32 %v877, %v878
        %v881 = vsel %vm865, %v873, %v880
        %v882 = vrot.slane %v877, 4
        %v884 = vshrl.u32 %v858, 16
        %v886 = vrot.slane %v884, 7
        %v887 = vshll.u32 %v858, 16
        %v889 = vor.u32 %v886, %v887
        %v890 = vsel %vm865, %v882, %v889
        %v891 = vrot.slane %v886, 4
        %v893 = vshrl.u32 %v859, 16
        %v895 = vrot.slane %v893, 7
        %v896 = vshll.u32 %v859, 16
        %v898 = vor.u32 %v895, %v896
        %v899 = vsel %vm865, %v891, %v898
        %v900 = vrot.slane %v895, 4
        %v902 = vshrl.u32 %v860, 16
        %v904 = vrot.slane %v902, 7
        %v905 = vshll.u32 %v860, 16
        %v907 = vor.u32 %v904, %v905
        %v908 = vsel %vm865, %v900, %v907
        %v909 = vrot.slane %v904, 4
        %v911 = vshrl.u32 %v861, 16
        %v913 = vrot.slane %v911, 7
        %v914 = vshll.u32 %v861, 16
        %v916 = vor.u32 %v913, %v914
        %v917 = vsel %vm865, %v909, %v916
        %v918 = vrot.slane %v913, 4
        %v920 = vshrl.u32 %v862, 16
        %v922 = vrot.slane %v920, 7
        %v923 = vshll.u32 %v862, 16
        %v925 = vor.u32 %v922, %v923
        %v926 = vsel %vm865, %v918, %v925
        %v927 = vrot.slane %v922, 4
        %v929 = vshrl.u32 %v863, 16
        %v931 = vrot.slane %v929, 7
        %v932 = vshll.u32 %v863, 16
        %v934 = vor.u32 %v931, %v932
        %v935 = vsel %vm865, %v927, %v934
        %v936 = vrot.slane %v931, 4
        %937 = vrot.lane.b32.xlu0 %v872, 96
        %v938 = vpop.permute.xlu0 %937
        %939 = vrot.lane.b32.xlu0 %v881, 96
        %v940 = vpop.permute.xlu0 %939
        %941 = vrot.lane.b32.xlu0 %v890, 96
        %v942 = vpop.permute.xlu0 %941
        %943 = vrot.lane.b32.xlu0 %v899, 96
        %v944 = vpop.permute.xlu0 %943
        %945 = vrot.lane.b32.xlu0 %v908, 96
        %v946 = vpop.permute.xlu0 %945
        %947 = vrot.lane.b32.xlu0 %v917, 96
        %v948 = vpop.permute.xlu0 %947
        %949 = vrot.lane.b32.xlu0 %v926, 96
        %v950 = vpop.permute.xlu0 %949
        %951 = vrot.lane.b32.xlu0 %v935, 96
        %v952 = vpop.permute.xlu0 %951
        %953 = vrot.lane.b32.xlu0 %v936, 96
        %v954 = vpop.permute.xlu0 %953
        %v964 = vld [vmem:[#allocation2 + $0x4] sm:$0xf]
        %v965 = vsel %vm834, %v938, %v964
        %966 = vst [vmem:[#allocation2 + $0x4] sm:$0xf] %v965
        %967 = vst.msk [vmem:[#allocation2 + $0x8] sm:$0xf] %vm824, %v940
        %968 = vst.msk [vmem:[#allocation2 + $0xc] sm:$0xf] %vm824, %v942
        %969 = vst.msk [vmem:[#allocation2 + $0x10] sm:$0xf] %vm824, %v944
        %970 = vst.msk [vmem:[#allocation2 + $0x14] sm:$0xf] %vm824, %v946
        %971 = vst.msk [vmem:[#allocation2 + $0x18] sm:$0xf] %vm824, %v948
        %972 = vst.msk [vmem:[#allocation2 + $0x1c] sm:$0xf] %vm824, %v950
        %973 = vst.msk [vmem:[#allocation2 + $0x20] sm:$0xf] %vm824, %v952
        %v974 = vld [vmem:[#allocation2 + $0x24] sm:$0x1]
        %v975 = vsel %vm828, %v954, %v974
        %976 = vst [vmem:[#allocation2 + $0x24] sm:$0x1] %v975
        %v977 = vld [vmem:[#allocation2] sm:$0xf]
        %v978 = vld [vmem:[#allocation2 + $0x4] sm:$0xf]
        %v979 = vld [vmem:[#allocation2 + $0x8] sm:$0xf]
        %v980 = vld [vmem:[#allocation2 + $0xc] sm:$0xf]
        %v981 = vld [vmem:[#allocation2 + $0x10] sm:$0xf]
        %v982 = vld [vmem:[#allocation2 + $0x14] sm:$0xf]
        %v983 = vld [vmem:[#allocation2 + $0x18] sm:$0xf]
        %v984 = vld [vmem:[#allocation2 + $0x1c] sm:$0xf]
        %v985 = vsel %vm808, 1, 0
        %v986 = vsel %vm809, 1, 0
        %v987 = vsel %vm810, 1, 0
        %v988 = vsel %vm811, 1, 0
        %v989 = vsel %vm812, 1, 0
        %v990 = vsel %vm813, 1, 0
        %v991 = vsel %vm814, 1, 0
        %v992 = vsel %vm815, 1, 0
        %vm993 = vcmp.eq.s32.totalorder %v985, 1
        %vm994 = vcmp.eq.s32.totalorder %v986, 1
        %vm995 = vcmp.eq.s32.totalorder %v987, 1
        %vm996 = vcmp.eq.s32.totalorder %v988, 1
        %vm997 = vcmp.eq.s32.totalorder %v989, 1
        %vm998 = vcmp.eq.s32.totalorder %v990, 1
        %vm999 = vcmp.eq.s32.totalorder %v991, 1
        %vm1000 = vcmp.eq.s32.totalorder %v992, 1
        %vm1001 = vmpackc.low %vm993, %vm993
        %vm1002 = vmpackc.low %vm994, %vm994
        %vm1003 = vmpackc.low %vm995, %vm995
        %vm1004 = vmpackc.low %vm996, %vm996
        %vm1005 = vmpackc.low %vm997, %vm997
        %vm1006 = vmpackc.low %vm998, %vm998
        %vm1007 = vmpackc.low %vm999, %vm999
        %vm1008 = vmpackc.low %vm1000, %vm1000
        %v1009 = vsel %vm1001, %v977, 0
        %v1010 = vsel %vm1002, %v978, 0
        %v1011 = vsel %vm1003, %v979, 0
        %v1012 = vsel %vm1004, %v980, 0
        %v1013 = vsel %vm1005, %v981, 0
        %v1014 = vsel %vm1006, %v982, 0
        %v1015 = vsel %vm1007, %v983, 0
        %v1016 = vsel %vm1008, %v984, 0
        %v1017 = vld [vmem:[#allocation4] sm:$0xf]
        %v1018 = vld [vmem:[#allocation4 + $0x4] sm:$0xf]
        %v1019 = vld [vmem:[#allocation4 + $0x8] sm:$0xf]
        %v1020 = vld [vmem:[#allocation4 + $0xc] sm:$0xf]
        %v1021 = vld [vmem:[#allocation4 + $0x10] sm:$0xf]
        %v1022 = vld [vmem:[#allocation4 + $0x14] sm:$0xf]
        %v1023 = vld [vmem:[#allocation4 + $0x18] sm:$0xf]
        %v1024 = vld [vmem:[#allocation4 + $0x1c] sm:$0xf]
        %v1025 = vld [vmem:[#allocation2 + $0x20] sm:$0x1]
        %s1026 = scalar_lea.vmem [#allocation4], 32
        %v1027 = vld [vmem:[%s1026] sm:$0xf]
        %v1028 = vld [vmem:[%s1026 + $0x4] sm:$0xf]
        %v1029 = vld [vmem:[%s1026 + $0x8] sm:$0xf]
        %v1030 = vld [vmem:[%s1026 + $0xc] sm:$0xf]
        %v1031 = vld [vmem:[%s1026 + $0x10] sm:$0xf]
        %v1032 = vld [vmem:[%s1026 + $0x14] sm:$0xf]
        %v1033 = vld [vmem:[%s1026 + $0x18] sm:$0xf]
        %v1034 = vld [vmem:[%s1026 + $0x1c] sm:$0xf]
        %v1044 = vunpack.c.l.b16 %v977
        %v1045 = vunpack.c.l.b16 %v978
        %v1046 = vunpack.c.l.b16 %v979
        %v1047 = vunpack.c.l.b16 %v980
        %v1048 = vunpack.c.l.b16 %v981
        %v1049 = vunpack.c.l.b16 %v982
        %v1050 = vunpack.c.l.b16 %v983
        %v1051 = vunpack.c.l.b16 %v984
        %v1052 = vunpack.c.l.b16 %v1025
        %v1053 = vpack.c.b16 %v1045, %v1044
        %v1054 = vpack.c.b16 %v1047, %v1046
        %v1055 = vpack.c.b16 %v1049, %v1048
        %v1056 = vpack.c.b16 %v1051, %v1050
        %v1057 = vpack.c.b16 %v1052, %v1052
        %vm1058 = vsmask.f32 7424
        %v1060 = vshrl.u32 %v1053, 16
        %v1062 = vshll.u32 %v1053, 16
        %v1064 = vrot.slane %v1062, 1
        %v1065 = vor.u32 %v1060, %v1064
        %v1067 = vshll.u32 %v1054, 16
        %v1069 = vrot.slane %v1067, 1
        %v1070 = vsel %vm1058, %v1065, %v1069
        %v1071 = vshrl.u32 %v1054, 16
        %v1073 = vor.u32 %v1071, %v1069
        %v1075 = vshll.u32 %v1055, 16
        %v1077 = vrot.slane %v1075, 1
        %v1078 = vsel %vm1058, %v1073, %v1077
        %v1079 = vshrl.u32 %v1055, 16
        %v1081 = vor.u32 %v1079, %v1077
        %v1083 = vshll.u32 %v1056, 16
        %v1085 = vrot.slane %v1083, 1
        %v1086 = vsel %vm1058, %v1081, %v1085
        %v1087 = vshrl.u32 %v1056, 16
        %v1089 = vor.u32 %v1087, %v1085
        %v1091 = vshll.u32 %v1057, 16
        %v1093 = vrot.slane %v1091, 1
        %v1094 = vsel %vm1058, %v1089, %v1093
        %v1103 = vunpack.c.l.b16 %v1027
        %v1104 = vunpack.c.l.b16 %v1028
        %v1105 = vunpack.c.l.b16 %v1029
        %v1106 = vunpack.c.l.b16 %v1030
        %v1107 = vunpack.c.l.b16 %v1031
        %v1108 = vunpack.c.l.b16 %v1032
        %v1109 = vunpack.c.l.b16 %v1033
        %v1110 = vunpack.c.l.b16 %v1034
        %v1111 = vpack.c.b16 %v1104, %v1103
        %v1112 = vpack.c.b16 %v1106, %v1105
        %v1113 = vpack.c.b16 %v1108, %v1107
        %v1114 = vpack.c.b16 %v1110, %v1109
        %v1120 = vsel %vm552, %v1070, 0
        %v1123 = vsel %vm552, %v1078, 0
        %v1126 = vsel %vm552, %v1086, 0
        %v1129 = vsel %vm552, %v1094, 0
        %1131 = vmatprep.subr.bf16.mxu0 0
        %1132 = vmatpush1.bf16.msra.mxu0 %v1111
        %1133 = vmatprep.subr.bf16.mxu0 0
        %1134 = vmatpush1.bf16.msra.mxu0 %v1112
        %1135 = vmatprep.subr.bf16.mxu0 0
        %1136 = vmatpush1.bf16.msra.mxu0 %v1113
        %1137 = vmatprep.subr.bf16.mxu0 0
        %1138 = vmatpush1.bf16.msra.mxu0 %v1114
        %1139 = vmatprep.subr.bf16.mxu0 0
        %1140 = vmatpush1.bf16.msra.mxu0 0
        %1141 = vmatprep.subr.bf16.mxu0 0
        %1142 = vmatpush1.bf16.msra.mxu0 0
        %1143 = vmatprep.subr.bf16.mxu0 0
        %1144 = vmatpush1.bf16.msra.mxu0 0
        %1145 = vmatprep.subr.bf16.mxu0 0
        %1146 = vmatpush1.bf16.msra.mxu0 0
        %1147 = vmatprep.subr.bf16.mxu0 0
        %1148 = vmatpush1.bf16.msra.mxu0 0
        %1149 = vmatprep.subr.bf16.mxu0 0
        %1150 = vmatpush1.bf16.msra.mxu0 0
        %1151 = vmatprep.subr.bf16.mxu0 0
        %1152 = vmatpush1.bf16.msra.mxu0 0
        %1153 = vmatprep.subr.bf16.mxu0 0
        %1154 = vmatpush1.bf16.msra.mxu0 0
        %1155 = vmatprep.subr.bf16.mxu0 0
        %1156 = vmatpush1.bf16.msra.mxu0 0
        %1157 = vmatprep.subr.bf16.mxu0 0
        %1158 = vmatpush1.bf16.msra.mxu0 0
        %1159 = vmatprep.subr.bf16.mxu0 0
        %1160 = vmatpush1.bf16.msra.mxu0 0
        %1161 = vmatprep.subr.bf16.mxu0 0
        %1162 = vmatpush1.bf16.msra.mxu0 0
        %1163 = vmatprep.mubr.bf16.mxu0 0
        %1164 = vmatmul.mubr.bf16.gmra.mrb[0].mxu0 %v1120
        %v1165 = vpop.f32.mrb[0].mxu0
        %v1166 = vadd.f32 0.0, %v1165
        %v1167 = vpop.f32.mrb[0].mxu0
        %v1168 = vpop.f32.mrb[0].mxu0
        %v1169 = vadd.f32 0.0, %v1168
        %v1170 = vpop.f32.mrb[0].mxu0
        %1171 = vmatprep.mubr.bf16.mxu0 0
        %1172 = vmatmul.mubr.bf16.gmra.mrb[0].mxu0 %v1123
        %v1173 = vpop.f32.mrb[0].mxu0
        %v1174 = vadd.f32 0.0, %v1173
        %v1175 = vpop.f32.mrb[0].mxu0
        %v1176 = vpop.f32.mrb[0].mxu0
        %v1177 = vadd.f32 0.0, %v1176
        %v1178 = vpop.f32.mrb[0].mxu0
        %1179 = vmatprep.mubr.bf16.mxu0 0
        %1180 = vmatmul.mubr.bf16.gmra.mrb[0].mxu0 %v1126
        %v1181 = vpop.f32.mrb[0].mxu0
        %v1182 = vadd.f32 0.0, %v1181
        %v1183 = vpop.f32.mrb[0].mxu0
        %v1184 = vpop.f32.mrb[0].mxu0
        %v1185 = vadd.f32 0.0, %v1184
        %v1186 = vpop.f32.mrb[0].mxu0
        %1187 = vmatprep.mubr.bf16.mxu0 0
        %1188 = vmatmul.mubr.bf16.gmra.mrb[0].mxu0 %v1129
        %v1189 = vpop.f32.mrb[0].mxu0
        %v1190 = vadd.f32 0.0, %v1189
        %v1191 = vpop.f32.mrb[0].mxu0
        %v1192 = vpop.f32.mrb[0].mxu0
        %v1193 = vadd.f32 0.0, %v1192
        %v1194 = vpop.f32.mrb[0].mxu0
        %1195 = vdwg.mxu0
        %v1204 = vunpack.c.l.b16 %v1009
        %v1205 = vunpack.c.l.b16 %v1010
        %v1206 = vunpack.c.l.b16 %v1011
        %v1207 = vunpack.c.l.b16 %v1012
        %v1208 = vunpack.c.l.b16 %v1013
        %v1209 = vunpack.c.l.b16 %v1014
        %v1210 = vunpack.c.l.b16 %v1015
        %v1211 = vunpack.c.l.b16 %v1016
        %v1212 = vpack.c.b16 %v1205, %v1204
        %v1213 = vpack.c.b16 %v1207, %v1206
        %v1214 = vpack.c.b16 %v1209, %v1208
        %v1215 = vpack.c.b16 %v1211, %v1210
        %v1224 = vunpack.c.l.b16 %v1017
        %v1225 = vunpack.c.l.b16 %v1018
        %v1226 = vunpack.c.l.b16 %v1019
        %v1227 = vunpack.c.l.b16 %v1020
        %v1228 = vunpack.c.l.b16 %v1021
        %v1229 = vunpack.c.l.b16 %v1022
        %v1230 = vunpack.c.l.b16 %v1023
        %v1231 = vunpack.c.l.b16 %v1024
        %v1232 = vpack.c.b16 %v1225, %v1224
        %v1233 = vpack.c.b16 %v1227, %v1226
        %v1234 = vpack.c.b16 %v1229, %v1228
        %v1235 = vpack.c.b16 %v1231, %v1230
        %v1241 = vsel %vm552, %v1212, 0
        %v1244 = vsel %vm552, %v1213, 0
        %v1247 = vsel %vm552, %v1214, 0
        %v1250 = vsel %vm552, %v1215, 0
        %1252 = vmatprep.subr.bf16.mxu0 0
        %1253 = vmatpush1.bf16.msra.mxu0 %v1232
        %1254 = vmatprep.subr.bf16.mxu0 0
        %1255 = vmatpush1.bf16.msra.mxu0 %v1233
        %1256 = vmatprep.subr.bf16.mxu0 0
        %1257 = vmatpush1.bf16.msra.mxu0 %v1234
        %1258 = vmatprep.subr.bf16.mxu0 0
        %1259 = vmatpush1.bf16.msra.mxu0 %v1235
        %1260 = vmatprep.subr.bf16.mxu0 0
        %1261 = vmatpush1.bf16.msra.mxu0 0
        %1262 = vmatprep.subr.bf16.mxu0 0
        %1263 = vmatpush1.bf16.msra.mxu0 0
        %1264 = vmatprep.subr.bf16.mxu0 0
        %1265 = vmatpush1.bf16.msra.mxu0 0
        %1266 = vmatprep.subr.bf16.mxu0 0
        %1267 = vmatpush1.bf16.msra.mxu0 0
        %1268 = vmatprep.subr.bf16.mxu0 0
        %1269 = vmatpush1.bf16.msra.mxu0 0
        %1270 = vmatprep.subr.bf16.mxu0 0
        %1271 = vmatpush1.bf16.msra.mxu0 0
        %1272 = vmatprep.subr.bf16.mxu0 0
        %1273 = vmatpush1.bf16.msra.mxu0 0
        %1274 = vmatprep.subr.bf16.mxu0 0
        %1275 = vmatpush1.bf16.msra.mxu0 0
        %1276 = vmatprep.subr.bf16.mxu0 0
        %1277 = vmatpush1.bf16.msra.mxu0 0
        %1278 = vmatprep.subr.bf16.mxu0 0
        %1279 = vmatpush1.bf16.msra.mxu0 0
        %1280 = vmatprep.subr.bf16.mxu0 0
        %1281 = vmatpush1.bf16.msra.mxu0 0
        %1282 = vmatprep.subr.bf16.mxu0 0
        %1283 = vmatpush1.bf16.msra.mxu0 0
        %1284 = vmatprep.mubr.bf16.mxu0 0
        %1285 = vmatmul.mubr.bf16.gmra.mrb[0].mxu0 %v1241
        %v1286 = vpop.f32.mrb[0].mxu0
        %v1287 = vadd.f32 %v1166, %v1286
        %v1288 = vpop.f32.mrb[0].mxu0
        %v1289 = vpop.f32.mrb[0].mxu0
        %v1290 = vadd.f32 %v1169, %v1289
        %v1291 = vpop.f32.mrb[0].mxu0
        %1292 = vmatprep.mubr.bf16.mxu0 0
        %1293 = vmatmul.mubr.bf16.gmra.mrb[0].mxu0 %v1244
        %v1294 = vpop.f32.mrb[0].mxu0
        %v1295 = vadd.f32 %v1174, %v1294
        %v1296 = vpop.f32.mrb[0].mxu0
        %v1297 = vpop.f32.mrb[0].mxu0
        %v1298 = vadd.f32 %v1177, %v1297
        %v1299 = vpop.f32.mrb[0].mxu0
        %1300 = vmatprep.mubr.bf16.mxu0 0
        %1301 = vmatmul.mubr.bf16.gmra.mrb[0].mxu0 %v1247
        %v1302 = vpop.f32.mrb[0].mxu0
        %v1303 = vadd.f32 %v1182, %v1302
        %v1304 = vpop.f32.mrb[0].mxu0
        %v1305 = vpop.f32.mrb[0].mxu0
        %v1306 = vadd.f32 %v1185, %v1305
        %v1307 = vpop.f32.mrb[0].mxu0
        %1308 = vmatprep.mubr.bf16.mxu0 0
        %1309 = vmatmul.mubr.bf16.gmra.mrb[0].mxu0 %v1250
        %v1310 = vpop.f32.mrb[0].mxu0
        %v1311 = vadd.f32 %v1190, %v1310
        %v1312 = vpop.f32.mrb[0].mxu0
        %v1313 = vpop.f32.mrb[0].mxu0
        %v1314 = vadd.f32 %v1193, %v1313
        %v1315 = vpop.f32.mrb[0].mxu0
        %1316 = vdwg.mxu0
        %v1317 = vld [vmem:[#allocation2] sm:$0xe]
        %v1318 = vsel %vm816, 1, 0
        %v1319 = vsel %vm817, 1, 0
        %v1320 = vsel %vm818, 1, 0
        %v1321 = vsel %vm819, 1, 0
        %v1322 = vsel %vm820, 1, 0
        %v1323 = vsel %vm821, 1, 0
        %v1324 = vsel %vm822, 1, 0
        %v1325 = vsel %vm823, 1, 0
        %vm1326 = vcmp.eq.s32.totalorder %v1318, 1
        %vm1327 = vcmp.eq.s32.totalorder %v1319, 1
        %vm1328 = vcmp.eq.s32.totalorder %v1320, 1
        %vm1329 = vcmp.eq.s32.totalorder %v1321, 1
        %vm1330 = vcmp.eq.s32.totalorder %v1322, 1
        %vm1331 = vcmp.eq.s32.totalorder %v1323, 1
        %vm1332 = vcmp.eq.s32.totalorder %v1324, 1
        %vm1333 = vcmp.eq.s32.totalorder %v1325, 1
        %vm1334 = vmpackc.low %vm1326, %vm1326
        %vm1335 = vmpackc.low %vm1327, %vm1327
        %vm1336 = vmpackc.low %vm1328, %vm1328
        %vm1337 = vmpackc.low %vm1329, %vm1329
        %vm1338 = vmpackc.low %vm1330, %vm1330
        %vm1339 = vmpackc.low %vm1331, %vm1331
        %vm1340 = vmpackc.low %vm1332, %vm1332
        %vm1341 = vmpackc.low %vm1333, %vm1333
        %v1342 = vsel %vm1334, 65537, 0
        %v1343 = vsel %vm1335, 65537, 0
        %v1344 = vsel %vm1336, 65537, 0
        %v1345 = vsel %vm1337, 65537, 0
        %v1346 = vsel %vm1338, 65537, 0
        %v1347 = vsel %vm1339, 65537, 0
        %v1348 = vsel %vm1340, 65537, 0
        %v1349 = vsel %vm1341, 65537, 0
        %vm1350 = vcmask 1040384
        %vm1351 = vcmask 1044484
        %vm1352 = vmor %vm1350, %vm1351
        %v1353 = vrot.slane %v1342, 7
        %v1354 = vrot.slane %v1353, 4
        %v1355 = vrot.slane %v1343, 7
        %v1356 = vsel %vm1352, %v1354, %v1355
        %v1357 = vrot.slane %v1355, 4
        %v1358 = vrot.slane %v1344, 7
        %v1359 = vsel %vm1352, %v1357, %v1358
        %v1360 = vrot.slane %v1358, 4
        %v1361 = vrot.slane %v1345, 7
        %v1362 = vsel %vm1352, %v1360, %v1361
        %v1363 = vrot.slane %v1361, 4
        %v1364 = vrot.slane %v1346, 7
        %v1365 = vsel %vm1352, %v1363, %v1364
        %v1366 = vrot.slane %v1364, 4
        %v1367 = vrot.slane %v1347, 7
        %v1368 = vsel %vm1352, %v1366, %v1367
        %v1369 = vrot.slane %v1367, 4
        %v1370 = vrot.slane %v1348, 7
        %v1371 = vsel %vm1352, %v1369, %v1370
        %v1372 = vrot.slane %v1370, 4
        %v1373 = vrot.slane %v1349, 7
        %v1374 = vsel %vm1352, %v1372, %v1373
        %v1375 = vrot.slane %v1373, 4
        %vm1376 = vcmp.ne.s16.totalorder %v1353, 0
        %vm1377 = vcmp.ne.s16.totalorder %v1356, 0
        %vm1378 = vcmp.ne.s16.totalorder %v1359, 0
        %vm1379 = vcmp.ne.s16.totalorder %v1362, 0
        %vm1380 = vcmp.ne.s16.totalorder %v1365, 0
        %vm1381 = vcmp.ne.s16.totalorder %v1368, 0
        %vm1382 = vcmp.ne.s16.totalorder %v1371, 0
        %vm1383 = vcmp.ne.s16.totalorder %v1374, 0
        %vm1384 = vcmp.ne.s16.totalorder %v1375, 0
        %v1385 = vsel %vm1376, %v1317, 0
        %v1386 = vsel %vm1377, %v978, 0
        %v1387 = vsel %vm1378, %v979, 0
        %v1388 = vsel %vm1379, %v980, 0
        %v1389 = vsel %vm1380, %v981, 0
        %v1390 = vsel %vm1381, %v982, 0
        %v1391 = vsel %vm1382, %v983, 0
        %v1392 = vsel %vm1383, %v984, 0
        %v1393 = vsel %vm1384, %v1025, 0
        %s1394 = scalar_lea.vmem [#allocation4], 64
        %v1395 = vld [vmem:[%s1394] sm:$0xf]
        %v1396 = vld [vmem:[%s1394 + $0x4] sm:$0xf]
        %v1397 = vld [vmem:[%s1394 + $0x8] sm:$0xf]
        %v1398 = vld [vmem:[%s1394 + $0xc] sm:$0xf]
        %v1399 = vld [vmem:[%s1394 + $0x10] sm:$0xf]
        %v1400 = vld [vmem:[%s1394 + $0x14] sm:$0xf]
        %v1401 = vld [vmem:[%s1394 + $0x18] sm:$0xf]
        %v1402 = vld [vmem:[%s1394 + $0x1c] sm:$0xf]
        %v1412 = vunpack.c.l.b16 %v1385
        %v1413 = vunpack.c.l.b16 %v1386
        %v1414 = vunpack.c.l.b16 %v1387
        %v1415 = vunpack.c.l.b16 %v1388
        %v1416 = vunpack.c.l.b16 %v1389
        %v1417 = vunpack.c.l.b16 %v1390
        %v1418 = vunpack.c.l.b16 %v1391
        %v1419 = vunpack.c.l.b16 %v1392
        %v1420 = vunpack.c.l.b16 %v1393
        %v1421 = vpack.c.b16 %v1413, %v1412
        %v1422 = vpack.c.b16 %v1415, %v1414
        %v1423 = vpack.c.b16 %v1417, %v1416
        %v1424 = vpack.c.b16 %v1419, %v1418
        %v1425 = vpack.c.b16 %v1420, %v1420
        %vm1426 = vcmask 1046528
        %v1427 = vrot.slane %v1421, 1
        %v1428 = vrot.slane %v1422, 1
        %v1429 = vsel %vm1426, %v1427, %v1428
        %v1430 = vrot.slane %v1423, 1
        %v1431 = vsel %vm1426, %v1428, %v1430
        %v1432 = vrot.slane %v1424, 1
        %v1433 = vsel %vm1426, %v1430, %v1432
        %v1434 = vrot.slane %v1425, 1
        %v1435 = vsel %vm1426, %v1432, %v1434
        %v1444 = vunpack.c.l.b16 %v1395
        %v1445 = vunpack.c.l.b16 %v1396
        %v1446 = vunpack.c.l.b16 %v1397
        %v1447 = vunpack.c.l.b16 %v1398
        %v1448 = vunpack.c.l.b16 %v1399
        %v1449 = vunpack.c.l.b16 %v1400
        %v1450 = vunpack.c.l.b16 %v1401
        %v1451 = vunpack.c.l.b16 %v1402
        %v1452 = vpack.c.b16 %v1445, %v1444
        %v1453 = vpack.c.b16 %v1447, %v1446
        %v1454 = vpack.c.b16 %v1449, %v1448
        %v1455 = vpack.c.b16 %v1451, %v1450
        %v1461 = vsel %vm552, %v1429, 0
        %v1464 = vsel %vm552, %v1431, 0
        %v1467 = vsel %vm552, %v1433, 0
        %v1470 = vsel %vm552, %v1435, 0
        %1472 = vmatprep.subr.bf16.mxu0 0
        %1473 = vmatpush1.bf16.msra.mxu0 %v1452
        %1474 = vmatprep.subr.bf16.mxu0 0
        %1475 = vmatpush1.bf16.msra.mxu0 %v1453
        %1476 = vmatprep.subr.bf16.mxu0 0
        %1477 = vmatpush1.bf16.msra.mxu0 %v1454
        %1478 = vmatprep.subr.bf16.mxu0 0
        %1479 = vmatpush1.bf16.msra.mxu0 %v1455
        %1480 = vmatprep.subr.bf16.mxu0 0
        %1481 = vmatpush1.bf16.msra.mxu0 0
        %1482 = vmatprep.subr.bf16.mxu0 0
        %1483 = vmatpush1.bf16.msra.mxu0 0
        %1484 = vmatprep.subr.bf16.mxu0 0
        %1485 = vmatpush1.bf16.msra.mxu0 0
        %1486 = vmatprep.subr.bf16.mxu0 0
        %1487 = vmatpush1.bf16.msra.mxu0 0
        %1488 = vmatprep.subr.bf16.mxu0 0
        %1489 = vmatpush1.bf16.msra.mxu0 0
        %1490 = vmatprep.subr.bf16.mxu0 0
        %1491 = vmatpush1.bf16.msra.mxu0 0
        %1492 = vmatprep.subr.bf16.mxu0 0
        %1493 = vmatpush1.bf16.msra.mxu0 0
        %1494 = vmatprep.subr.bf16.mxu0 0
        %1495 = vmatpush1.bf16.msra.mxu0 0
        %1496 = vmatprep.subr.bf16.mxu0 0
        %1497 = vmatpush1.bf16.msra.mxu0 0
        %1498 = vmatprep.subr.bf16.mxu0 0
        %1499 = vmatpush1.bf16.msra.mxu0 0
        %1500 = vmatprep.subr.bf16.mxu0 0
        %1501 = vmatpush1.bf16.msra.mxu0 0
        %1502 = vmatprep.subr.bf16.mxu0 0
        %1503 = vmatpush1.bf16.msra.mxu0 0
        %1504 = vmatprep.mubr.bf16.mxu0 0
        %1505 = vmatmul.mubr.bf16.gmra.mrb[0].mxu0 %v1461
        %v1506 = vpop.f32.mrb[0].mxu0
        %v1507 = vadd.f32 0.0, %v1506
        %v1508 = vpop.f32.mrb[0].mxu0
        %v1509 = vpop.f32.mrb[0].mxu0
        %v1510 = vadd.f32 0.0, %v1509
        %v1511 = vpop.f32.mrb[0].mxu0
        %1512 = vmatprep.mubr.bf16.mxu0 0
        %1513 = vmatmul.mubr.bf16.gmra.mrb[0].mxu0 %v1464
        %v1514 = vpop.f32.mrb[0].mxu0
        %v1515 = vadd.f32 0.0, %v1514
        %v1516 = vpop.f32.mrb[0].mxu0
        %v1517 = vpop.f32.mrb[0].mxu0
        %v1518 = vadd.f32 0.0, %v1517
        %v1519 = vpop.f32.mrb[0].mxu0
        %1520 = vmatprep.mubr.bf16.mxu0 0
        %1521 = vmatmul.mubr.bf16.gmra.mrb[0].mxu0 %v1467
        %v1522 = vpop.f32.mrb[0].mxu0
        %v1523 = vadd.f32 0.0, %v1522
        %v1524 = vpop.f32.mrb[0].mxu0
        %v1525 = vpop.f32.mrb[0].mxu0
        %v1526 = vadd.f32 0.0, %v1525
        %v1527 = vpop.f32.mrb[0].mxu0
        %1528 = vmatprep.mubr.bf16.mxu0 0
        %1529 = vmatmul.mubr.bf16.gmra.mrb[0].mxu0 %v1470
        %v1530 = vpop.f32.mrb[0].mxu0
        %v1531 = vadd.f32 0.0, %v1530
        %v1532 = vpop.f32.mrb[0].mxu0
        %v1533 = vpop.f32.mrb[0].mxu0
        %v1534 = vadd.f32 0.0, %v1533
        %v1535 = vpop.f32.mrb[0].mxu0
        %1536 = vdwg.mxu0
        %v1537 = vadd.f32 %v1287, %v1507
        %v1538 = vadd.f32 %v1290, %v1510
        %v1539 = vadd.f32 %v1295, %v1515
        %v1540 = vadd.f32 %v1298, %v1518
        %v1541 = vadd.f32 %v1303, %v1523
        %v1542 = vadd.f32 %v1306, %v1526
        %v1543 = vadd.f32 %v1311, %v1531
        %v1544 = vadd.f32 %v1314, %v1534
        %v1545 = vld [vmem:[#allocation2 + $0x20] sm:$0xf]
        %v1546 = vsel %vm1001, %v978, 0
        %v1547 = vsel %vm1002, %v979, 0
        %v1548 = vsel %vm1003, %v980, 0
        %v1549 = vsel %vm1004, %v981, 0
        %v1550 = vsel %vm1005, %v982, 0
        %v1551 = vsel %vm1006, %v983, 0
        %v1552 = vsel %vm1007, %v984, 0
        %v1553 = vsel %vm1008, %v1545, 0
        %s1554 = scalar_lea.vmem [#allocation4], 96
        %v1555 = vld [vmem:[%s1554] sm:$0xf]
        %v1556 = vld [vmem:[%s1554 + $0x4] sm:$0xf]
        %v1557 = vld [vmem:[%s1554 + $0x8] sm:$0xf]
        %v1558 = vld [vmem:[%s1554 + $0xc] sm:$0xf]
        %v1559 = vld [vmem:[%s1554 + $0x10] sm:$0xf]
        %v1560 = vld [vmem:[%s1554 + $0x14] sm:$0xf]
        %v1561 = vld [vmem:[%s1554 + $0x18] sm:$0xf]
        %v1562 = vld [vmem:[%s1554 + $0x1c] sm:$0xf]
        %v1571 = vunpack.c.l.b16 %v1546
        %v1572 = vunpack.c.l.b16 %v1547
        %v1573 = vunpack.c.l.b16 %v1548
        %v1574 = vunpack.c.l.b16 %v1549
        %v1575 = vunpack.c.l.b16 %v1550
        %v1576 = vunpack.c.l.b16 %v1551
        %v1577 = vunpack.c.l.b16 %v1552
        %v1578 = vunpack.c.l.b16 %v1553
        %v1579 = vpack.c.b16 %v1572, %v1571
        %v1580 = vpack.c.b16 %v1574, %v1573
        %v1581 = vpack.c.b16 %v1576, %v1575
        %v1582 = vpack.c.b16 %v1578, %v1577
        %v1591 = vunpack.c.l.b16 %v1555
        %v1592 = vunpack.c.l.b16 %v1556
        %v1593 = vunpack.c.l.b16 %v1557
        %v1594 = vunpack.c.l.b16 %v1558
        %v1595 = vunpack.c.l.b16 %v1559
        %v1596 = vunpack.c.l.b16 %v1560
        %v1597 = vunpack.c.l.b16 %v1561
        %v1598 = vunpack.c.l.b16 %v1562
        %v1599 = vpack.c.b16 %v1592, %v1591
        %v1600 = vpack.c.b16 %v1594, %v1593
        %v1601 = vpack.c.b16 %v1596, %v1595
        %v1602 = vpack.c.b16 %v1598, %v1597
        %v1608 = vsel %vm552, %v1579, 0
        %v1611 = vsel %vm552, %v1580, 0
        %v1614 = vsel %vm552, %v1581, 0
        %v1617 = vsel %vm552, %v1582, 0
        %1619 = vmatprep.subr.bf16.mxu0 0
        %1620 = vmatpush1.bf16.msra.mxu0 %v1599
        %1621 = vmatprep.subr.bf16.mxu0 0
        %1622 = vmatpush1.bf16.msra.mxu0 %v1600
        %1623 = vmatprep.subr.bf16.mxu0 0
        %1624 = vmatpush1.bf16.msra.mxu0 %v1601
        %1625 = vmatprep.subr.bf16.mxu0 0
        %1626 = vmatpush1.bf16.msra.mxu0 %v1602
        %1627 = vmatprep.subr.bf16.mxu0 0
        %1628 = vmatpush1.bf16.msra.mxu0 0
        %1629 = vmatprep.subr.bf16.mxu0 0
        %1630 = vmatpush1.bf16.msra.mxu0 0
        %1631 = vmatprep.subr.bf16.mxu0 0
        %1632 = vmatpush1.bf16.msra.mxu0 0
        %1633 = vmatprep.subr.bf16.mxu0 0
        %1634 = vmatpush1.bf16.msra.mxu0 0
        %1635 = vmatprep.subr.bf16.mxu0 0
        %1636 = vmatpush1.bf16.msra.mxu0 0
        %1637 = vmatprep.subr.bf16.mxu0 0
        %1638 = vmatpush1.bf16.msra.mxu0 0
        %1639 = vmatprep.subr.bf16.mxu0 0
        %1640 = vmatpush1.bf16.msra.mxu0 0
        %1641 = vmatprep.subr.bf16.mxu0 0
        %1642 = vmatpush1.bf16.msra.mxu0 0
        %1643 = vmatprep.subr.bf16.mxu0 0
        %1644 = vmatpush1.bf16.msra.mxu0 0
        %1645 = vmatprep.subr.bf16.mxu0 0
        %1646 = vmatpush1.bf16.msra.mxu0 0
        %1647 = vmatprep.subr.bf16.mxu0 0
        %1648 = vmatpush1.bf16.msra.mxu0 0
        %1649 = vmatprep.subr.bf16.mxu0 0
        %1650 = vmatpush1.bf16.msra.mxu0 0
        %1651 = vmatprep.mubr.bf16.mxu0 0
        %1652 = vmatmul.mubr.bf16.gmra.mrb[0].mxu0 %v1608
        %v1653 = vpop.f32.mrb[0].mxu0
        %v1654 = vadd.f32 0.0, %v1653
        %v1655 = vpop.f32.mrb[0].mxu0
        %v1656 = vpop.f32.mrb[0].mxu0
        %v1657 = vadd.f32 0.0, %v1656
        %v1658 = vpop.f32.mrb[0].mxu0
        %1659 = vmatprep.mubr.bf16.mxu0 0
        %1660 = vmatmul.mubr.bf16.gmra.mrb[0].mxu0 %v1611
        %v1661 = vpop.f32.mrb[0].mxu0
        %v1662 = vadd.f32 0.0, %v1661
        %v1663 = vpop.f32.mrb[0].mxu0
        %v1664 = vpop.f32.mrb[0].mxu0
        %v1665 = vadd.f32 0.0, %v1664
        %v1666 = vpop.f32.mrb[0].mxu0
        %1667 = vmatprep.mubr.bf16.mxu0 0
        %1668 = vmatmul.mubr.bf16.gmra.mrb[0].mxu0 %v1614
        %v1669 = vpop.f32.mrb[0].mxu0
        %v1670 = vadd.f32 0.0, %v1669
        %v1671 = vpop.f32.mrb[0].mxu0
        %v1672 = vpop.f32.mrb[0].mxu0
        %v1673 = vadd.f32 0.0, %v1672
        %v1674 = vpop.f32.mrb[0].mxu0
        %1675 = vmatprep.mubr.bf16.mxu0 0
        %1676 = vmatmul.mubr.bf16.gmra.mrb[0].mxu0 %v1617
        %v1677 = vpop.f32.mrb[0].mxu0
        %v1678 = vadd.f32 0.0, %v1677
        %v1679 = vpop.f32.mrb[0].mxu0
        %v1680 = vpop.f32.mrb[0].mxu0
        %v1681 = vadd.f32 0.0, %v1680
        %v1682 = vpop.f32.mrb[0].mxu0
        %1683 = vdwg.mxu0
        %v1684 = vadd.f32 %v1537, %v1654
        %v1685 = vadd.f32 %v1538, %v1657
        %v1686 = vadd.f32 %v1539, %v1662
        %v1687 = vadd.f32 %v1540, %v1665
        %v1688 = vadd.f32 %v1541, %v1670
        %v1689 = vadd.f32 %v1542, %v1673
        %v1690 = vadd.f32 %v1543, %v1678
        %v1691 = vadd.f32 %v1544, %v1681
        %v1692 = vld [vmem:[#allocation2 + $0x4] sm:$0xf]
        %v1693 = vld [vmem:[#allocation2 + $0x8] sm:$0xf]
        %v1694 = vld [vmem:[#allocation2 + $0xc] sm:$0xf]
        %v1695 = vld [vmem:[#allocation2 + $0x10] sm:$0xf]
        %v1696 = vld [vmem:[#allocation2 + $0x14] sm:$0xf]
        %v1697 = vld [vmem:[#allocation2 + $0x18] sm:$0xf]
        %v1698 = vld [vmem:[#allocation2 + $0x1c] sm:$0xf]
        %v1699 = vld [vmem:[#allocation2 + $0x20] sm:$0xf]
        %v1700 = vld [vmem:[#allocation2 + $0x24] sm:$0x1]
        %s1701 = scalar_lea.vmem [#allocation4], 128
        %v1702 = vld [vmem:[%s1701] sm:$0xf]
        %v1703 = vld [vmem:[%s1701 + $0x4] sm:$0xf]
        %v1704 = vld [vmem:[%s1701 + $0x8] sm:$0xf]
        %v1705 = vld [vmem:[%s1701 + $0xc] sm:$0xf]
        %v1706 = vld [vmem:[%s1701 + $0x10] sm:$0xf]
        %v1707 = vld [vmem:[%s1701 + $0x14] sm:$0xf]
        %v1708 = vld [vmem:[%s1701 + $0x18] sm:$0xf]
        %v1709 = vld [vmem:[%s1701 + $0x1c] sm:$0xf]
        %v1719 = vunpack.c.l.b16 %v1692
        %v1720 = vunpack.c.l.b16 %v1693
        %v1721 = vunpack.c.l.b16 %v1694
        %v1722 = vunpack.c.l.b16 %v1695
        %v1723 = vunpack.c.l.b16 %v1696
        %v1724 = vunpack.c.l.b16 %v1697
        %v1725 = vunpack.c.l.b16 %v1698
        %v1726 = vunpack.c.l.b16 %v1699
        %v1727 = vunpack.c.l.b16 %v1700
        %v1728 = vpack.c.b16 %v1720, %v1719
        %v1729 = vpack.c.b16 %v1722, %v1721
        %v1730 = vpack.c.b16 %v1724, %v1723
        %v1731 = vpack.c.b16 %v1726, %v1725
        %v1732 = vpack.c.b16 %v1727, %v1727
        %v1734 = vshrl.u32 %v1728, 16
        %v1736 = vshll.u32 %v1728, 16
        %v1738 = vrot.slane %v1736, 1
        %v1739 = vor.u32 %v1734, %v1738
        %v1741 = vshll.u32 %v1729, 16
        %v1743 = vrot.slane %v1741, 1
        %v1744 = vsel %vm1058, %v1739, %v1743
        %v1745 = vshrl.u32 %v1729, 16
        %v1747 = vor.u32 %v1745, %v1743
        %v1749 = vshll.u32 %v1730, 16
        %v1751 = vrot.slane %v1749, 1
        %v1752 = vsel %vm1058, %v1747, %v1751
        %v1753 = vshrl.u32 %v1730, 16
        %v1755 = vor.u32 %v1753, %v1751
        %v1757 = vshll.u32 %v1731, 16
        %v1759 = vrot.slane %v1757, 1
        %v1760 = vsel %vm1058, %v1755, %v1759
        %v1761 = vshrl.u32 %v1731, 16
        %v1763 = vor.u32 %v1761, %v1759
        %v1765 = vshll.u32 %v1732, 16
        %v1767 = vrot.slane %v1765, 1
        %v1768 = vsel %vm1058, %v1763, %v1767
        %v1777 = vunpack.c.l.b16 %v1702
        %v1778 = vunpack.c.l.b16 %v1703
        %v1779 = vunpack.c.l.b16 %v1704
        %v1780 = vunpack.c.l.b16 %v1705
        %v1781 = vunpack.c.l.b16 %v1706
        %v1782 = vunpack.c.l.b16 %v1707
        %v1783 = vunpack.c.l.b16 %v1708
        %v1784 = vunpack.c.l.b16 %v1709
        %v1785 = vpack.c.b16 %v1778, %v1777
        %v1786 = vpack.c.b16 %v1780, %v1779
        %v1787 = vpack.c.b16 %v1782, %v1781
        %v1788 = vpack.c.b16 %v1784, %v1783
        %v1794 = vsel %vm552, %v1744, 0
        %v1797 = vsel %vm552, %v1752, 0
        %v1800 = vsel %vm552, %v1760, 0
        %v1803 = vsel %vm552, %v1768, 0
        %1805 = vmatprep.subr.bf16.mxu0 0
        %1806 = vmatpush1.bf16.msra.mxu0 %v1785
        %1807 = vmatprep.subr.bf16.mxu0 0
        %1808 = vmatpush1.bf16.msra.mxu0 %v1786
        %1809 = vmatprep.subr.bf16.mxu0 0
        %1810 = vmatpush1.bf16.msra.mxu0 %v1787
        %1811 = vmatprep.subr.bf16.mxu0 0
        %1812 = vmatpush1.bf16.msra.mxu0 %v1788
        %1813 = vmatprep.subr.bf16.mxu0 0
        %1814 = vmatpush1.bf16.msra.mxu0 0
        %1815 = vmatprep.subr.bf16.mxu0 0
        %1816 = vmatpush1.bf16.msra.mxu0 0
        %1817 = vmatprep.subr.bf16.mxu0 0
        %1818 = vmatpush1.bf16.msra.mxu0 0
        %1819 = vmatprep.subr.bf16.mxu0 0
        %1820 = vmatpush1.bf16.msra.mxu0 0
        %1821 = vmatprep.subr.bf16.mxu0 0
        %1822 = vmatpush1.bf16.msra.mxu0 0
        %1823 = vmatprep.subr.bf16.mxu0 0
        %1824 = vmatpush1.bf16.msra.mxu0 0
        %1825 = vmatprep.subr.bf16.mxu0 0
        %1826 = vmatpush1.bf16.msra.mxu0 0
        %1827 = vmatprep.subr.bf16.mxu0 0
        %1828 = vmatpush1.bf16.msra.mxu0 0
        %1829 = vmatprep.subr.bf16.mxu0 0
        %1830 = vmatpush1.bf16.msra.mxu0 0
        %1831 = vmatprep.subr.bf16.mxu0 0
        %1832 = vmatpush1.bf16.msra.mxu0 0
        %1833 = vmatprep.subr.bf16.mxu0 0
        %1834 = vmatpush1.bf16.msra.mxu0 0
        %1835 = vmatprep.subr.bf16.mxu0 0
        %1836 = vmatpush1.bf16.msra.mxu0 0
        %1837 = vmatprep.mubr.bf16.mxu0 0
        %1838 = vmatmul.mubr.bf16.gmra.mrb[0].mxu0 %v1794
        %v1839 = vpop.f32.mrb[0].mxu0
        %v1840 = vadd.f32 0.0, %v1839
        %v1841 = vpop.f32.mrb[0].mxu0
        %v1842 = vpop.f32.mrb[0].mxu0
        %v1843 = vadd.f32 0.0, %v1842
        %v1844 = vpop.f32.mrb[0].mxu0
        %1845 = vmatprep.mubr.bf16.mxu0 0
        %1846 = vmatmul.mubr.bf16.gmra.mrb[0].mxu0 %v1797
        %v1847 = vpop.f32.mrb[0].mxu0
        %v1848 = vadd.f32 0.0, %v1847
        %v1849 = vpop.f32.mrb[0].mxu0
        %v1850 = vpop.f32.mrb[0].mxu0
        %v1851 = vadd.f32 0.0, %v1850
        %v1852 = vpop.f32.mrb[0].mxu0
        %1853 = vmatprep.mubr.bf16.mxu0 0
        %1854 = vmatmul.mubr.bf16.gmra.mrb[0].mxu0 %v1800
        %v1855 = vpop.f32.mrb[0].mxu0
        %v1856 = vadd.f32 0.0, %v1855
        %v1857 = vpop.f32.mrb[0].mxu0
        %v1858 = vpop.f32.mrb[0].mxu0
        %v1859 = vadd.f32 0.0, %v1858
        %v1860 = vpop.f32.mrb[0].mxu0
        %1861 = vmatprep.mubr.bf16.mxu0 0
        %1862 = vmatmul.mubr.bf16.gmra.mrb[0].mxu0 %v1803
        %v1863 = vpop.f32.mrb[0].mxu0
        %v1864 = vadd.f32 0.0, %v1863
        %v1865 = vpop.f32.mrb[0].mxu0
        %v1866 = vpop.f32.mrb[0].mxu0
        %v1867 = vadd.f32 0.0, %v1866
        %v1868 = vpop.f32.mrb[0].mxu0
        %1869 = vdwg.mxu0
        %v1870 = vadd.f32 %v1684, %v1840
        %v1871 = vadd.f32 %v1685, %v1843
        %v1872 = vadd.f32 %v1686, %v1848
        %v1873 = vadd.f32 %v1687, %v1851
        %v1874 = vadd.f32 %v1688, %v1856
        %v1875 = vadd.f32 %v1689, %v1859
        %v1876 = vadd.f32 %v1690, %v1864
        %v1877 = vadd.f32 %v1691, %v1867
        %v1878 = vld [vmem:[#allocation2 + $0x4] sm:$0xe]
        %v1879 = vsel %vm1376, %v1878, 0
        %v1880 = vsel %vm1377, %v1693, 0
        %v1881 = vsel %vm1378, %v1694, 0
        %v1882 = vsel %vm1379, %v1695, 0
        %v1883 = vsel %vm1380, %v1696, 0
        %v1884 = vsel %vm1381, %v1697, 0
        %v1885 = vsel %vm1382, %v1698, 0
        %v1886 = vsel %vm1383, %v1699, 0
        %v1887 = vsel %vm1384, %v1700, 0
        %s1888 = scalar_lea.vmem [#allocation4], 160
        %v1889 = vld [vmem:[%s1888] sm:$0xf]
        %v1890 = vld [vmem:[%s1888 + $0x4] sm:$0xf]
        %v1891 = vld [vmem:[%s1888 + $0x8] sm:$0xf]
        %v1892 = vld [vmem:[%s1888 + $0xc] sm:$0xf]
        %v1893 = vld [vmem:[%s1888 + $0x10] sm:$0xf]
        %v1894 = vld [vmem:[%s1888 + $0x14] sm:$0xf]
        %v1895 = vld [vmem:[%s1888 + $0x18] sm:$0xf]
        %v1896 = vld [vmem:[%s1888 + $0x1c] sm:$0xf]
        %v1906 = vunpack.c.l.b16 %v1879
        %v1907 = vunpack.c.l.b16 %v1880
        %v1908 = vunpack.c.l.b16 %v1881
        %v1909 = vunpack.c.l.b16 %v1882
        %v1910 = vunpack.c.l.b16 %v1883
        %v1911 = vunpack.c.l.b16 %v1884
        %v1912 = vunpack.c.l.b16 %v1885
        %v1913 = vunpack.c.l.b16 %v1886
        %v1914 = vunpack.c.l.b16 %v1887
        %v1915 = vpack.c.b16 %v1907, %v1906
        %v1916 = vpack.c.b16 %v1909, %v1908
        %v1917 = vpack.c.b16 %v1911, %v1910
        %v1918 = vpack.c.b16 %v1913, %v1912
        %v1919 = vpack.c.b16 %v1914, %v1914
        %v1920 = vrot.slane %v1915, 1
        %v1921 = vrot.slane %v1916, 1
        %v1922 = vsel %vm1426, %v1920, %v1921
        %v1923 = vrot.slane %v1917, 1
        %v1924 = vsel %vm1426, %v1921, %v1923
        %v1925 = vrot.slane %v1918, 1
        %v1926 = vsel %vm1426, %v1923, %v1925
        %v1927 = vrot.slane %v1919, 1
        %v1928 = vsel %vm1426, %v1925, %v1927
        %v1937 = vunpack.c.l.b16 %v1889
        %v1938 = vunpack.c.l.b16 %v1890
        %v1939 = vunpack.c.l.b16 %v1891
        %v1940 = vunpack.c.l.b16 %v1892
        %v1941 = vunpack.c.l.b16 %v1893
        %v1942 = vunpack.c.l.b16 %v1894
        %v1943 = vunpack.c.l.b16 %v1895
        %v1944 = vunpack.c.l.b16 %v1896
        %v1945 = vpack.c.b16 %v1938, %v1937
        %v1946 = vpack.c.b16 %v1940, %v1939
        %v1947 = vpack.c.b16 %v1942, %v1941
        %v1948 = vpack.c.b16 %v1944, %v1943
        %v1954 = vsel %vm552, %v1922, 0
        %v1957 = vsel %vm552, %v1924, 0
        %v1960 = vsel %vm552, %v1926, 0
        %v1963 = vsel %vm552, %v1928, 0
        %1965 = vmatprep.subr.bf16.mxu0 0
        %1966 = vmatpush1.bf16.msra.mxu0 %v1945
        %1967 = vmatprep.subr.bf16.mxu0 0
        %1968 = vmatpush1.bf16.msra.mxu0 %v1946
        %1969 = vmatprep.subr.bf16.mxu0 0
        %1970 = vmatpush1.bf16.msra.mxu0 %v1947
        %1971 = vmatprep.subr.bf16.mxu0 0
        %1972 = vmatpush1.bf16.msra.mxu0 %v1948
        %1973 = vmatprep.subr.bf16.mxu0 0
        %1974 = vmatpush1.bf16.msra.mxu0 0
        %1975 = vmatprep.subr.bf16.mxu0 0
        %1976 = vmatpush1.bf16.msra.mxu0 0
        %1977 = vmatprep.subr.bf16.mxu0 0
        %1978 = vmatpush1.bf16.msra.mxu0 0
        %1979 = vmatprep.subr.bf16.mxu0 0
        %1980 = vmatpush1.bf16.msra.mxu0 0
        %1981 = vmatprep.subr.bf16.mxu0 0
        %1982 = vmatpush1.bf16.msra.mxu0 0
        %1983 = vmatprep.subr.bf16.mxu0 0
        %1984 = vmatpush1.bf16.msra.mxu0 0
        %1985 = vmatprep.subr.bf16.mxu0 0
        %1986 = vmatpush1.bf16.msra.mxu0 0
        %1987 = vmatprep.subr.bf16.mxu0 0
        %1988 = vmatpush1.bf16.msra.mxu0 0
        %1989 = vmatprep.subr.bf16.mxu0 0
        %1990 = vmatpush1.bf16.msra.mxu0 0
        %1991 = vmatprep.subr.bf16.mxu0 0
        %1992 = vmatpush1.bf16.msra.mxu0 0
        %1993 = vmatprep.subr.bf16.mxu0 0
        %1994 = vmatpush1.bf16.msra.mxu0 0
        %1995 = vmatprep.subr.bf16.mxu0 0
        %1996 = vmatpush1.bf16.msra.mxu0 0
        %1997 = vmatprep.mubr.bf16.mxu0 0
        %1998 = vmatmul.mubr.bf16.gmra.mrb[0].mxu0 %v1954
        %v1999 = vpop.f32.mrb[0].mxu0
        %v2000 = vadd.f32 0.0, %v1999
        %v2001 = vpop.f32.mrb[0].mxu0
        %v2002 = vpop.f32.mrb[0].mxu0
        %v2003 = vadd.f32 0.0, %v2002
        %v2004 = vpop.f32.mrb[0].mxu0
        %2005 = vmatprep.mubr.bf16.mxu0 0
        %2006 = vmatmul.mubr.bf16.gmra.mrb[0].mxu0 %v1957
        %v2007 = vpop.f32.mrb[0].mxu0
        %v2008 = vadd.f32 0.0, %v2007
        %v2009 = vpop.f32.mrb[0].mxu0
        %v2010 = vpop.f32.mrb[0].mxu0
        %v2011 = vadd.f32 0.0, %v2010
        %v2012 = vpop.f32.mrb[0].mxu0
        %2013 = vmatprep.mubr.bf16.mxu0 0
        %2014 = vmatmul.mubr.bf16.gmra.mrb[0].mxu0 %v1960
        %v2015 = vpop.f32.mrb[0].mxu0
        %v2016 = vadd.f32 0.0, %v2015
        %v2017 = vpop.f32.mrb[0].mxu0
        %v2018 = vpop.f32.mrb[0].mxu0
        %v2019 = vadd.f32 0.0, %v2018
        %v2020 = vpop.f32.mrb[0].mxu0
        %2021 = vmatprep.mubr.bf16.mxu0 0
        %2022 = vmatmul.mubr.bf16.gmra.mrb[0].mxu0 %v1963
        %v2023 = vpop.f32.mrb[0].mxu0
        %v2024 = vadd.f32 0.0, %v2023
        %v2025 = vpop.f32.mrb[0].mxu0
        %v2026 = vpop.f32.mrb[0].mxu0
        %v2027 = vadd.f32 0.0, %v2026
        %v2028 = vpop.f32.mrb[0].mxu0
        %2029 = vdwg.mxu0
        %v2030 = vadd.f32 %v1870, %v2000
        %v2031 = vadd.f32 %v1871, %v2003
        %v2032 = vadd.f32 %v1872, %v2008
        %v2033 = vadd.f32 %v1873, %v2011
        %v2034 = vadd.f32 %v1874, %v2016
        %v2035 = vadd.f32 %v1875, %v2019
        %v2036 = vadd.f32 %v1876, %v2024
        %v2037 = vadd.f32 %v1877, %v2027
        %v2038 = vld [vmem:[#allocation2 + $0x24] sm:$0xf]
        %v2039 = vsel %vm1001, %v1693, 0
        %v2040 = vsel %vm1002, %v1694, 0
        %v2041 = vsel %vm1003, %v1695, 0
        %v2042 = vsel %vm1004, %v1696, 0
        %v2043 = vsel %vm1005, %v1697, 0
        %v2044 = vsel %vm1006, %v1698, 0
        %v2045 = vsel %vm1007, %v1699, 0
        %v2046 = vsel %vm1008, %v2038, 0
        %s2047 = scalar_lea.vmem [#allocation4], 192
        %v2048 = vld [vmem:[%s2047] sm:$0xf]
        %v2049 = vld [vmem:[%s2047 + $0x4] sm:$0xf]
        %v2050 = vld [vmem:[%s2047 + $0x8] sm:$0xf]
        %v2051 = vld [vmem:[%s2047 + $0xc] sm:$0xf]
        %v2052 = vld [vmem:[%s2047 + $0x10] sm:$0xf]
        %v2053 = vld [vmem:[%s2047 + $0x14] sm:$0xf]
        %v2054 = vld [vmem:[%s2047 + $0x18] sm:$0xf]
        %v2055 = vld [vmem:[%s2047 + $0x1c] sm:$0xf]
        %v2064 = vunpack.c.l.b16 %v2039
        %v2065 = vunpack.c.l.b16 %v2040
        %v2066 = vunpack.c.l.b16 %v2041
        %v2067 = vunpack.c.l.b16 %v2042
        %v2068 = vunpack.c.l.b16 %v2043
        %v2069 = vunpack.c.l.b16 %v2044
        %v2070 = vunpack.c.l.b16 %v2045
        %v2071 = vunpack.c.l.b16 %v2046
        %v2072 = vpack.c.b16 %v2065, %v2064
        %v2073 = vpack.c.b16 %v2067, %v2066
        %v2074 = vpack.c.b16 %v2069, %v2068
        %v2075 = vpack.c.b16 %v2071, %v2070
        %v2084 = vunpack.c.l.b16 %v2048
        %v2085 = vunpack.c.l.b16 %v2049
        %v2086 = vunpack.c.l.b16 %v2050
        %v2087 = vunpack.c.l.b16 %v2051
        %v2088 = vunpack.c.l.b16 %v2052
        %v2089 = vunpack.c.l.b16 %v2053
        %v2090 = vunpack.c.l.b16 %v2054
        %v2091 = vunpack.c.l.b16 %v2055
        %v2092 = vpack.c.b16 %v2085, %v2084
        %v2093 = vpack.c.b16 %v2087, %v2086
        %v2094 = vpack.c.b16 %v2089, %v2088
        %v2095 = vpack.c.b16 %v2091, %v2090
        %v2101 = vsel %vm552, %v2072, 0
        %v2104 = vsel %vm552, %v2073, 0
        %v2107 = vsel %vm552, %v2074, 0
        %v2110 = vsel %vm552, %v2075, 0
        %2112 = vmatprep.subr.bf16.mxu0 0
        %2113 = vmatpush1.bf16.msra.mxu0 %v2092
        %2114 = vmatprep.subr.bf16.mxu0 0
        %2115 = vmatpush1.bf16.msra.mxu0 %v2093
        %2116 = vmatprep.subr.bf16.mxu0 0
        %2117 = vmatpush1.bf16.msra.mxu0 %v2094
        %2118 = vmatprep.subr.bf16.mxu0 0
        %2119 = vmatpush1.bf16.msra.mxu0 %v2095
        %2120 = vmatprep.subr.bf16.mxu0 0
        %2121 = vmatpush1.bf16.msra.mxu0 0
        %2122 = vmatprep.subr.bf16.mxu0 0
        %2123 = vmatpush1.bf16.msra.mxu0 0
        %2124 = vmatprep.subr.bf16.mxu0 0
        %2125 = vmatpush1.bf16.msra.mxu0 0
        %2126 = vmatprep.subr.bf16.mxu0 0
        %2127 = vmatpush1.bf16.msra.mxu0 0
        %2128 = vmatprep.subr.bf16.mxu0 0
        %2129 = vmatpush1.bf16.msra.mxu0 0
        %2130 = vmatprep.subr.bf16.mxu0 0
        %2131 = vmatpush1.bf16.msra.mxu0 0
        %2132 = vmatprep.subr.bf16.mxu0 0
        %2133 = vmatpush1.bf16.msra.mxu0 0
        %2134 = vmatprep.subr.bf16.mxu0 0
        %2135 = vmatpush1.bf16.msra.mxu0 0
        %2136 = vmatprep.subr.bf16.mxu0 0
        %2137 = vmatpush1.bf16.msra.mxu0 0
        %2138 = vmatprep.subr.bf16.mxu0 0
        %2139 = vmatpush1.bf16.msra.mxu0 0
        %2140 = vmatprep.subr.bf16.mxu0 0
        %2141 = vmatpush1.bf16.msra.mxu0 0
        %2142 = vmatprep.subr.bf16.mxu0 0
        %2143 = vmatpush1.bf16.msra.mxu0 0
        %2144 = vmatprep.mubr.bf16.mxu0 0
        %2145 = vmatmul.mubr.bf16.gmra.mrb[0].mxu0 %v2101
        %v2146 = vpop.f32.mrb[0].mxu0
        %v2147 = vadd.f32 0.0, %v2146
        %v2148 = vpop.f32.mrb[0].mxu0
        %v2149 = vpop.f32.mrb[0].mxu0
        %v2150 = vadd.f32 0.0, %v2149
        %v2151 = vpop.f32.mrb[0].mxu0
        %2152 = vmatprep.mubr.bf16.mxu0 0
        %2153 = vmatmul.mubr.bf16.gmra.mrb[0].mxu0 %v2104
        %v2154 = vpop.f32.mrb[0].mxu0
        %v2155 = vadd.f32 0.0, %v2154
        %v2156 = vpop.f32.mrb[0].mxu0
        %v2157 = vpop.f32.mrb[0].mxu0
        %v2158 = vadd.f32 0.0, %v2157
        %v2159 = vpop.f32.mrb[0].mxu0
        %2160 = vmatprep.mubr.bf16.mxu0 0
        %2161 = vmatmul.mubr.bf16.gmra.mrb[0].mxu0 %v2107
        %v2162 = vpop.f32.mrb[0].mxu0
        %v2163 = vadd.f32 0.0, %v2162
        %v2164 = vpop.f32.mrb[0].mxu0
        %v2165 = vpop.f32.mrb[0].mxu0
        %v2166 = vadd.f32 0.0, %v2165
        %v2167 = vpop.f32.mrb[0].mxu0
        %2168 = vmatprep.mubr.bf16.mxu0 0
        %2169 = vmatmul.mubr.bf16.gmra.mrb[0].mxu0 %v2110
        %v2170 = vpop.f32.mrb[0].mxu0
        %v2171 = vadd.f32 0.0, %v2170
        %v2172 = vpop.f32.mrb[0].mxu0
        %v2173 = vpop.f32.mrb[0].mxu0
        %v2174 = vadd.f32 0.0, %v2173
        %v2175 = vpop.f32.mrb[0].mxu0
        %2176 = vdwg.mxu0
        %v2177 = vadd.f32 %v2030, %v2147
        %v2178 = vadd.f32 %v2031, %v2150
        %v2179 = vadd.f32 %v2032, %v2155
        %v2180 = vadd.f32 %v2033, %v2158
        %v2181 = vadd.f32 %v2034, %v2163
        %v2182 = vadd.f32 %v2035, %v2166
        %v2183 = vadd.f32 %v2036, %v2171
        %v2184 = vadd.f32 %v2037, %v2174
        %v2185 = vld [vmem:[#allocation2 + $0x8] sm:$0xf]
        %v2186 = vld [vmem:[#allocation2 + $0xc] sm:$0xf]
        %v2187 = vld [vmem:[#allocation2 + $0x10] sm:$0xf]
        %v2188 = vld [vmem:[#allocation2 + $0x14] sm:$0xf]
        %v2189 = vld [vmem:[#allocation2 + $0x18] sm:$0xf]
        %v2190 = vld [vmem:[#allocation2 + $0x1c] sm:$0xf]
        %v2191 = vld [vmem:[#allocation2 + $0x20] sm:$0xf]
        %v2192 = vld [vmem:[#allocation2 + $0x24] sm:$0xf]
        %v2193 = vld [vmem:[#allocation2 + $0x28] sm:$0x1]
        %s2194 = scalar_lea.vmem [#allocation4], 224
        %v2195 = vld [vmem:[%s2194] sm:$0xf]
        %v2196 = vld [vmem:[%s2194 + $0x4] sm:$0xf]
        %v2197 = vld [vmem:[%s2194 + $0x8] sm:$0xf]
        %v2198 = vld [vmem:[%s2194 + $0xc] sm:$0xf]
        %v2199 = vld [vmem:[%s2194 + $0x10] sm:$0xf]
        %v2200 = vld [vmem:[%s2194 + $0x14] sm:$0xf]
        %v2201 = vld [vmem:[%s2194 + $0x18] sm:$0xf]
        %v2202 = vld [vmem:[%s2194 + $0x1c] sm:$0xf]
        %v2212 = vunpack.c.l.b16 %v2185
        %v2213 = vunpack.c.l.b16 %v2186
        %v2214 = vunpack.c.l.b16 %v2187
        %v2215 = vunpack.c.l.b16 %v2188
        %v2216 = vunpack.c.l.b16 %v2189
        %v2217 = vunpack.c.l.b16 %v2190
        %v2218 = vunpack.c.l.b16 %v2191
        %v2219 = vunpack.c.l.b16 %v2192
        %v2220 = vunpack.c.l.b16 %v2193
        %v2221 = vpack.c.b16 %v2213, %v2212
        %v2222 = vpack.c.b16 %v2215, %v2214
        %v2223 = vpack.c.b16 %v2217, %v2216
        %v2224 = vpack.c.b16 %v2219, %v2218
        %v2225 = vpack.c.b16 %v2220, %v2220
        %v2227 = vshrl.u32 %v2221, 16
        %v2229 = vshll.u32 %v2221, 16
        %v2231 = vrot.slane %v2229, 1
        %v2232 = vor.u32 %v2227, %v2231
        %v2234 = vshll.u32 %v2222, 16
        %v2236 = vrot.slane %v2234, 1
        %v2237 = vsel %vm1058, %v2232, %v2236
        %v2238 = vshrl.u32 %v2222, 16
        %v2240 = vor.u32 %v2238, %v2236
        %v2242 = vshll.u32 %v2223, 16
        %v2244 = vrot.slane %v2242, 1
        %v2245 = vsel %vm1058, %v2240, %v2244
        %v2246 = vshrl.u32 %v2223, 16
        %v2248 = vor.u32 %v2246, %v2244
        %v2250 = vshll.u32 %v2224, 16
        %v2252 = vrot.slane %v2250, 1
        %v2253 = vsel %vm1058, %v2248, %v2252
        %v2254 = vshrl.u32 %v2224, 16
        %v2256 = vor.u32 %v2254, %v2252
        %v2258 = vshll.u32 %v2225, 16
        %v2260 = vrot.slane %v2258, 1
        %v2261 = vsel %vm1058, %v2256, %v2260
        %v2270 = vunpack.c.l.b16 %v2195
        %v2271 = vunpack.c.l.b16 %v2196
        %v2272 = vunpack.c.l.b16 %v2197
        %v2273 = vunpack.c.l.b16 %v2198
        %v2274 = vunpack.c.l.b16 %v2199
        %v2275 = vunpack.c.l.b16 %v2200
        %v2276 = vunpack.c.l.b16 %v2201
        %v2277 = vunpack.c.l.b16 %v2202
        %v2278 = vpack.c.b16 %v2271, %v2270
        %v2279 = vpack.c.b16 %v2273, %v2272
        %v2280 = vpack.c.b16 %v2275, %v2274
        %v2281 = vpack.c.b16 %v2277, %v2276
        %v2287 = vsel %vm552, %v2237, 0
        %v2290 = vsel %vm552, %v2245, 0
        %v2293 = vsel %vm552, %v2253, 0
        %v2296 = vsel %vm552, %v2261, 0
        %2298 = vmatprep.subr.bf16.mxu0 0
        %2299 = vmatpush1.bf16.msra.mxu0 %v2278
        %2300 = vmatprep.subr.bf16.mxu0 0
        %2301 = vmatpush1.bf16.msra.mxu0 %v2279
        %2302 = vmatprep.subr.bf16.mxu0 0
        %2303 = vmatpush1.bf16.msra.mxu0 %v2280
        %2304 = vmatprep.subr.bf16.mxu0 0
        %2305 = vmatpush1.bf16.msra.mxu0 %v2281
        %2306 = vmatprep.subr.bf16.mxu0 0
        %2307 = vmatpush1.bf16.msra.mxu0 0
        %2308 = vmatprep.subr.bf16.mxu0 0
        %2309 = vmatpush1.bf16.msra.mxu0 0
        %2310 = vmatprep.subr.bf16.mxu0 0
        %2311 = vmatpush1.bf16.msra.mxu0 0
        %2312 = vmatprep.subr.bf16.mxu0 0
        %2313 = vmatpush1.bf16.msra.mxu0 0
        %2314 = vmatprep.subr.bf16.mxu0 0
        %2315 = vmatpush1.bf16.msra.mxu0 0
        %2316 = vmatprep.subr.bf16.mxu0 0
        %2317 = vmatpush1.bf16.msra.mxu0 0
        %2318 = vmatprep.subr.bf16.mxu0 0
        %2319 = vmatpush1.bf16.msra.mxu0 0
        %2320 = vmatprep.subr.bf16.mxu0 0
        %2321 = vmatpush1.bf16.msra.mxu0 0
        %2322 = vmatprep.subr.bf16.mxu0 0
        %2323 = vmatpush1.bf16.msra.mxu0 0
        %2324 = vmatprep.subr.bf16.mxu0 0
        %2325 = vmatpush1.bf16.msra.mxu0 0
        %2326 = vmatprep.subr.bf16.mxu0 0
        %2327 = vmatpush1.bf16.msra.mxu0 0
        %2328 = vmatprep.subr.bf16.mxu0 0
        %2329 = vmatpush1.bf16.msra.mxu0 0
        %2330 = vmatprep.mubr.bf16.mxu0 0
        %2331 = vmatmul.mubr.bf16.gmra.mrb[0].mxu0 %v2287
        %v2332 = vpop.f32.mrb[0].mxu0
        %v2333 = vadd.f32 0.0, %v2332
        %v2334 = vpop.f32.mrb[0].mxu0
        %v2335 = vpop.f32.mrb[0].mxu0
        %v2336 = vadd.f32 0.0, %v2335
        %v2337 = vpop.f32.mrb[0].mxu0
        %2338 = vmatprep.mubr.bf16.mxu0 0
        %2339 = vmatmul.mubr.bf16.gmra.mrb[0].mxu0 %v2290
        %v2340 = vpop.f32.mrb[0].mxu0
        %v2341 = vadd.f32 0.0, %v2340
        %v2342 = vpop.f32.mrb[0].mxu0
        %v2343 = vpop.f32.mrb[0].mxu0
        %v2344 = vadd.f32 0.0, %v2343
        %v2345 = vpop.f32.mrb[0].mxu0
        %2346 = vmatprep.mubr.bf16.mxu0 0
        %2347 = vmatmul.mubr.bf16.gmra.mrb[0].mxu0 %v2293
        %v2348 = vpop.f32.mrb[0].mxu0
        %v2349 = vadd.f32 0.0, %v2348
        %v2350 = vpop.f32.mrb[0].mxu0
        %v2351 = vpop.f32.mrb[0].mxu0
        %v2352 = vadd.f32 0.0, %v2351
        %v2353 = vpop.f32.mrb[0].mxu0
        %2354 = vmatprep.mubr.bf16.mxu0 0
        %2355 = vmatmul.mubr.bf16.gmra.mrb[0].mxu0 %v2296
        %v2356 = vpop.f32.mrb[0].mxu0
        %v2357 = vadd.f32 0.0, %v2356
        %v2358 = vpop.f32.mrb[0].mxu0
        %v2359 = vpop.f32.mrb[0].mxu0
        %v2360 = vadd.f32 0.0, %v2359
        %v2361 = vpop.f32.mrb[0].mxu0
        %2362 = vdwg.mxu0
        %v2363 = vadd.f32 %v2177, %v2333
        %v2364 = vadd.f32 %v2178, %v2336
        %v2365 = vadd.f32 %v2179, %v2341
        %v2366 = vadd.f32 %v2180, %v2344
        %v2367 = vadd.f32 %v2181, %v2349
        %v2368 = vadd.f32 %v2182, %v2352
        %v2369 = vadd.f32 %v2183, %v2357
        %v2370 = vadd.f32 %v2184, %v2360
        %v2371 = vld [vmem:[#allocation2 + $0x8] sm:$0xe]
        %v2372 = vsel %vm1376, %v2371, 0
        %v2373 = vsel %vm1377, %v2186, 0
        %v2374 = vsel %vm1378, %v2187, 0
        %v2375 = vsel %vm1379, %v2188, 0
        %v2376 = vsel %vm1380, %v2189, 0
        %v2377 = vsel %vm1381, %v2190, 0
        %v2378 = vsel %vm1382, %v2191, 0
        %v2379 = vsel %vm1383, %v2192, 0
        %v2380 = vsel %vm1384, %v2193, 0
        %s2381 = scalar_lea.vmem [#allocation4], 256
        %v2382 = vld [vmem:[%s2381] sm:$0xf]
        %v2383 = vld [vmem:[%s2381 + $0x4] sm:$0xf]
        %v2384 = vld [vmem:[%s2381 + $0x8] sm:$0xf]
        %v2385 = vld [vmem:[%s2381 + $0xc] sm:$0xf]
        %v2386 = vld [vmem:[%s2381 + $0x10] sm:$0xf]
        %v2387 = vld [vmem:[%s2381 + $0x14] sm:$0xf]
        %v2388 = vld [vmem:[%s2381 + $0x18] sm:$0xf]
        %v2389 = vld [vmem:[%s2381 + $0x1c] sm:$0xf]
        %v2399 = vunpack.c.l.b16 %v2372
        %v2400 = vunpack.c.l.b16 %v2373
        %v2401 = vunpack.c.l.b16 %v2374
        %v2402 = vunpack.c.l.b16 %v2375
        %v2403 = vunpack.c.l.b16 %v2376
        %v2404 = vunpack.c.l.b16 %v2377
        %v2405 = vunpack.c.l.b16 %v2378
        %v2406 = vunpack.c.l.b16 %v2379
        %v2407 = vunpack.c.l.b16 %v2380
        %v2408 = vpack.c.b16 %v2400, %v2399
        %v2409 = vpack.c.b16 %v2402, %v2401
        %v2410 = vpack.c.b16 %v2404, %v2403
        %v2411 = vpack.c.b16 %v2406, %v2405
        %v2412 = vpack.c.b16 %v2407, %v2407
        %v2413 = vrot.slane %v2408, 1
        %v2414 = vrot.slane %v2409, 1
        %v2415 = vsel %vm1426, %v2413, %v2414
        %v2416 = vrot.slane %v2410, 1
        %v2417 = vsel %vm1426, %v2414, %v2416
        %v2418 = vrot.slane %v2411, 1
        %v2419 = vsel %vm1426, %v2416, %v2418
        %v2420 = vrot.slane %v2412, 1
        %v2421 = vsel %vm1426, %v2418, %v2420
        %v2430 = vunpack.c.l.b16 %v2382
        %v2431 = vunpack.c.l.b16 %v2383
        %v2432 = vunpack.c.l.b16 %v2384
        %v2433 = vunpack.c.l.b16 %v2385
        %v2434 = vunpack.c.l.b16 %v2386
        %v2435 = vunpack.c.l.b16 %v2387
        %v2436 = vunpack.c.l.b16 %v2388
        %v2437 = vunpack.c.l.b16 %v2389
        %v2438 = vpack.c.b16 %v2431, %v2430
        %v2439 = vpack.c.b16 %v2433, %v2432
        %v2440 = vpack.c.b16 %v2435, %v2434
        %v2441 = vpack.c.b16 %v2437, %v2436
        %v2447 = vsel %vm552, %v2415, 0
        %v2450 = vsel %vm552, %v2417, 0
        %v2453 = vsel %vm552, %v2419, 0
        %v2456 = vsel %vm552, %v2421, 0
        %2458 = vmatprep.subr.bf16.mxu0 0
        %2459 = vmatpush1.bf16.msra.mxu0 %v2438
        %2460 = vmatprep.subr.bf16.mxu0 0
        %2461 = vmatpush1.bf16.msra.mxu0 %v2439
        %2462 = vmatprep.subr.bf16.mxu0 0
        %2463 = vmatpush1.bf16.msra.mxu0 %v2440
        %2464 = vmatprep.subr.bf16.mxu0 0
        %2465 = vmatpush1.bf16.msra.mxu0 %v2441
        %2466 = vmatprep.subr.bf16.mxu0 0
        %2467 = vmatpush1.bf16.msra.mxu0 0
        %2468 = vmatprep.subr.bf16.mxu0 0
        %2469 = vmatpush1.bf16.msra.mxu0 0
        %2470 = vmatprep.subr.bf16.mxu0 0
        %2471 = vmatpush1.bf16.msra.mxu0 0
        %2472 = vmatprep.subr.bf16.mxu0 0
        %2473 = vmatpush1.bf16.msra.mxu0 0
        %2474 = vmatprep.subr.bf16.mxu0 0
        %2475 = vmatpush1.bf16.msra.mxu0 0
        %2476 = vmatprep.subr.bf16.mxu0 0
        %2477 = vmatpush1.bf16.msra.mxu0 0
        %2478 = vmatprep.subr.bf16.mxu0 0
        %2479 = vmatpush1.bf16.msra.mxu0 0
        %2480 = vmatprep.subr.bf16.mxu0 0
        %2481 = vmatpush1.bf16.msra.mxu0 0
        %2482 = vmatprep.subr.bf16.mxu0 0
        %2483 = vmatpush1.bf16.msra.mxu0 0
        %2484 = vmatprep.subr.bf16.mxu0 0
        %2485 = vmatpush1.bf16.msra.mxu0 0
        %2486 = vmatprep.subr.bf16.mxu0 0
        %2487 = vmatpush1.bf16.msra.mxu0 0
        %2488 = vmatprep.subr.bf16.mxu0 0
        %2489 = vmatpush1.bf16.msra.mxu0 0
        %2490 = vmatprep.mubr.bf16.mxu0 0
        %2491 = vmatmul.mubr.bf16.gmra.mrb[0].mxu0 %v2447
        %v2492 = vpop.f32.mrb[0].mxu0
        %v2493 = vadd.f32 0.0, %v2492
        %v2494 = vpop.f32.mrb[0].mxu0
        %v2495 = vpop.f32.mrb[0].mxu0
        %v2496 = vadd.f32 0.0, %v2495
        %v2497 = vpop.f32.mrb[0].mxu0
        %2498 = vmatprep.mubr.bf16.mxu0 0
        %2499 = vmatmul.mubr.bf16.gmra.mrb[0].mxu0 %v2450
        %v2500 = vpop.f32.mrb[0].mxu0
        %v2501 = vadd.f32 0.0, %v2500
        %v2502 = vpop.f32.mrb[0].mxu0
        %v2503 = vpop.f32.mrb[0].mxu0
        %v2504 = vadd.f32 0.0, %v2503
        %v2505 = vpop.f32.mrb[0].mxu0
        %2506 = vmatprep.mubr.bf16.mxu0 0
        %2507 = vmatmul.mubr.bf16.gmra.mrb[0].mxu0 %v2453
        %v2508 = vpop.f32.mrb[0].mxu0
        %v2509 = vadd.f32 0.0, %v2508
        %v2510 = vpop.f32.mrb[0].mxu0
        %v2511 = vpop.f32.mrb[0].mxu0
        %v2512 = vadd.f32 0.0, %v2511
        %v2513 = vpop.f32.mrb[0].mxu0
        %2514 = vmatprep.mubr.bf16.mxu0 0
        %2515 = vmatmul.mubr.bf16.gmra.mrb[0].mxu0 %v2456
        %v2516 = vpop.f32.mrb[0].mxu0
        %v2517 = vadd.f32 0.0, %v2516
        %v2518 = vpop.f32.mrb[0].mxu0
        %v2519 = vpop.f32.mrb[0].mxu0
        %v2520 = vadd.f32 0.0, %v2519
        %v2521 = vpop.f32.mrb[0].mxu0
        %2522 = vdwg.mxu0
        %v2523 = vadd.f32 %v2363, %v2493
        %v2524 = vadd.f32 %v2364, %v2496
        %v2525 = vadd.f32 %v2365, %v2501
        %v2526 = vadd.f32 %v2366, %v2504
        %v2527 = vadd.f32 %v2367, %v2509
        %v2528 = vadd.f32 %v2368, %v2512
        %v2529 = vadd.f32 %v2369, %v2517
        %v2530 = vadd.f32 %v2370, %v2520
        %v2531 = vld [vmem:[%s4] sm:$0x1]
        %v2533 = vlaneseq
        %v2534 = vshrl.u32 %v2533, 7
        %v2535 = vsub.s32 0, %v2534
        %v2536 = vrot.slane %v2531, %v2535
        %v2538 = vadd.f32 %v2523, %v2536
        %v2539 = vadd.f32 %v2524, %v2536
        %v2540 = vadd.f32 %v2525, %v2536
        %v2541 = vadd.f32 %v2526, %v2536
        %v2542 = vadd.f32 %v2527, %v2536
        %v2543 = vadd.f32 %v2528, %v2536
        %v2544 = vadd.f32 %v2529, %v2536
        %v2545 = vadd.f32 %v2530, %v2536
        %v2546 = vmax.f32 %v2538, 0.0
        %v2547 = vmax.f32 %v2539, 0.0
        %v2548 = vmax.f32 %v2540, 0.0
        %v2549 = vmax.f32 %v2541, 0.0
        %v2550 = vmax.f32 %v2542, 0.0
        %v2551 = vmax.f32 %v2543, 0.0
        %v2552 = vmax.f32 %v2544, 0.0
        %v2553 = vmax.f32 %v2545, 0.0
        %vm2554 = vcmask 388096
        %2555 = vst.msk [vmem:[#allocation3] sm:$0xf] %vm2554, 0
        %vm2556 = vcmask 385024
        %vm2557 = vmand %vm2556, %vm827
        %v2558 = vld [vmem:[#allocation3 + $0x4] sm:$0x1]
        %v2559 = vsel %vm2557, 0, %v2558
        %2560 = vst [vmem:[#allocation3 + $0x4] sm:$0x1] %v2559
        %vm2561 = vcmask 388096
        %vm2562 = vmand %vm2561, %vm833
        %v2563 = vld [vmem:[#allocation3 + $0x24] sm:$0xf]
        %v2564 = vsel %vm2562, 0, %v2563
        %2565 = vst [vmem:[#allocation3 + $0x24] sm:$0xf] %v2564
        %vm2566 = vcmask 385024
        %2567 = vst.msk [vmem:[#allocation3 + $0x28] sm:$0x1] %vm2566, 0
        %v2568 = vpack.c.bf16 %v2547, %v2546
        %v2569 = vpack.c.bf16 %v2549, %v2548
        %v2570 = vpack.c.bf16 %v2551, %v2550
        %v2571 = vpack.c.bf16 %v2553, %v2552
        %v2576 = vunpack.c.l.b16 %v2568
        %v2577 = vunpack.c.h.b16 %v2568
        %v2578 = vunpack.c.l.b16 %v2569
        %v2579 = vunpack.c.h.b16 %v2569
        %v2580 = vunpack.c.l.b16 %v2570
        %v2581 = vunpack.c.h.b16 %v2570
        %v2582 = vunpack.c.l.b16 %v2571
        %v2583 = vunpack.c.h.b16 %v2571
        %v2584 = vpack.c.b16 %v2576, %v2576
        %v2585 = vpack.c.b16 %v2577, %v2577
        %v2586 = vpack.c.b16 %v2578, %v2578
        %v2587 = vpack.c.b16 %v2579, %v2579
        %v2588 = vpack.c.b16 %v2580, %v2580
        %v2589 = vpack.c.b16 %v2581, %v2581
        %v2590 = vpack.c.b16 %v2582, %v2582
        %v2591 = vpack.c.b16 %v2583, %v2583
        %v2593 = vshrl.u32 %v2584, 16
        %v2595 = vrot.slane %v2593, 7
        %v2596 = vshll.u32 %v2584, 16
        %v2598 = vor.u32 %v2595, %v2596
        %v2599 = vrot.slane %v2595, 4
        %v2601 = vshrl.u32 %v2585, 16
        %v2603 = vrot.slane %v2601, 7
        %v2604 = vshll.u32 %v2585, 16
        %v2606 = vor.u32 %v2603, %v2604
        %v2607 = vsel %vm865, %v2599, %v2606
        %v2608 = vrot.slane %v2603, 4
        %v2610 = vshrl.u32 %v2586, 16
        %v2612 = vrot.slane %v2610, 7
        %v2613 = vshll.u32 %v2586, 16
        %v2615 = vor.u32 %v2612, %v2613
        %v2616 = vsel %vm865, %v2608, %v2615
        %v2617 = vrot.slane %v2612, 4
        %v2619 = vshrl.u32 %v2587, 16
        %v2621 = vrot.slane %v2619, 7
        %v2622 = vshll.u32 %v2587, 16
        %v2624 = vor.u32 %v2621, %v2622
        %v2625 = vsel %vm865, %v2617, %v2624
        %v2626 = vrot.slane %v2621, 4
        %v2628 = vshrl.u32 %v2588, 16
        %v2630 = vrot.slane %v2628, 7
        %v2631 = vshll.u32 %v2588, 16
        %v2633 = vor.u32 %v2630, %v2631
        %v2634 = vsel %vm865, %v2626, %v2633
        %v2635 = vrot.slane %v2630, 4
        %v2637 = vshrl.u32 %v2589, 16
        %v2639 = vrot.slane %v2637, 7
        %v2640 = vshll.u32 %v2589, 16
        %v2642 = vor.u32 %v2639, %v2640
        %v2643 = vsel %vm865, %v2635, %v2642
        %v2644 = vrot.slane %v2639, 4
        %v2646 = vshrl.u32 %v2590, 16
        %v2648 = vrot.slane %v2646, 7
        %v2649 = vshll.u32 %v2590, 16
        %v2651 = vor.u32 %v2648, %v2649
        %v2652 = vsel %vm865, %v2644, %v2651
        %v2653 = vrot.slane %v2648, 4
        %v2655 = vshrl.u32 %v2591, 16
        %v2657 = vrot.slane %v2655, 7
        %v2658 = vshll.u32 %v2591, 16
        %v2660 = vor.u32 %v2657, %v2658
        %v2661 = vsel %vm865, %v2653, %v2660
        %v2662 = vrot.slane %v2657, 4
        %2663 = vrot.lane.b32.xlu0 %v2598, 96
        %v2664 = vpop.permute.xlu0 %2663
        %2665 = vrot.lane.b32.xlu0 %v2607, 96
        %v2666 = vpop.permute.xlu0 %2665
        %2667 = vrot.lane.b32.xlu0 %v2616, 96
        %v2668 = vpop.permute.xlu0 %2667
        %2669 = vrot.lane.b32.xlu0 %v2625, 96
        %v2670 = vpop.permute.xlu0 %2669
        %2671 = vrot.lane.b32.xlu0 %v2634, 96
        %v2672 = vpop.permute.xlu0 %2671
        %2673 = vrot.lane.b32.xlu0 %v2643, 96
        %v2674 = vpop.permute.xlu0 %2673
        %2675 = vrot.lane.b32.xlu0 %v2652, 96
        %v2676 = vpop.permute.xlu0 %2675
        %2677 = vrot.lane.b32.xlu0 %v2661, 96
        %v2678 = vpop.permute.xlu0 %2677
        %2679 = vrot.lane.b32.xlu0 %v2662, 96
        %v2680 = vpop.permute.xlu0 %2679
        %v2690 = vld [vmem:[#allocation3 + $0x4] sm:$0xf]
        %v2691 = vsel %vm2562, %v2664, %v2690
        %2692 = vst [vmem:[#allocation3 + $0x4] sm:$0xf] %v2691
        %2693 = vst.msk [vmem:[#allocation3 + $0x8] sm:$0xf] %vm2554, %v2666
        %2694 = vst.msk [vmem:[#allocation3 + $0xc] sm:$0xf] %vm2554, %v2668
        %2695 = vst.msk [vmem:[#allocation3 + $0x10] sm:$0xf] %vm2554, %v2670
        %2696 = vst.msk [vmem:[#allocation3 + $0x14] sm:$0xf] %vm2554, %v2672
        %2697 = vst.msk [vmem:[#allocation3 + $0x18] sm:$0xf] %vm2554, %v2674
        %2698 = vst.msk [vmem:[#allocation3 + $0x1c] sm:$0xf] %vm2554, %v2676
        %2699 = vst.msk [vmem:[#allocation3 + $0x20] sm:$0xf] %vm2554, %v2678
        %v2700 = vld [vmem:[#allocation3 + $0x24] sm:$0x1]
        %v2701 = vsel %vm2557, %v2680, %v2700
        %2702 = vst [vmem:[#allocation3 + $0x24] sm:$0x1] %v2701
        %v2703 = vld [vmem:[#allocation3] sm:$0xf]
        %v2704 = vld [vmem:[#allocation3 + $0x4] sm:$0xf]
        %v2705 = vld [vmem:[#allocation3 + $0x8] sm:$0xf]
        %v2706 = vld [vmem:[#allocation3 + $0xc] sm:$0xf]
        %v2707 = vld [vmem:[#allocation3 + $0x10] sm:$0xf]
        %v2708 = vld [vmem:[#allocation3 + $0x14] sm:$0xf]
        %v2709 = vld [vmem:[#allocation3 + $0x18] sm:$0xf]
        %v2710 = vld [vmem:[#allocation3 + $0x1c] sm:$0xf]
        %v2711 = vsel %vm1001, %v2703, 0
        %v2712 = vsel %vm1002, %v2704, 0
        %v2713 = vsel %vm1003, %v2705, 0
        %v2714 = vsel %vm1004, %v2706, 0
        %v2715 = vsel %vm1005, %v2707, 0
        %v2716 = vsel %vm1006, %v2708, 0
        %v2717 = vsel %vm1007, %v2709, 0
        %v2718 = vsel %vm1008, %v2710, 0
        %v2719 = vld [vmem:[%s5] sm:$0xf]
        %v2720 = vld [vmem:[%s5 + $0x4] sm:$0xf]
        %v2721 = vld [vmem:[%s5 + $0x8] sm:$0xf]
        %v2722 = vld [vmem:[%s5 + $0xc] sm:$0xf]
        %v2723 = vld [vmem:[%s5 + $0x10] sm:$0xf]
        %v2724 = vld [vmem:[%s5 + $0x14] sm:$0xf]
        %v2725 = vld [vmem:[#allocation3 + $0x20] sm:$0x1]
        %s2726 = scalar_lea.vmem %s5, 24
        %v2727 = vld [vmem:[%s2726] sm:$0xf]
        %v2728 = vld [vmem:[%s2726 + $0x4] sm:$0xf]
        %v2729 = vld [vmem:[%s2726 + $0x8] sm:$0xf]
        %v2730 = vld [vmem:[%s2726 + $0xc] sm:$0xf]
        %v2731 = vld [vmem:[%s2726 + $0x10] sm:$0xf]
        %v2732 = vld [vmem:[%s2726 + $0x14] sm:$0xf]
        %v2742 = vunpack.c.l.b16 %v2703
        %v2743 = vunpack.c.l.b16 %v2704
        %v2744 = vunpack.c.l.b16 %v2705
        %v2745 = vunpack.c.l.b16 %v2706
        %v2746 = vunpack.c.l.b16 %v2707
        %v2747 = vunpack.c.l.b16 %v2708
        %v2748 = vunpack.c.l.b16 %v2709
        %v2749 = vunpack.c.l.b16 %v2710
        %v2750 = vunpack.c.l.b16 %v2725
        %v2751 = vpack.c.b16 %v2743, %v2742
        %v2752 = vpack.c.b16 %v2745, %v2744
        %v2753 = vpack.c.b16 %v2747, %v2746
        %v2754 = vpack.c.b16 %v2749, %v2748
        %v2755 = vpack.c.b16 %v2750, %v2750
        %v2757 = vshrl.u32 %v2751, 16
        %v2759 = vshll.u32 %v2751, 16
        %v2761 = vrot.slane %v2759, 1
        %v2762 = vor.u32 %v2757, %v2761
        %v2764 = vshll.u32 %v2752, 16
        %v2766 = vrot.slane %v2764, 1
        %v2767 = vsel %vm1058, %v2762, %v2766
        %v2768 = vshrl.u32 %v2752, 16
        %v2770 = vor.u32 %v2768, %v2766
        %v2772 = vshll.u32 %v2753, 16
        %v2774 = vrot.slane %v2772, 1
        %v2775 = vsel %vm1058, %v2770, %v2774
        %v2776 = vshrl.u32 %v2753, 16
        %v2778 = vor.u32 %v2776, %v2774
        %v2780 = vshll.u32 %v2754, 16
        %v2782 = vrot.slane %v2780, 1
        %v2783 = vsel %vm1058, %v2778, %v2782
        %v2784 = vshrl.u32 %v2754, 16
        %v2786 = vor.u32 %v2784, %v2782
        %v2788 = vshll.u32 %v2755, 16
        %v2790 = vrot.slane %v2788, 1
        %v2791 = vsel %vm1058, %v2786, %v2790
        %v2798 = vunpack.c.l.b16 %v2727
        %v2799 = vunpack.c.l.b16 %v2728
        %v2800 = vunpack.c.l.b16 %v2729
        %v2801 = vunpack.c.l.b16 %v2730
        %v2802 = vunpack.c.l.b16 %v2731
        %v2803 = vunpack.c.l.b16 %v2732
        %v2804 = vpack.c.b16 %v2799, %v2798
        %v2805 = vpack.c.b16 %v2801, %v2800
        %v2806 = vpack.c.b16 %v2803, %v2802
        %vm2810 = vcmask 392192
        %v2812 = vsel %vm2810, %v2767, 0
        %v2815 = vsel %vm2810, %v2775, 0
        %v2818 = vsel %vm2810, %v2783, 0
        %v2821 = vsel %vm2810, %v2791, 0
        %2823 = vmatprep.subr.bf16.mxu0 0
        %2824 = vmatpush1.bf16.msra.mxu0 %v2804
        %2825 = vmatprep.subr.bf16.mxu0 0
        %2826 = vmatpush1.bf16.msra.mxu0 %v2805
        %2827 = vmatprep.subr.bf16.mxu0 0
        %2828 = vmatpush1.bf16.msra.mxu0 %v2806
        %2829 = vmatprep.subr.bf16.mxu0 0
        %2830 = vmatpush1.bf16.msra.mxu0 0
        %2831 = vmatprep.subr.bf16.mxu0 0
        %2832 = vmatpush1.bf16.msra.mxu0 0
        %2833 = vmatprep.subr.bf16.mxu0 0
        %2834 = vmatpush1.bf16.msra.mxu0 0
        %2835 = vmatprep.subr.bf16.mxu0 0
        %2836 = vmatpush1.bf16.msra.mxu0 0
        %2837 = vmatprep.subr.bf16.mxu0 0
        %2838 = vmatpush1.bf16.msra.mxu0 0
        %2839 = vmatprep.subr.bf16.mxu0 0
        %2840 = vmatpush1.bf16.msra.mxu0 0
        %2841 = vmatprep.subr.bf16.mxu0 0
        %2842 = vmatpush1.bf16.msra.mxu0 0
        %2843 = vmatprep.subr.bf16.mxu0 0
        %2844 = vmatpush1.bf16.msra.mxu0 0
        %2845 = vmatprep.subr.bf16.mxu0 0
        %2846 = vmatpush1.bf16.msra.mxu0 0
        %2847 = vmatprep.subr.bf16.mxu0 0
        %2848 = vmatpush1.bf16.msra.mxu0 0
        %2849 = vmatprep.subr.bf16.mxu0 0
        %2850 = vmatpush1.bf16.msra.mxu0 0
        %2851 = vmatprep.subr.bf16.mxu0 0
        %2852 = vmatpush1.bf16.msra.mxu0 0
        %2853 = vmatprep.subr.bf16.mxu0 0
        %2854 = vmatpush1.bf16.msra.mxu0 0
        %2855 = vmatprep.mubr.bf16.mxu0 0
        %2856 = vmatmul.mubr.bf16.gmra.mrb[0].mxu0 %v2812
        %v2857 = vpop.f32.mrb[0].mxu0
        %v2858 = vadd.f32 0.0, %v2857
        %v2859 = vpop.f32.mrb[0].mxu0
        %v2860 = vpop.f32.mrb[0].mxu0
        %v2861 = vadd.f32 0.0, %v2860
        %v2862 = vpop.f32.mrb[0].mxu0
        %2863 = vmatprep.mubr.bf16.mxu0 0
        %2864 = vmatmul.mubr.bf16.gmra.mrb[0].mxu0 %v2815
        %v2865 = vpop.f32.mrb[0].mxu0
        %v2866 = vadd.f32 0.0, %v2865
        %v2867 = vpop.f32.mrb[0].mxu0
        %v2868 = vpop.f32.mrb[0].mxu0
        %v2869 = vadd.f32 0.0, %v2868
        %v2870 = vpop.f32.mrb[0].mxu0
        %2871 = vmatprep.mubr.bf16.mxu0 0
        %2872 = vmatmul.mubr.bf16.gmra.mrb[0].mxu0 %v2818
        %v2873 = vpop.f32.mrb[0].mxu0
        %v2874 = vadd.f32 0.0, %v2873
        %v2875 = vpop.f32.mrb[0].mxu0
        %v2876 = vpop.f32.mrb[0].mxu0
        %v2877 = vadd.f32 0.0, %v2876
        %v2878 = vpop.f32.mrb[0].mxu0
        %2879 = vmatprep.mubr.bf16.mxu0 0
        %2880 = vmatmul.mubr.bf16.gmra.mrb[0].mxu0 %v2821
        %v2881 = vpop.f32.mrb[0].mxu0
        %v2882 = vadd.f32 0.0, %v2881
        %v2883 = vpop.f32.mrb[0].mxu0
        %v2884 = vpop.f32.mrb[0].mxu0
        %v2885 = vadd.f32 0.0, %v2884
        %v2886 = vpop.f32.mrb[0].mxu0
        %2887 = vdwg.mxu0
        %v2896 = vunpack.c.l.b16 %v2711
        %v2897 = vunpack.c.l.b16 %v2712
        %v2898 = vunpack.c.l.b16 %v2713
        %v2899 = vunpack.c.l.b16 %v2714
        %v2900 = vunpack.c.l.b16 %v2715
        %v2901 = vunpack.c.l.b16 %v2716
        %v2902 = vunpack.c.l.b16 %v2717
        %v2903 = vunpack.c.l.b16 %v2718
        %v2904 = vpack.c.b16 %v2897, %v2896
        %v2905 = vpack.c.b16 %v2899, %v2898
        %v2906 = vpack.c.b16 %v2901, %v2900
        %v2907 = vpack.c.b16 %v2903, %v2902
        %v2914 = vunpack.c.l.b16 %v2719
        %v2915 = vunpack.c.l.b16 %v2720
        %v2916 = vunpack.c.l.b16 %v2721
        %v2917 = vunpack.c.l.b16 %v2722
        %v2918 = vunpack.c.l.b16 %v2723
        %v2919 = vunpack.c.l.b16 %v2724
        %v2920 = vpack.c.b16 %v2915, %v2914
        %v2921 = vpack.c.b16 %v2917, %v2916
        %v2922 = vpack.c.b16 %v2919, %v2918
        %v2927 = vsel %vm2810, %v2904, 0
        %v2930 = vsel %vm2810, %v2905, 0
        %v2933 = vsel %vm2810, %v2906, 0
        %v2936 = vsel %vm2810, %v2907, 0
        %2938 = vmatprep.subr.bf16.mxu0 0
        %2939 = vmatpush1.bf16.msra.mxu0 %v2920
        %2940 = vmatprep.subr.bf16.mxu0 0
        %2941 = vmatpush1.bf16.msra.mxu0 %v2921
        %2942 = vmatprep.subr.bf16.mxu0 0
        %2943 = vmatpush1.bf16.msra.mxu0 %v2922
        %2944 = vmatprep.subr.bf16.mxu0 0
        %2945 = vmatpush1.bf16.msra.mxu0 0
        %2946 = vmatprep.subr.bf16.mxu0 0
        %2947 = vmatpush1.bf16.msra.mxu0 0
        %2948 = vmatprep.subr.bf16.mxu0 0
        %2949 = vmatpush1.bf16.msra.mxu0 0
        %2950 = vmatprep.subr.bf16.mxu0 0
        %2951 = vmatpush1.bf16.msra.mxu0 0
        %2952 = vmatprep.subr.bf16.mxu0 0
        %2953 = vmatpush1.bf16.msra.mxu0 0
        %2954 = vmatprep.subr.bf16.mxu0 0
        %2955 = vmatpush1.bf16.msra.mxu0 0
        %2956 = vmatprep.subr.bf16.mxu0 0
        %2957 = vmatpush1.bf16.msra.mxu0 0
        %2958 = vmatprep.subr.bf16.mxu0 0
        %2959 = vmatpush1.bf16.msra.mxu0 0
        %2960 = vmatprep.subr.bf16.mxu0 0
        %2961 = vmatpush1.bf16.msra.mxu0 0
        %2962 = vmatprep.subr.bf16.mxu0 0
        %2963 = vmatpush1.bf16.msra.mxu0 0
        %2964 = vmatprep.subr.bf16.mxu0 0
        %2965 = vmatpush1.bf16.msra.mxu0 0
        %2966 = vmatprep.subr.bf16.mxu0 0
        %2967 = vmatpush1.bf16.msra.mxu0 0
        %2968 = vmatprep.subr.bf16.mxu0 0
        %2969 = vmatpush1.bf16.msra.mxu0 0
        %2970 = vmatprep.mubr.bf16.mxu0 0
        %2971 = vmatmul.mubr.bf16.gmra.mrb[0].mxu0 %v2927
        %v2972 = vpop.f32.mrb[0].mxu0
        %v2973 = vadd.f32 %v2858, %v2972
        %v2974 = vpop.f32.mrb[0].mxu0
        %v2975 = vpop.f32.mrb[0].mxu0
        %v2976 = vadd.f32 %v2861, %v2975
        %v2977 = vpop.f32.mrb[0].mxu0
        %2978 = vmatprep.mubr.bf16.mxu0 0
        %2979 = vmatmul.mubr.bf16.gmra.mrb[0].mxu0 %v2930
        %v2980 = vpop.f32.mrb[0].mxu0
        %v2981 = vadd.f32 %v2866, %v2980
        %v2982 = vpop.f32.mrb[0].mxu0
        %v2983 = vpop.f32.mrb[0].mxu0
        %v2984 = vadd.f32 %v2869, %v2983
        %v2985 = vpop.f32.mrb[0].mxu0
        %2986 = vmatprep.mubr.bf16.mxu0 0
        %2987 = vmatmul.mubr.bf16.gmra.mrb[0].mxu0 %v2933
        %v2988 = vpop.f32.mrb[0].mxu0
        %v2989 = vadd.f32 %v2874, %v2988
        %v2990 = vpop.f32.mrb[0].mxu0
        %v2991 = vpop.f32.mrb[0].mxu0
        %v2992 = vadd.f32 %v2877, %v2991
        %v2993 = vpop.f32.mrb[0].mxu0
        %2994 = vmatprep.mubr.bf16.mxu0 0
        %2995 = vmatmul.mubr.bf16.gmra.mrb[0].mxu0 %v2936
        %v2996 = vpop.f32.mrb[0].mxu0
        %v2997 = vadd.f32 %v2882, %v2996
        %v2998 = vpop.f32.mrb[0].mxu0
        %v2999 = vpop.f32.mrb[0].mxu0
        %v3000 = vadd.f32 %v2885, %v2999
        %v3001 = vpop.f32.mrb[0].mxu0
        %3002 = vdwg.mxu0
        %v3003 = vld [vmem:[#allocation3] sm:$0xe]
        %v3004 = vsel %vm1376, %v3003, 0
        %v3005 = vsel %vm1377, %v2704, 0
        %v3006 = vsel %vm1378, %v2705, 0
        %v3007 = vsel %vm1379, %v2706, 0
        %v3008 = vsel %vm1380, %v2707, 0
        %v3009 = vsel %vm1381, %v2708, 0
        %v3010 = vsel %vm1382, %v2709, 0
        %v3011 = vsel %vm1383, %v2710, 0
        %v3012 = vsel %vm1384, %v2725, 0
        %s3013 = scalar_lea.vmem %s5, 48
        %v3014 = vld [vmem:[%s3013] sm:$0xf]
        %v3015 = vld [vmem:[%s3013 + $0x4] sm:$0xf]
        %v3016 = vld [vmem:[%s3013 + $0x8] sm:$0xf]
        %v3017 = vld [vmem:[%s3013 + $0xc] sm:$0xf]
        %v3018 = vld [vmem:[%s3013 + $0x10] sm:$0xf]
        %v3019 = vld [vmem:[%s3013 + $0x14] sm:$0xf]
        %v3029 = vunpack.c.l.b16 %v3004
        %v3030 = vunpack.c.l.b16 %v3005
        %v3031 = vunpack.c.l.b16 %v3006
        %v3032 = vunpack.c.l.b16 %v3007
        %v3033 = vunpack.c.l.b16 %v3008
        %v3034 = vunpack.c.l.b16 %v3009
        %v3035 = vunpack.c.l.b16 %v3010
        %v3036 = vunpack.c.l.b16 %v3011
        %v3037 = vunpack.c.l.b16 %v3012
        %v3038 = vpack.c.b16 %v3030, %v3029
        %v3039 = vpack.c.b16 %v3032, %v3031
        %v3040 = vpack.c.b16 %v3034, %v3033
        %v3041 = vpack.c.b16 %v3036, %v3035
        %v3042 = vpack.c.b16 %v3037, %v3037
        %v3043 = vrot.slane %v3038, 1
        %v3044 = vrot.slane %v3039, 1
        %v3045 = vsel %vm1426, %v3043, %v3044
        %v3046 = vrot.slane %v3040, 1
        %v3047 = vsel %vm1426, %v3044, %v3046
        %v3048 = vrot.slane %v3041, 1
        %v3049 = vsel %vm1426, %v3046, %v3048
        %v3050 = vrot.slane %v3042, 1
        %v3051 = vsel %vm1426, %v3048, %v3050
        %v3058 = vunpack.c.l.b16 %v3014
        %v3059 = vunpack.c.l.b16 %v3015
        %v3060 = vunpack.c.l.b16 %v3016
        %v3061 = vunpack.c.l.b16 %v3017
        %v3062 = vunpack.c.l.b16 %v3018
        %v3063 = vunpack.c.l.b16 %v3019
        %v3064 = vpack.c.b16 %v3059, %v3058
        %v3065 = vpack.c.b16 %v3061, %v3060
        %v3066 = vpack.c.b16 %v3063, %v3062
        %v3071 = vsel %vm2810, %v3045, 0
        %v3074 = vsel %vm2810, %v3047, 0
        %v3077 = vsel %vm2810, %v3049, 0
        %v3080 = vsel %vm2810, %v3051, 0
        %3082 = vmatprep.subr.bf16.mxu0 0
        %3083 = vmatpush1.bf16.msra.mxu0 %v3064
        %3084 = vmatprep.subr.bf16.mxu0 0
        %3085 = vmatpush1.bf16.msra.mxu0 %v3065
        %3086 = vmatprep.subr.bf16.mxu0 0
        %3087 = vmatpush1.bf16.msra.mxu0 %v3066
        %3088 = vmatprep.subr.bf16.mxu0 0
        %3089 = vmatpush1.bf16.msra.mxu0 0
        %3090 = vmatprep.subr.bf16.mxu0 0
        %3091 = vmatpush1.bf16.msra.mxu0 0
        %3092 = vmatprep.subr.bf16.mxu0 0
        %3093 = vmatpush1.bf16.msra.mxu0 0
        %3094 = vmatprep.subr.bf16.mxu0 0
        %3095 = vmatpush1.bf16.msra.mxu0 0
        %3096 = vmatprep.subr.bf16.mxu0 0
        %3097 = vmatpush1.bf16.msra.mxu0 0
        %3098 = vmatprep.subr.bf16.mxu0 0
        %3099 = vmatpush1.bf16.msra.mxu0 0
        %3100 = vmatprep.subr.bf16.mxu0 0
        %3101 = vmatpush1.bf16.msra.mxu0 0
        %3102 = vmatprep.subr.bf16.mxu0 0
        %3103 = vmatpush1.bf16.msra.mxu0 0
        %3104 = vmatprep.subr.bf16.mxu0 0
        %3105 = vmatpush1.bf16.msra.mxu0 0
        %3106 = vmatprep.subr.bf16.mxu0 0
        %3107 = vmatpush1.bf16.msra.mxu0 0
        %3108 = vmatprep.subr.bf16.mxu0 0
        %3109 = vmatpush1.bf16.msra.mxu0 0
        %3110 = vmatprep.subr.bf16.mxu0 0
        %3111 = vmatpush1.bf16.msra.mxu0 0
        %3112 = vmatprep.subr.bf16.mxu0 0
        %3113 = vmatpush1.bf16.msra.mxu0 0
        %3114 = vmatprep.mubr.bf16.mxu0 0
        %3115 = vmatmul.mubr.bf16.gmra.mrb[0].mxu0 %v3071
        %v3116 = vpop.f32.mrb[0].mxu0
        %v3117 = vadd.f32 0.0, %v3116
        %v3118 = vpop.f32.mrb[0].mxu0
        %v3119 = vpop.f32.mrb[0].mxu0
        %v3120 = vadd.f32 0.0, %v3119
        %v3121 = vpop.f32.mrb[0].mxu0
        %3122 = vmatprep.mubr.bf16.mxu0 0
        %3123 = vmatmul.mubr.bf16.gmra.mrb[0].mxu0 %v3074
        %v3124 = vpop.f32.mrb[0].mxu0
        %v3125 = vadd.f32 0.0, %v3124
        %v3126 = vpop.f32.mrb[0].mxu0
        %v3127 = vpop.f32.mrb[0].mxu0
        %v3128 = vadd.f32 0.0, %v3127
        %v3129 = vpop.f32.mrb[0].mxu0
        %3130 = vmatprep.mubr.bf16.mxu0 0
        %3131 = vmatmul.mubr.bf16.gmra.mrb[0].mxu0 %v3077
        %v3132 = vpop.f32.mrb[0].mxu0
        %v3133 = vadd.f32 0.0, %v3132
        %v3134 = vpop.f32.mrb[0].mxu0
        %v3135 = vpop.f32.mrb[0].mxu0
        %v3136 = vadd.f32 0.0, %v3135
        %v3137 = vpop.f32.mrb[0].mxu0
        %3138 = vmatprep.mubr.bf16.mxu0 0
        %3139 = vmatmul.mubr.bf16.gmra.mrb[0].mxu0 %v3080
        %v3140 = vpop.f32.mrb[0].mxu0
        %v3141 = vadd.f32 0.0, %v3140
        %v3142 = vpop.f32.mrb[0].mxu0
        %v3143 = vpop.f32.mrb[0].mxu0
        %v3144 = vadd.f32 0.0, %v3143
        %v3145 = vpop.f32.mrb[0].mxu0
        %3146 = vdwg.mxu0
        %v3147 = vadd.f32 %v2973, %v3117
        %v3148 = vadd.f32 %v2976, %v3120
        %v3149 = vadd.f32 %v2981, %v3125
        %v3150 = vadd.f32 %v2984, %v3128
        %v3151 = vadd.f32 %v2989, %v3133
        %v3152 = vadd.f32 %v2992, %v3136
        %v3153 = vadd.f32 %v2997, %v3141
        %v3154 = vadd.f32 %v3000, %v3144
        %v3155 = vld [vmem:[#allocation3 + $0x20] sm:$0xf]
        %v3156 = vsel %vm1001, %v2704, 0
        %v3157 = vsel %vm1002, %v2705, 0
        %v3158 = vsel %vm1003, %v2706, 0
        %v3159 = vsel %vm1004, %v2707, 0
        %v3160 = vsel %vm1005, %v2708, 0
        %v3161 = vsel %vm1006, %v2709, 0
        %v3162 = vsel %vm1007, %v2710, 0
        %v3163 = vsel %vm1008, %v3155, 0
        %s3164 = scalar_lea.vmem %s5, 72
        %v3165 = vld [vmem:[%s3164] sm:$0xf]
        %v3166 = vld [vmem:[%s3164 + $0x4] sm:$0xf]
        %v3167 = vld [vmem:[%s3164 + $0x8] sm:$0xf]
        %v3168 = vld [vmem:[%s3164 + $0xc] sm:$0xf]
        %v3169 = vld [vmem:[%s3164 + $0x10] sm:$0xf]
        %v3170 = vld [vmem:[%s3164 + $0x14] sm:$0xf]
        %v3179 = vunpack.c.l.b16 %v3156
        %v3180 = vunpack.c.l.b16 %v3157
        %v3181 = vunpack.c.l.b16 %v3158
        %v3182 = vunpack.c.l.b16 %v3159
        %v3183 = vunpack.c.l.b16 %v3160
        %v3184 = vunpack.c.l.b16 %v3161
        %v3185 = vunpack.c.l.b16 %v3162
        %v3186 = vunpack.c.l.b16 %v3163
        %v3187 = vpack.c.b16 %v3180, %v3179
        %v3188 = vpack.c.b16 %v3182, %v3181
        %v3189 = vpack.c.b16 %v3184, %v3183
        %v3190 = vpack.c.b16 %v3186, %v3185
        %v3197 = vunpack.c.l.b16 %v3165
        %v3198 = vunpack.c.l.b16 %v3166
        %v3199 = vunpack.c.l.b16 %v3167
        %v3200 = vunpack.c.l.b16 %v3168
        %v3201 = vunpack.c.l.b16 %v3169
        %v3202 = vunpack.c.l.b16 %v3170
        %v3203 = vpack.c.b16 %v3198, %v3197
        %v3204 = vpack.c.b16 %v3200, %v3199
        %v3205 = vpack.c.b16 %v3202, %v3201
        %v3210 = vsel %vm2810, %v3187, 0
        %v3213 = vsel %vm2810, %v3188, 0
        %v3216 = vsel %vm2810, %v3189, 0
        %v3219 = vsel %vm2810, %v3190, 0
        %3221 = vmatprep.subr.bf16.mxu0 0
        %3222 = vmatpush1.bf16.msra.mxu0 %v3203
        %3223 = vmatprep.subr.bf16.mxu0 0
        %3224 = vmatpush1.bf16.msra.mxu0 %v3204
        %3225 = vmatprep.subr.bf16.mxu0 0
        %3226 = vmatpush1.bf16.msra.mxu0 %v3205
        %3227 = vmatprep.subr.bf16.mxu0 0
        %3228 = vmatpush1.bf16.msra.mxu0 0
        %3229 = vmatprep.subr.bf16.mxu0 0
        %3230 = vmatpush1.bf16.msra.mxu0 0
        %3231 = vmatprep.subr.bf16.mxu0 0
        %3232 = vmatpush1.bf16.msra.mxu0 0
        %3233 = vmatprep.subr.bf16.mxu0 0
        %3234 = vmatpush1.bf16.msra.mxu0 0
        %3235 = vmatprep.subr.bf16.mxu0 0
        %3236 = vmatpush1.bf16.msra.mxu0 0
        %3237 = vmatprep.subr.bf16.mxu0 0
        %3238 = vmatpush1.bf16.msra.mxu0 0
        %3239 = vmatprep.subr.bf16.mxu0 0
        %3240 = vmatpush1.bf16.msra.mxu0 0
        %3241 = vmatprep.subr.bf16.mxu0 0
        %3242 = vmatpush1.bf16.msra.mxu0 0
        %3243 = vmatprep.subr.bf16.mxu0 0
        %3244 = vmatpush1.bf16.msra.mxu0 0
        %3245 = vmatprep.subr.bf16.mxu0 0
        %3246 = vmatpush1.bf16.msra.mxu0 0
        %3247 = vmatprep.subr.bf16.mxu0 0
        %3248 = vmatpush1.bf16.msra.mxu0 0
        %3249 = vmatprep.subr.bf16.mxu0 0
        %3250 = vmatpush1.bf16.msra.mxu0 0
        %3251 = vmatprep.subr.bf16.mxu0 0
        %3252 = vmatpush1.bf16.msra.mxu0 0
        %3253 = vmatprep.mubr.bf16.mxu0 0
        %3254 = vmatmul.mubr.bf16.gmra.mrb[0].mxu0 %v3210
        %v3255 = vpop.f32.mrb[0].mxu0
        %v3256 = vadd.f32 0.0, %v3255
        %v3257 = vpop.f32.mrb[0].mxu0
        %v3258 = vpop.f32.mrb[0].mxu0
        %v3259 = vadd.f32 0.0, %v3258
        %v3260 = vpop.f32.mrb[0].mxu0
        %3261 = vmatprep.mubr.bf16.mxu0 0
        %3262 = vmatmul.mubr.bf16.gmra.mrb[0].mxu0 %v3213
        %v3263 = vpop.f32.mrb[0].mxu0
        %v3264 = vadd.f32 0.0, %v3263
        %v3265 = vpop.f32.mrb[0].mxu0
        %v3266 = vpop.f32.mrb[0].mxu0
        %v3267 = vadd.f32 0.0, %v3266
        %v3268 = vpop.f32.mrb[0].mxu0
        %3269 = vmatprep.mubr.bf16.mxu0 0
        %3270 = vmatmul.mubr.bf16.gmra.mrb[0].mxu0 %v3216
        %v3271 = vpop.f32.mrb[0].mxu0
        %v3272 = vadd.f32 0.0, %v3271
        %v3273 = vpop.f32.mrb[0].mxu0
        %v3274 = vpop.f32.mrb[0].mxu0
        %v3275 = vadd.f32 0.0, %v3274
        %v3276 = vpop.f32.mrb[0].mxu0
        %3277 = vmatprep.mubr.bf16.mxu0 0
        %3278 = vmatmul.mubr.bf16.gmra.mrb[0].mxu0 %v3219
        %v3279 = vpop.f32.mrb[0].mxu0
        %v3280 = vadd.f32 0.0, %v3279
        %v3281 = vpop.f32.mrb[0].mxu0
        %v3282 = vpop.f32.mrb[0].mxu0
        %v3283 = vadd.f32 0.0, %v3282
        %v3284 = vpop.f32.mrb[0].mxu0
        %3285 = vdwg.mxu0
        %v3286 = vadd.f32 %v3147, %v3256
        %v3287 = vadd.f32 %v3148, %v3259
        %v3288 = vadd.f32 %v3149, %v3264
        %v3289 = vadd.f32 %v3150, %v3267
        %v3290 = vadd.f32 %v3151, %v3272
        %v3291 = vadd.f32 %v3152, %v3275
        %v3292 = vadd.f32 %v3153, %v3280
        %v3293 = vadd.f32 %v3154, %v3283
        %v3294 = vld [vmem:[#allocation3 + $0x4] sm:$0xf]
        %v3295 = vld [vmem:[#allocation3 + $0x8] sm:$0xf]
        %v3296 = vld [vmem:[#allocation3 + $0xc] sm:$0xf]
        %v3297 = vld [vmem:[#allocation3 + $0x10] sm:$0xf]
        %v3298 = vld [vmem:[#allocation3 + $0x14] sm:$0xf]
        %v3299 = vld [vmem:[#allocation3 + $0x18] sm:$0xf]
        %v3300 = vld [vmem:[#allocation3 + $0x1c] sm:$0xf]
        %v3301 = vld [vmem:[#allocation3 + $0x20] sm:$0xf]
        %v3302 = vld [vmem:[#allocation3 + $0x24] sm:$0x1]
        %s3303 = scalar_lea.vmem %s5, 96
        %v3304 = vld [vmem:[%s3303] sm:$0xf]
        %v3305 = vld [vmem:[%s3303 + $0x4] sm:$0xf]
        %v3306 = vld [vmem:[%s3303 + $0x8] sm:$0xf]
        %v3307 = vld [vmem:[%s3303 + $0xc] sm:$0xf]
        %v3308 = vld [vmem:[%s3303 + $0x10] sm:$0xf]
        %v3309 = vld [vmem:[%s3303 + $0x14] sm:$0xf]
        %v3319 = vunpack.c.l.b16 %v3294
        %v3320 = vunpack.c.l.b16 %v3295
        %v3321 = vunpack.c.l.b16 %v3296
        %v3322 = vunpack.c.l.b16 %v3297
        %v3323 = vunpack.c.l.b16 %v3298
        %v3324 = vunpack.c.l.b16 %v3299
        %v3325 = vunpack.c.l.b16 %v3300
        %v3326 = vunpack.c.l.b16 %v3301
        %v3327 = vunpack.c.l.b16 %v3302
        %v3328 = vpack.c.b16 %v3320, %v3319
        %v3329 = vpack.c.b16 %v3322, %v3321
        %v3330 = vpack.c.b16 %v3324, %v3323
        %v3331 = vpack.c.b16 %v3326, %v3325
        %v3332 = vpack.c.b16 %v3327, %v3327
        %v3334 = vshrl.u32 %v3328, 16
        %v3336 = vshll.u32 %v3328, 16
        %v3338 = vrot.slane %v3336, 1
        %v3339 = vor.u32 %v3334, %v3338
        %v3341 = vshll.u32 %v3329, 16
        %v3343 = vrot.slane %v3341, 1
        %v3344 = vsel %vm1058, %v3339, %v3343
        %v3345 = vshrl.u32 %v3329, 16
        %v3347 = vor.u32 %v3345, %v3343
        %v3349 = vshll.u32 %v3330, 16
        %v3351 = vrot.slane %v3349, 1
        %v3352 = vsel %vm1058, %v3347, %v3351
        %v3353 = vshrl.u32 %v3330, 16
        %v3355 = vor.u32 %v3353, %v3351
        %v3357 = vshll.u32 %v3331, 16
        %v3359 = vrot.slane %v3357, 1
        %v3360 = vsel %vm1058, %v3355, %v3359
        %v3361 = vshrl.u32 %v3331, 16
        %v3363 = vor.u32 %v3361, %v3359
        %v3365 = vshll.u32 %v3332, 16
        %v3367 = vrot.slane %v3365, 1
        %v3368 = vsel %vm1058, %v3363, %v3367
        %v3375 = vunpack.c.l.b16 %v3304
        %v3376 = vunpack.c.l.b16 %v3305
        %v3377 = vunpack.c.l.b16 %v3306
        %v3378 = vunpack.c.l.b16 %v3307
        %v3379 = vunpack.c.l.b16 %v3308
        %v3380 = vunpack.c.l.b16 %v3309
        %v3381 = vpack.c.b16 %v3376, %v3375
        %v3382 = vpack.c.b16 %v3378, %v3377
        %v3383 = vpack.c.b16 %v3380, %v3379
        %v3388 = vsel %vm2810, %v3344, 0
        %v3391 = vsel %vm2810, %v3352, 0
        %v3394 = vsel %vm2810, %v3360, 0
        %v3397 = vsel %vm2810, %v3368, 0
        %3399 = vmatprep.subr.bf16.mxu0 0
        %3400 = vmatpush1.bf16.msra.mxu0 %v3381
        %3401 = vmatprep.subr.bf16.mxu0 0
        %3402 = vmatpush1.bf16.msra.mxu0 %v3382
        %3403 = vmatprep.subr.bf16.mxu0 0
        %3404 = vmatpush1.bf16.msra.mxu0 %v3383
        %3405 = vmatprep.subr.bf16.mxu0 0
        %3406 = vmatpush1.bf16.msra.mxu0 0
        %3407 = vmatprep.subr.bf16.mxu0 0
        %3408 = vmatpush1.bf16.msra.mxu0 0
        %3409 = vmatprep.subr.bf16.mxu0 0
        %3410 = vmatpush1.bf16.msra.mxu0 0
        %3411 = vmatprep.subr.bf16.mxu0 0
        %3412 = vmatpush1.bf16.msra.mxu0 0
        %3413 = vmatprep.subr.bf16.mxu0 0
        %3414 = vmatpush1.bf16.msra.mxu0 0
        %3415 = vmatprep.subr.bf16.mxu0 0
        %3416 = vmatpush1.bf16.msra.mxu0 0
        %3417 = vmatprep.subr.bf16.mxu0 0
        %3418 = vmatpush1.bf16.msra.mxu0 0
        %3419 = vmatprep.subr.bf16.mxu0 0
        %3420 = vmatpush1.bf16.msra.mxu0 0
        %3421 = vmatprep.subr.bf16.mxu0 0
        %3422 = vmatpush1.bf16.msra.mxu0 0
        %3423 = vmatprep.subr.bf16.mxu0 0
        %3424 = vmatpush1.bf16.msra.mxu0 0
        %3425 = vmatprep.subr.bf16.mxu0 0
        %3426 = vmatpush1.bf16.msra.mxu0 0
        %3427 = vmatprep.subr.bf16.mxu0 0
        %3428 = vmatpush1.bf16.msra.mxu0 0
        %3429 = vmatprep.subr.bf16.mxu0 0
        %3430 = vmatpush1.bf16.msra.mxu0 0
        %3431 = vmatprep.mubr.bf16.mxu0 0
        %3432 = vmatmul.mubr.bf16.gmra.mrb[0].mxu0 %v3388
        %v3433 = vpop.f32.mrb[0].mxu0
        %v3434 = vadd.f32 0.0, %v3433
        %v3435 = vpop.f32.mrb[0].mxu0
        %v3436 = vpop.f32.mrb[0].mxu0
        %v3437 = vadd.f32 0.0, %v3436
        %v3438 = vpop.f32.mrb[0].mxu0
        %3439 = vmatprep.mubr.bf16.mxu0 0
        %3440 = vmatmul.mubr.bf16.gmra.mrb[0].mxu0 %v3391
        %v3441 = vpop.f32.mrb[0].mxu0
        %v3442 = vadd.f32 0.0, %v3441
        %v3443 = vpop.f32.mrb[0].mxu0
        %v3444 = vpop.f32.mrb[0].mxu0
        %v3445 = vadd.f32 0.0, %v3444
        %v3446 = vpop.f32.mrb[0].mxu0
        %3447 = vmatprep.mubr.bf16.mxu0 0
        %3448 = vmatmul.mubr.bf16.gmra.mrb[0].mxu0 %v3394
        %v3449 = vpop.f32.mrb[0].mxu0
        %v3450 = vadd.f32 0.0, %v3449
        %v3451 = vpop.f32.mrb[0].mxu0
        %v3452 = vpop.f32.mrb[0].mxu0
        %v3453 = vadd.f32 0.0, %v3452
        %v3454 = vpop.f32.mrb[0].mxu0
        %3455 = vmatprep.mubr.bf16.mxu0 0
        %3456 = vmatmul.mubr.bf16.gmra.mrb[0].mxu0 %v3397
        %v3457 = vpop.f32.mrb[0].mxu0
        %v3458 = vadd.f32 0.0, %v3457
        %v3459 = vpop.f32.mrb[0].mxu0
        %v3460 = vpop.f32.mrb[0].mxu0
        %v3461 = vadd.f32 0.0, %v3460
        %v3462 = vpop.f32.mrb[0].mxu0
        %3463 = vdwg.mxu0
        %v3464 = vadd.f32 %v3286, %v3434
        %v3465 = vadd.f32 %v3287, %v3437
        %v3466 = vadd.f32 %v3288, %v3442
        %v3467 = vadd.f32 %v3289, %v3445
        %v3468 = vadd.f32 %v3290, %v3450
        %v3469 = vadd.f32 %v3291, %v3453
        %v3470 = vadd.f32 %v3292, %v3458
        %v3471 = vadd.f32 %v3293, %v3461
        %v3472 = vld [vmem:[#allocation3 + $0x4] sm:$0xe]
        %v3473 = vsel %vm1376, %v3472, 0
        %v3474 = vsel %vm1377, %v3295, 0
        %v3475 = vsel %vm1378, %v3296, 0
        %v3476 = vsel %vm1379, %v3297, 0
        %v3477 = vsel %vm1380, %v3298, 0
        %v3478 = vsel %vm1381, %v3299, 0
        %v3479 = vsel %vm1382, %v3300, 0
        %v3480 = vsel %vm1383, %v3301, 0
        %v3481 = vsel %vm1384, %v3302, 0
        %s3482 = scalar_lea.vmem %s5, 120
        %v3483 = vld [vmem:[%s3482] sm:$0xf]
        %v3484 = vld [vmem:[%s3482 + $0x4] sm:$0xf]
        %v3485 = vld [vmem:[%s3482 + $0x8] sm:$0xf]
        %v3486 = vld [vmem:[%s3482 + $0xc] sm:$0xf]
        %v3487 = vld [vmem:[%s3482 + $0x10] sm:$0xf]
        %v3488 = vld [vmem:[%s3482 + $0x14] sm:$0xf]
        %v3498 = vunpack.c.l.b16 %v3473
        %v3499 = vunpack.c.l.b16 %v3474
        %v3500 = vunpack.c.l.b16 %v3475
        %v3501 = vunpack.c.l.b16 %v3476
        %v3502 = vunpack.c.l.b16 %v3477
        %v3503 = vunpack.c.l.b16 %v3478
        %v3504 = vunpack.c.l.b16 %v3479
        %v3505 = vunpack.c.l.b16 %v3480
        %v3506 = vunpack.c.l.b16 %v3481
        %v3507 = vpack.c.b16 %v3499, %v3498
        %v3508 = vpack.c.b16 %v3501, %v3500
        %v3509 = vpack.c.b16 %v3503, %v3502
        %v3510 = vpack.c.b16 %v3505, %v3504
        %v3511 = vpack.c.b16 %v3506, %v3506
        %v3512 = vrot.slane %v3507, 1
        %v3513 = vrot.slane %v3508, 1
        %v3514 = vsel %vm1426, %v3512, %v3513
        %v3515 = vrot.slane %v3509, 1
        %v3516 = vsel %vm1426, %v3513, %v3515
        %v3517 = vrot.slane %v3510, 1
        %v3518 = vsel %vm1426, %v3515, %v3517
        %v3519 = vrot.slane %v3511, 1
        %v3520 = vsel %vm1426, %v3517, %v3519
        %v3527 = vunpack.c.l.b16 %v3483
        %v3528 = vunpack.c.l.b16 %v3484
        %v3529 = vunpack.c.l.b16 %v3485
        %v3530 = vunpack.c.l.b16 %v3486
        %v3531 = vunpack.c.l.b16 %v3487
        %v3532 = vunpack.c.l.b16 %v3488
        %v3533 = vpack.c.b16 %v3528, %v3527
        %v3534 = vpack.c.b16 %v3530, %v3529
        %v3535 = vpack.c.b16 %v3532, %v3531
        %v3540 = vsel %vm2810, %v3514, 0
        %v3543 = vsel %vm2810, %v3516, 0
        %v3546 = vsel %vm2810, %v3518, 0
        %v3549 = vsel %vm2810, %v3520, 0
        %3551 = vmatprep.subr.bf16.mxu0 0
        %3552 = vmatpush1.bf16.msra.mxu0 %v3533
        %3553 = vmatprep.subr.bf16.mxu0 0
        %3554 = vmatpush1.bf16.msra.mxu0 %v3534
        %3555 = vmatprep.subr.bf16.mxu0 0
        %3556 = vmatpush1.bf16.msra.mxu0 %v3535
        %3557 = vmatprep.subr.bf16.mxu0 0
        %3558 = vmatpush1.bf16.msra.mxu0 0
        %3559 = vmatprep.subr.bf16.mxu0 0
        %3560 = vmatpush1.bf16.msra.mxu0 0
        %3561 = vmatprep.subr.bf16.mxu0 0
        %3562 = vmatpush1.bf16.msra.mxu0 0
        %3563 = vmatprep.subr.bf16.mxu0 0
        %3564 = vmatpush1.bf16.msra.mxu0 0
        %3565 = vmatprep.subr.bf16.mxu0 0
        %3566 = vmatpush1.bf16.msra.mxu0 0
        %3567 = vmatprep.subr.bf16.mxu0 0
        %3568 = vmatpush1.bf16.msra.mxu0 0
        %3569 = vmatprep.subr.bf16.mxu0 0
        %3570 = vmatpush1.bf16.msra.mxu0 0
        %3571 = vmatprep.subr.bf16.mxu0 0
        %3572 = vmatpush1.bf16.msra.mxu0 0
        %3573 = vmatprep.subr.bf16.mxu0 0
        %3574 = vmatpush1.bf16.msra.mxu0 0
        %3575 = vmatprep.subr.bf16.mxu0 0
        %3576 = vmatpush1.bf16.msra.mxu0 0
        %3577 = vmatprep.subr.bf16.mxu0 0
        %3578 = vmatpush1.bf16.msra.mxu0 0
        %3579 = vmatprep.subr.bf16.mxu0 0
        %3580 = vmatpush1.bf16.msra.mxu0 0
        %3581 = vmatprep.subr.bf16.mxu0 0
        %3582 = vmatpush1.bf16.msra.mxu0 0
        %3583 = vmatprep.mubr.bf16.mxu0 0
        %3584 = vmatmul.mubr.bf16.gmra.mrb[0].mxu0 %v3540
        %v3585 = vpop.f32.mrb[0].mxu0
        %v3586 = vadd.f32 0.0, %v3585
        %v3587 = vpop.f32.mrb[0].mxu0
        %v3588 = vpop.f32.mrb[0].mxu0
        %v3589 = vadd.f32 0.0, %v3588
        %v3590 = vpop.f32.mrb[0].mxu0
        %3591 = vmatprep.mubr.bf16.mxu0 0
        %3592 = vmatmul.mubr.bf16.gmra.mrb[0].mxu0 %v3543
        %v3593 = vpop.f32.mrb[0].mxu0
        %v3594 = vadd.f32 0.0, %v3593
        %v3595 = vpop.f32.mrb[0].mxu0
        %v3596 = vpop.f32.mrb[0].mxu0
        %v3597 = vadd.f32 0.0, %v3596
        %v3598 = vpop.f32.mrb[0].mxu0
        %3599 = vmatprep.mubr.bf16.mxu0 0
        %3600 = vmatmul.mubr.bf16.gmra.mrb[0].mxu0 %v3546
        %v3601 = vpop.f32.mrb[0].mxu0
        %v3602 = vadd.f32 0.0, %v3601
        %v3603 = vpop.f32.mrb[0].mxu0
        %v3604 = vpop.f32.mrb[0].mxu0
        %v3605 = vadd.f32 0.0, %v3604
        %v3606 = vpop.f32.mrb[0].mxu0
        %3607 = vmatprep.mubr.bf16.mxu0 0
        %3608 = vmatmul.mubr.bf16.gmra.mrb[0].mxu0 %v3549
        %v3609 = vpop.f32.mrb[0].mxu0
        %v3610 = vadd.f32 0.0, %v3609
        %v3611 = vpop.f32.mrb[0].mxu0
        %v3612 = vpop.f32.mrb[0].mxu0
        %v3613 = vadd.f32 0.0, %v3612
        %v3614 = vpop.f32.mrb[0].mxu0
        %3615 = vdwg.mxu0
        %v3616 = vadd.f32 %v3464, %v3586
        %v3617 = vadd.f32 %v3465, %v3589
        %v3618 = vadd.f32 %v3466, %v3594
        %v3619 = vadd.f32 %v3467, %v3597
        %v3620 = vadd.f32 %v3468, %v3602
        %v3621 = vadd.f32 %v3469, %v3605
        %v3622 = vadd.f32 %v3470, %v3610
        %v3623 = vadd.f32 %v3471, %v3613
        %v3624 = vld [vmem:[#allocation3 + $0x24] sm:$0xf]
        %v3625 = vsel %vm1001, %v3295, 0
        %v3626 = vsel %vm1002, %v3296, 0
        %v3627 = vsel %vm1003, %v3297, 0
        %v3628 = vsel %vm1004, %v3298, 0
        %v3629 = vsel %vm1005, %v3299, 0
        %v3630 = vsel %vm1006, %v3300, 0
        %v3631 = vsel %vm1007, %v3301, 0
        %v3632 = vsel %vm1008, %v3624, 0
        %s3633 = scalar_lea.vmem %s5, 144
        %v3634 = vld [vmem:[%s3633] sm:$0xf]
        %v3635 = vld [vmem:[%s3633 + $0x4] sm:$0xf]
        %v3636 = vld [vmem:[%s3633 + $0x8] sm:$0xf]
        %v3637 = vld [vmem:[%s3633 + $0xc] sm:$0xf]
        %v3638 = vld [vmem:[%s3633 + $0x10] sm:$0xf]
        %v3639 = vld [vmem:[%s3633 + $0x14] sm:$0xf]
        %v3648 = vunpack.c.l.b16 %v3625
        %v3649 = vunpack.c.l.b16 %v3626
        %v3650 = vunpack.c.l.b16 %v3627
        %v3651 = vunpack.c.l.b16 %v3628
        %v3652 = vunpack.c.l.b16 %v3629
        %v3653 = vunpack.c.l.b16 %v3630
        %v3654 = vunpack.c.l.b16 %v3631
        %v3655 = vunpack.c.l.b16 %v3632
        %v3656 = vpack.c.b16 %v3649, %v3648
        %v3657 = vpack.c.b16 %v3651, %v3650
        %v3658 = vpack.c.b16 %v3653, %v3652
        %v3659 = vpack.c.b16 %v3655, %v3654
        %v3666 = vunpack.c.l.b16 %v3634
        %v3667 = vunpack.c.l.b16 %v3635
        %v3668 = vunpack.c.l.b16 %v3636
        %v3669 = vunpack.c.l.b16 %v3637
        %v3670 = vunpack.c.l.b16 %v3638
        %v3671 = vunpack.c.l.b16 %v3639
        %v3672 = vpack.c.b16 %v3667, %v3666
        %v3673 = vpack.c.b16 %v3669, %v3668
        %v3674 = vpack.c.b16 %v3671, %v3670
        %v3679 = vsel %vm2810, %v3656, 0
        %v3682 = vsel %vm2810, %v3657, 0
        %v3685 = vsel %vm2810, %v3658, 0
        %v3688 = vsel %vm2810, %v3659, 0
        %3690 = vmatprep.subr.bf16.mxu0 0
        %3691 = vmatpush1.bf16.msra.mxu0 %v3672
        %3692 = vmatprep.subr.bf16.mxu0 0
        %3693 = vmatpush1.bf16.msra.mxu0 %v3673
        %3694 = vmatprep.subr.bf16.mxu0 0
        %3695 = vmatpush1.bf16.msra.mxu0 %v3674
        %3696 = vmatprep.subr.bf16.mxu0 0
        %3697 = vmatpush1.bf16.msra.mxu0 0
        %3698 = vmatprep.subr.bf16.mxu0 0
        %3699 = vmatpush1.bf16.msra.mxu0 0
        %3700 = vmatprep.subr.bf16.mxu0 0
        %3701 = vmatpush1.bf16.msra.mxu0 0
        %3702 = vmatprep.subr.bf16.mxu0 0
        %3703 = vmatpush1.bf16.msra.mxu0 0
        %3704 = vmatprep.subr.bf16.mxu0 0
        %3705 = vmatpush1.bf16.msra.mxu0 0
        %3706 = vmatprep.subr.bf16.mxu0 0
        %3707 = vmatpush1.bf16.msra.mxu0 0
        %3708 = vmatprep.subr.bf16.mxu0 0
        %3709 = vmatpush1.bf16.msra.mxu0 0
        %3710 = vmatprep.subr.bf16.mxu0 0
        %3711 = vmatpush1.bf16.msra.mxu0 0
        %3712 = vmatprep.subr.bf16.mxu0 0
        %3713 = vmatpush1.bf16.msra.mxu0 0
        %3714 = vmatprep.subr.bf16.mxu0 0
        %3715 = vmatpush1.bf16.msra.mxu0 0
        %3716 = vmatprep.subr.bf16.mxu0 0
        %3717 = vmatpush1.bf16.msra.mxu0 0
        %3718 = vmatprep.subr.bf16.mxu0 0
        %3719 = vmatpush1.bf16.msra.mxu0 0
        %3720 = vmatprep.subr.bf16.mxu0 0
        %3721 = vmatpush1.bf16.msra.mxu0 0
        %3722 = vmatprep.mubr.bf16.mxu0 0
        %3723 = vmatmul.mubr.bf16.gmra.mrb[0].mxu0 %v3679
        %v3724 = vpop.f32.mrb[0].mxu0
        %v3725 = vadd.f32 0.0, %v3724
        %v3726 = vpop.f32.mrb[0].mxu0
        %v3727 = vpop.f32.mrb[0].mxu0
        %v3728 = vadd.f32 0.0, %v3727
        %v3729 = vpop.f32.mrb[0].mxu0
        %3730 = vmatprep.mubr.bf16.mxu0 0
        %3731 = vmatmul.mubr.bf16.gmra.mrb[0].mxu0 %v3682
        %v3732 = vpop.f32.mrb[0].mxu0
        %v3733 = vadd.f32 0.0, %v3732
        %v3734 = vpop.f32.mrb[0].mxu0
        %v3735 = vpop.f32.mrb[0].mxu0
        %v3736 = vadd.f32 0.0, %v3735
        %v3737 = vpop.f32.mrb[0].mxu0
        %3738 = vmatprep.mubr.bf16.mxu0 0
        %3739 = vmatmul.mubr.bf16.gmra.mrb[0].mxu0 %v3685
        %v3740 = vpop.f32.mrb[0].mxu0
        %v3741 = vadd.f32 0.0, %v3740
        %v3742 = vpop.f32.mrb[0].mxu0
        %v3743 = vpop.f32.mrb[0].mxu0
        %v3744 = vadd.f32 0.0, %v3743
        %v3745 = vpop.f32.mrb[0].mxu0
        %3746 = vmatprep.mubr.bf16.mxu0 0
        %3747 = vmatmul.mubr.bf16.gmra.mrb[0].mxu0 %v3688
        %v3748 = vpop.f32.mrb[0].mxu0
        %v3749 = vadd.f32 0.0, %v3748
        %v3750 = vpop.f32.mrb[0].mxu0
        %v3751 = vpop.f32.mrb[0].mxu0
        %v3752 = vadd.f32 0.0, %v3751
        %v3753 = vpop.f32.mrb[0].mxu0
        %3754 = vdwg.mxu0
        %v3755 = vadd.f32 %v3616, %v3725
        %v3756 = vadd.f32 %v3617, %v3728
        %v3757 = vadd.f32 %v3618, %v3733
        %v3758 = vadd.f32 %v3619, %v3736
        %v3759 = vadd.f32 %v3620, %v3741
        %v3760 = vadd.f32 %v3621, %v3744
        %v3761 = vadd.f32 %v3622, %v3749
        %v3762 = vadd.f32 %v3623, %v3752
        %v3763 = vld [vmem:[#allocation3 + $0x8] sm:$0xf]
        %v3764 = vld [vmem:[#allocation3 + $0xc] sm:$0xf]
        %v3765 = vld [vmem:[#allocation3 + $0x10] sm:$0xf]
        %v3766 = vld [vmem:[#allocation3 + $0x14] sm:$0xf]
        %v3767 = vld [vmem:[#allocation3 + $0x18] sm:$0xf]
        %v3768 = vld [vmem:[#allocation3 + $0x1c] sm:$0xf]
        %v3769 = vld [vmem:[#allocation3 + $0x20] sm:$0xf]
        %v3770 = vld [vmem:[#allocation3 + $0x24] sm:$0xf]
        %v3771 = vld [vmem:[#allocation3 + $0x28] sm:$0x1]
        %s3772 = scalar_lea.vmem %s5, 168
        %v3773 = vld [vmem:[%s3772] sm:$0xf]
        %v3774 = vld [vmem:[%s3772 + $0x4] sm:$0xf]
        %v3775 = vld [vmem:[%s3772 + $0x8] sm:$0xf]
        %v3776 = vld [vmem:[%s3772 + $0xc] sm:$0xf]
        %v3777 = vld [vmem:[%s3772 + $0x10] sm:$0xf]
        %v3778 = vld [vmem:[%s3772 + $0x14] sm:$0xf]
        %v3788 = vunpack.c.l.b16 %v3763
        %v3789 = vunpack.c.l.b16 %v3764
        %v3790 = vunpack.c.l.b16 %v3765
        %v3791 = vunpack.c.l.b16 %v3766
        %v3792 = vunpack.c.l.b16 %v3767
        %v3793 = vunpack.c.l.b16 %v3768
        %v3794 = vunpack.c.l.b16 %v3769
        %v3795 = vunpack.c.l.b16 %v3770
        %v3796 = vunpack.c.l.b16 %v3771
        %v3797 = vpack.c.b16 %v3789, %v3788
        %v3798 = vpack.c.b16 %v3791, %v3790
        %v3799 = vpack.c.b16 %v3793, %v3792
        %v3800 = vpack.c.b16 %v3795, %v3794
        %v3801 = vpack.c.b16 %v3796, %v3796
        %v3803 = vshrl.u32 %v3797, 16
        %v3805 = vshll.u32 %v3797, 16
        %v3807 = vrot.slane %v3805, 1
        %v3808 = vor.u32 %v3803, %v3807
        %v3810 = vshll.u32 %v3798, 16
        %v3812 = vrot.slane %v3810, 1
        %v3813 = vsel %vm1058, %v3808, %v3812
        %v3814 = vshrl.u32 %v3798, 16
        %v3816 = vor.u32 %v3814, %v3812
        %v3818 = vshll.u32 %v3799, 16
        %v3820 = vrot.slane %v3818, 1
        %v3821 = vsel %vm1058, %v3816, %v3820
        %v3822 = vshrl.u32 %v3799, 16
        %v3824 = vor.u32 %v3822, %v3820
        %v3826 = vshll.u32 %v3800, 16
        %v3828 = vrot.slane %v3826, 1
        %v3829 = vsel %vm1058, %v3824, %v3828
        %v3830 = vshrl.u32 %v3800, 16
        %v3832 = vor.u32 %v3830, %v3828
        %v3834 = vshll.u32 %v3801, 16
        %v3836 = vrot.slane %v3834, 1
        %v3837 = vsel %vm1058, %v3832, %v3836
        %v3844 = vunpack.c.l.b16 %v3773
        %v3845 = vunpack.c.l.b16 %v3774
        %v3846 = vunpack.c.l.b16 %v3775
        %v3847 = vunpack.c.l.b16 %v3776
        %v3848 = vunpack.c.l.b16 %v3777
        %v3849 = vunpack.c.l.b16 %v3778
        %v3850 = vpack.c.b16 %v3845, %v3844
        %v3851 = vpack.c.b16 %v3847, %v3846
        %v3852 = vpack.c.b16 %v3849, %v3848
        %v3857 = vsel %vm2810, %v3813, 0
        %v3860 = vsel %vm2810, %v3821, 0
        %v3863 = vsel %vm2810, %v3829, 0
        %v3866 = vsel %vm2810, %v3837, 0
        %3868 = vmatprep.subr.bf16.mxu0 0
        %3869 = vmatpush1.bf16.msra.mxu0 %v3850
        %3870 = vmatprep.subr.bf16.mxu0 0
        %3871 = vmatpush1.bf16.msra.mxu0 %v3851
        %3872 = vmatprep.subr.bf16.mxu0 0
        %3873 = vmatpush1.bf16.msra.mxu0 %v3852
        %3874 = vmatprep.subr.bf16.mxu0 0
        %3875 = vmatpush1.bf16.msra.mxu0 0
        %3876 = vmatprep.subr.bf16.mxu0 0
        %3877 = vmatpush1.bf16.msra.mxu0 0
        %3878 = vmatprep.subr.bf16.mxu0 0
        %3879 = vmatpush1.bf16.msra.mxu0 0
        %3880 = vmatprep.subr.bf16.mxu0 0
        %3881 = vmatpush1.bf16.msra.mxu0 0
        %3882 = vmatprep.subr.bf16.mxu0 0
        %3883 = vmatpush1.bf16.msra.mxu0 0
        %3884 = vmatprep.subr.bf16.mxu0 0
        %3885 = vmatpush1.bf16.msra.mxu0 0
        %3886 = vmatprep.subr.bf16.mxu0 0
        %3887 = vmatpush1.bf16.msra.mxu0 0
        %3888 = vmatprep.subr.bf16.mxu0 0
        %3889 = vmatpush1.bf16.msra.mxu0 0
        %3890 = vmatprep.subr.bf16.mxu0 0
        %3891 = vmatpush1.bf16.msra.mxu0 0
        %3892 = vmatprep.subr.bf16.mxu0 0
        %3893 = vmatpush1.bf16.msra.mxu0 0
        %3894 = vmatprep.subr.bf16.mxu0 0
        %3895 = vmatpush1.bf16.msra.mxu0 0
        %3896 = vmatprep.subr.bf16.mxu0 0
        %3897 = vmatpush1.bf16.msra.mxu0 0
        %3898 = vmatprep.subr.bf16.mxu0 0
        %3899 = vmatpush1.bf16.msra.mxu0 0
        %3900 = vmatprep.mubr.bf16.mxu0 0
        %3901 = vmatmul.mubr.bf16.gmra.mrb[0].mxu0 %v3857
        %v3902 = vpop.f32.mrb[0].mxu0
        %v3903 = vadd.f32 0.0, %v3902
        %v3904 = vpop.f32.mrb[0].mxu0
        %v3905 = vpop.f32.mrb[0].mxu0
        %v3906 = vadd.f32 0.0, %v3905
        %v3907 = vpop.f32.mrb[0].mxu0
        %3908 = vmatprep.mubr.bf16.mxu0 0
        %3909 = vmatmul.mubr.bf16.gmra.mrb[0].mxu0 %v3860
        %v3910 = vpop.f32.mrb[0].mxu0
        %v3911 = vadd.f32 0.0, %v3910
        %v3912 = vpop.f32.mrb[0].mxu0
        %v3913 = vpop.f32.mrb[0].mxu0
        %v3914 = vadd.f32 0.0, %v3913
        %v3915 = vpop.f32.mrb[0].mxu0
        %3916 = vmatprep.mubr.bf16.mxu0 0
        %3917 = vmatmul.mubr.bf16.gmra.mrb[0].mxu0 %v3863
        %v3918 = vpop.f32.mrb[0].mxu0
        %v3919 = vadd.f32 0.0, %v3918
        %v3920 = vpop.f32.mrb[0].mxu0
        %v3921 = vpop.f32.mrb[0].mxu0
        %v3922 = vadd.f32 0.0, %v3921
        %v3923 = vpop.f32.mrb[0].mxu0
        %3924 = vmatprep.mubr.bf16.mxu0 0
        %3925 = vmatmul.mubr.bf16.gmra.mrb[0].mxu0 %v3866
        %v3926 = vpop.f32.mrb[0].mxu0
        %v3927 = vadd.f32 0.0, %v3926
        %v3928 = vpop.f32.mrb[0].mxu0
        %v3929 = vpop.f32.mrb[0].mxu0
        %v3930 = vadd.f32 0.0, %v3929
        %v3931 = vpop.f32.mrb[0].mxu0
        %3932 = vdwg.mxu0
        %v3933 = vadd.f32 %v3755, %v3903
        %v3934 = vadd.f32 %v3756, %v3906
        %v3935 = vadd.f32 %v3757, %v3911
        %v3936 = vadd.f32 %v3758, %v3914
        %v3937 = vadd.f32 %v3759, %v3919
        %v3938 = vadd.f32 %v3760, %v3922
        %v3939 = vadd.f32 %v3761, %v3927
        %v3940 = vadd.f32 %v3762, %v3930
        %v3941 = vld [vmem:[#allocation3 + $0x8] sm:$0xe]
        %v3942 = vsel %vm1376, %v3941, 0
        %v3943 = vsel %vm1377, %v3764, 0
        %v3944 = vsel %vm1378, %v3765, 0
        %v3945 = vsel %vm1379, %v3766, 0
        %v3946 = vsel %vm1380, %v3767, 0
        %v3947 = vsel %vm1381, %v3768, 0
        %v3948 = vsel %vm1382, %v3769, 0
        %v3949 = vsel %vm1383, %v3770, 0
        %v3950 = vsel %vm1384, %v3771, 0
        %s3951 = scalar_lea.vmem %s5, 192
        %v3952 = vld [vmem:[%s3951] sm:$0xf]
        %v3953 = vld [vmem:[%s3951 + $0x4] sm:$0xf]
        %v3954 = vld [vmem:[%s3951 + $0x8] sm:$0xf]
        %v3955 = vld [vmem:[%s3951 + $0xc] sm:$0xf]
        %v3956 = vld [vmem:[%s3951 + $0x10] sm:$0xf]
        %v3957 = vld [vmem:[%s3951 + $0x14] sm:$0xf]
        %v3967 = vunpack.c.l.b16 %v3942
        %v3968 = vunpack.c.l.b16 %v3943
        %v3969 = vunpack.c.l.b16 %v3944
        %v3970 = vunpack.c.l.b16 %v3945
        %v3971 = vunpack.c.l.b16 %v3946
        %v3972 = vunpack.c.l.b16 %v3947
        %v3973 = vunpack.c.l.b16 %v3948
        %v3974 = vunpack.c.l.b16 %v3949
        %v3975 = vunpack.c.l.b16 %v3950
        %v3976 = vpack.c.b16 %v3968, %v3967
        %v3977 = vpack.c.b16 %v3970, %v3969
        %v3978 = vpack.c.b16 %v3972, %v3971
        %v3979 = vpack.c.b16 %v3974, %v3973
        %v3980 = vpack.c.b16 %v3975, %v3975
        %v3981 = vrot.slane %v3976, 1
        %v3982 = vrot.slane %v3977, 1
        %v3983 = vsel %vm1426, %v3981, %v3982
        %v3984 = vrot.slane %v3978, 1
        %v3985 = vsel %vm1426, %v3982, %v3984
        %v3986 = vrot.slane %v3979, 1
        %v3987 = vsel %vm1426, %v3984, %v3986
        %v3988 = vrot.slane %v3980, 1
        %v3989 = vsel %vm1426, %v3986, %v3988
        %v3996 = vunpack.c.l.b16 %v3952
        %v3997 = vunpack.c.l.b16 %v3953
        %v3998 = vunpack.c.l.b16 %v3954
        %v3999 = vunpack.c.l.b16 %v3955
        %v4000 = vunpack.c.l.b16 %v3956
        %v4001 = vunpack.c.l.b16 %v3957
        %v4002 = vpack.c.b16 %v3997, %v3996
        %v4003 = vpack.c.b16 %v3999, %v3998
        %v4004 = vpack.c.b16 %v4001, %v4000
        %v4009 = vsel %vm2810, %v3983, 0
        %v4012 = vsel %vm2810, %v3985, 0
        %v4015 = vsel %vm2810, %v3987, 0
        %v4018 = vsel %vm2810, %v3989, 0
        %4020 = vmatprep.subr.bf16.mxu0 0
        %4021 = vmatpush1.bf16.msra.mxu0 %v4002
        %4022 = vmatprep.subr.bf16.mxu0 0
        %4023 = vmatpush1.bf16.msra.mxu0 %v4003
        %4024 = vmatprep.subr.bf16.mxu0 0
        %4025 = vmatpush1.bf16.msra.mxu0 %v4004
        %4026 = vmatprep.subr.bf16.mxu0 0
        %4027 = vmatpush1.bf16.msra.mxu0 0
        %4028 = vmatprep.subr.bf16.mxu0 0
        %4029 = vmatpush1.bf16.msra.mxu0 0
        %4030 = vmatprep.subr.bf16.mxu0 0
        %4031 = vmatpush1.bf16.msra.mxu0 0
        %4032 = vmatprep.subr.bf16.mxu0 0
        %4033 = vmatpush1.bf16.msra.mxu0 0
        %4034 = vmatprep.subr.bf16.mxu0 0
        %4035 = vmatpush1.bf16.msra.mxu0 0
        %4036 = vmatprep.subr.bf16.mxu0 0
        %4037 = vmatpush1.bf16.msra.mxu0 0
        %4038 = vmatprep.subr.bf16.mxu0 0
        %4039 = vmatpush1.bf16.msra.mxu0 0
        %4040 = vmatprep.subr.bf16.mxu0 0
        %4041 = vmatpush1.bf16.msra.mxu0 0
        %4042 = vmatprep.subr.bf16.mxu0 0
        %4043 = vmatpush1.bf16.msra.mxu0 0
        %4044 = vmatprep.subr.bf16.mxu0 0
        %4045 = vmatpush1.bf16.msra.mxu0 0
        %4046 = vmatprep.subr.bf16.mxu0 0
        %4047 = vmatpush1.bf16.msra.mxu0 0
        %4048 = vmatprep.subr.bf16.mxu0 0
        %4049 = vmatpush1.bf16.msra.mxu0 0
        %4050 = vmatprep.subr.bf16.mxu0 0
        %4051 = vmatpush1.bf16.msra.mxu0 0
        %4052 = vmatprep.mubr.bf16.mxu0 0
        %4053 = vmatmul.mubr.bf16.gmra.mrb[0].mxu0 %v4009
        %v4054 = vpop.f32.mrb[0].mxu0
        %v4055 = vadd.f32 0.0, %v4054
        %v4056 = vpop.f32.mrb[0].mxu0
        %v4057 = vpop.f32.mrb[0].mxu0
        %v4058 = vadd.f32 0.0, %v4057
        %v4059 = vpop.f32.mrb[0].mxu0
        %4060 = vmatprep.mubr.bf16.mxu0 0
        %4061 = vmatmul.mubr.bf16.gmra.mrb[0].mxu0 %v4012
        %v4062 = vpop.f32.mrb[0].mxu0
        %v4063 = vadd.f32 0.0, %v4062
        %v4064 = vpop.f32.mrb[0].mxu0
        %v4065 = vpop.f32.mrb[0].mxu0
        %v4066 = vadd.f32 0.0, %v4065
        %v4067 = vpop.f32.mrb[0].mxu0
        %4068 = vmatprep.mubr.bf16.mxu0 0
        %4069 = vmatmul.mubr.bf16.gmra.mrb[0].mxu0 %v4015
        %v4070 = vpop.f32.mrb[0].mxu0
        %v4071 = vadd.f32 0.0, %v4070
        %v4072 = vpop.f32.mrb[0].mxu0
        %v4073 = vpop.f32.mrb[0].mxu0
        %v4074 = vadd.f32 0.0, %v4073
        %v4075 = vpop.f32.mrb[0].mxu0
        %4076 = vmatprep.mubr.bf16.mxu0 0
        %4077 = vmatmul.mubr.bf16.gmra.mrb[0].mxu0 %v4018
        %v4078 = vpop.f32.mrb[0].mxu0
        %v4079 = vadd.f32 0.0, %v4078
        %v4080 = vpop.f32.mrb[0].mxu0
        %v4081 = vpop.f32.mrb[0].mxu0
        %v4082 = vadd.f32 0.0, %v4081
        %v4083 = vpop.f32.mrb[0].mxu0
        %4084 = vdwg.mxu0
        %v4085 = vadd.f32 %v3933, %v4055
        %v4086 = vadd.f32 %v3934, %v4058
        %v4087 = vadd.f32 %v3935, %v4063
        %v4088 = vadd.f32 %v3936, %v4066
        %v4089 = vadd.f32 %v3937, %v4071
        %v4090 = vadd.f32 %v3938, %v4074
        %v4091 = vadd.f32 %v3939, %v4079
        %v4092 = vadd.f32 %v3940, %v4082
        %v4093 = vld [vmem:[%s6] sm:$0x1]
        %v4095 = vlaneseq
        %v4096 = vshrl.u32 %v4095, 7
        %v4097 = vsub.s32 0, %v4096
        %v4098 = vrot.slane %v4093, %v4097
        %v4100 = vadd.f32 %v4085, %v4098
        %v4101 = vadd.f32 %v4086, %v4098
        %v4102 = vadd.f32 %v4087, %v4098
        %v4103 = vadd.f32 %v4088, %v4098
        %v4104 = vadd.f32 %v4089, %v4098
        %v4105 = vadd.f32 %v4090, %v4098
        %v4106 = vadd.f32 %v4091, %v4098
        %v4107 = vadd.f32 %v4092, %v4098
        %v4108 = vmax.f32 %v4100, 0.0
        %v4109 = vmax.f32 %v4101, 0.0
        %v4110 = vmax.f32 %v4102, 0.0
        %v4111 = vmax.f32 %v4103, 0.0
        %v4112 = vmax.f32 %v4104, 0.0
        %v4113 = vmax.f32 %v4105, 0.0
        %v4114 = vmax.f32 %v4106, 0.0
        %v4115 = vmax.f32 %v4107, 0.0
        %v4116 = vpack.c.bf16 %v4109, %v4108
        %v4117 = vpack.c.bf16 %v4111, %v4110
        %v4118 = vpack.c.bf16 %v4113, %v4112
        %v4119 = vpack.c.bf16 %v4115, %v4114
        %4120 = vrot.lane.b32.xlu0 %v2568, 32
        %v4121 = vpop.permute.xlu0 %4120
        %4122 = vrot.lane.b32.xlu0 %v2569, 32
        %v4123 = vpop.permute.xlu0 %4122
        %4124 = vrot.lane.b32.xlu0 %v2570, 32
        %v4125 = vpop.permute.xlu0 %4124
        %4126 = vrot.lane.b32.xlu0 %v2571, 32
        %v4127 = vpop.permute.xlu0 %4126
        %4132 = vrot.lane.b32.xlu0 %v4116, 64
        %v4133 = vpop.permute.xlu0 %4132
        %4134 = vrot.lane.b32.xlu0 %v4117, 64
        %v4135 = vpop.permute.xlu0 %4134
        %4136 = vrot.lane.b32.xlu0 %v4118, 64
        %v4137 = vpop.permute.xlu0 %4136
        %4138 = vrot.lane.b32.xlu0 %v4119, 64
        %v4139 = vpop.permute.xlu0 %4138
        %vm4140 = vcmask 261120
        %v4143 = vsel %vm4140, %v840, %v4121
        %v4146 = vsel %vm4140, %v841, %v4123
        %v4149 = vsel %vm4140, %v842, %v4125
        %v4152 = vsel %vm4140, %v843, %v4127
        %v4154 = vsel %vm552, %v4143, %v4133
        %v4157 = vsel %vm552, %v4146, %v4135
        %v4160 = vsel %vm552, %v4149, %v4137
        %v4163 = vsel %vm552, %v4152, %v4139
        %v4165 = vld [vmem:[%s7] sm:$0xff]
        %v4166 = vld [vmem:[%s7 + $0x8] sm:$0xf]
        %v4167 = vld [vmem:[%s7 + $0xc] sm:$0xff]
        %v4168 = vld [vmem:[%s7 + $0x14] sm:$0xf]
        %v4169 = vld [vmem:[%s7 + $0x18] sm:$0xff]
        %v4170 = vld [vmem:[%s7 + $0x20] sm:$0xf]
        %v4171 = vld [vmem:[%s7 + $0x24] sm:$0xff]
        %v4172 = vld [vmem:[%s7 + $0x2c] sm:$0xf]
        %v4173 = vld [vmem:[%s7 + $0x30] sm:$0xff]
        %v4174 = vld [vmem:[%s7 + $0x38] sm:$0xf]
        %v4175 = vld [vmem:[%s7 + $0x3c] sm:$0xff]
        %v4176 = vld [vmem:[%s7 + $0x44] sm:$0xf]
        %v4177 = vld [vmem:[%s7 + $0x48] sm:$0xff]
        %v4178 = vld [vmem:[%s7 + $0x50] sm:$0xf]
        %v4179 = vld [vmem:[%s7 + $0x54] sm:$0xff]
        %v4180 = vld [vmem:[%s7 + $0x5c] sm:$0xf]
        %v4181 = vld [vmem:[%s7 + $0x60] sm:$0xff]
        %v4182 = vld [vmem:[%s7 + $0x68] sm:$0xf]
        %v4183 = vld [vmem:[%s7 + $0x6c] sm:$0xff]
        %v4184 = vld [vmem:[%s7 + $0x74] sm:$0xf]
        %v4185 = vld [vmem:[%s7 + $0x78] sm:$0xff]
        %v4186 = vld [vmem:[%s7 + $0x80] sm:$0xf]
        %v4187 = vld [vmem:[%s7 + $0x84] sm:$0xff]
        %v4188 = vld [vmem:[%s7 + $0x8c] sm:$0xf]
        %v4189 = vld [vmem:[%s7 + $0x90] sm:$0xff]
        %v4190 = vld [vmem:[%s7 + $0x98] sm:$0xf]
        %v4191 = vld [vmem:[%s7 + $0x9c] sm:$0xff]
        %v4192 = vld [vmem:[%s7 + $0xa4] sm:$0xf]
        %v4193 = vld [vmem:[%s7 + $0xa8] sm:$0xff]
        %v4194 = vld [vmem:[%s7 + $0xb0] sm:$0xf]
        %v4195 = vld [vmem:[%s7 + $0xb4] sm:$0xff]
        %v4196 = vld [vmem:[%s7 + $0xbc] sm:$0xf]
        %v4197 = vld [vmem:[%s8] sm:$0x7]
        %v4199 = vlaneseq
        %v4200 = vshrl.u32 %v4199, 7
        %v4201 = vsub.s32 0, %v4200
        %v4202 = vrot.slane %v4197, %v4201
        %v4203 = vlaneseq
        %v4204 = vshrl.u32 %v4203, 7
        %v4205 = vsub.s32 1, %v4204
        %v4206 = vrot.slane %v4197, %v4205
        %v4207 = vlaneseq
        %v4208 = vshrl.u32 %v4207, 7
        %v4209 = vsub.s32 2, %v4208
        %v4210 = vrot.slane %v4197, %v4209
        %v4246 = vunpack.c.l.b16 %v4165
        %v4247 = vunpack.c.h.b16 %v4165
        %v4248 = vunpack.c.l.b16 %v4166
        %v4249 = vunpack.c.l.b16 %v4167
        %v4250 = vunpack.c.h.b16 %v4167
        %v4251 = vunpack.c.l.b16 %v4168
        %v4252 = vunpack.c.l.b16 %v4169
        %v4253 = vunpack.c.h.b16 %v4169
        %v4254 = vunpack.c.l.b16 %v4170
        %v4255 = vunpack.c.l.b16 %v4171
        %v4256 = vunpack.c.h.b16 %v4171
        %v4257 = vunpack.c.l.b16 %v4172
        %v4258 = vunpack.c.l.b16 %v4173
        %v4259 = vunpack.c.h.b16 %v4173
        %v4260 = vunpack.c.l.b16 %v4174
        %v4261 = vunpack.c.l.b16 %v4175
        %v4262 = vunpack.c.h.b16 %v4175
        %v4263 = vunpack.c.l.b16 %v4176
        %v4264 = vunpack.c.l.b16 %v4177
        %v4265 = vunpack.c.h.b16 %v4177
        %v4266 = vunpack.c.l.b16 %v4178
        %v4267 = vunpack.c.l.b16 %v4179
        %v4268 = vunpack.c.h.b16 %v4179
        %v4269 = vunpack.c.l.b16 %v4180
        %v4270 = vunpack.c.l.b16 %v4181
        %v4271 = vunpack.c.h.b16 %v4181
        %v4272 = vunpack.c.l.b16 %v4182
        %v4273 = vunpack.c.l.b16 %v4183
        %v4274 = vunpack.c.h.b16 %v4183
        %v4275 = vunpack.c.l.b16 %v4184
        %v4276 = vunpack.c.l.b16 %v4185
        %v4277 = vunpack.c.h.b16 %v4185
        %v4278 = vunpack.c.l.b16 %v4186
        %v4279 = vunpack.c.l.b16 %v4187
        %v4280 = vunpack.c.h.b16 %v4187
        %v4281 = vunpack.c.l.b16 %v4188
        %v4282 = vunpack.c.l.b16 %v4189
        %v4283 = vunpack.c.h.b16 %v4189
        %v4284 = vunpack.c.l.b16 %v4190
        %v4285 = vunpack.c.l.b16 %v4191
        %v4286 = vunpack.c.h.b16 %v4191
        %v4287 = vunpack.c.l.b16 %v4192
        %v4288 = vunpack.c.l.b16 %v4193
        %v4289 = vunpack.c.h.b16 %v4193
        %v4290 = vunpack.c.l.b16 %v4194
        %v4291 = vunpack.c.l.b16 %v4195
        %v4292 = vunpack.c.h.b16 %v4195
        %v4293 = vunpack.c.l.b16 %v4196
        %v4294 = vpack.c.b16 %v4249, %v4246
        %v4295 = vpack.c.b16 %v4250, %v4247
        %v4296 = vpack.c.b16 %v4251, %v4248
        %v4297 = vpack.c.b16 %v4255, %v4252
        %v4298 = vpack.c.b16 %v4256, %v4253
        %v4299 = vpack.c.b16 %v4257, %v4254
        %v4300 = vpack.c.b16 %v4261, %v4258
        %v4301 = vpack.c.b16 %v4262, %v4259
        %v4302 = vpack.c.b16 %v4263, %v4260
        %v4303 = vpack.c.b16 %v4267, %v4264
        %v4304 = vpack.c.b16 %v4268, %v4265
        %v4305 = vpack.c.b16 %v4269, %v4266
        %v4306 = vpack.c.b16 %v4273, %v4270
        %v4307 = vpack.c.b16 %v4274, %v4271
        %v4308 = vpack.c.b16 %v4275, %v4272
        %v4309 = vpack.c.b16 %v4279, %v4276
        %v4310 = vpack.c.b16 %v4280, %v4277
        %v4311 = vpack.c.b16 %v4281, %v4278
        %v4312 = vpack.c.b16 %v4285, %v4282
        %v4313 = vpack.c.b16 %v4286, %v4283
        %v4314 = vpack.c.b16 %v4287, %v4284
        %v4315 = vpack.c.b16 %v4291, %v4288
        %v4316 = vpack.c.b16 %v4292, %v4289
        %v4317 = vpack.c.b16 %v4293, %v4290
        %4342 = vmatprep.subr.bf16.mxu0 %v4295
        %4343 = vmatpush1.bf16.msra.mxu0 %v4294
        %4344 = vmatprep.subr.bf16.mxu0 %v4298
        %4345 = vmatpush1.bf16.msra.mxu0 %v4297
        %4346 = vmatprep.subr.bf16.mxu0 %v4301
        %4347 = vmatpush1.bf16.msra.mxu0 %v4300
        %4348 = vmatprep.subr.bf16.mxu0 %v4304
        %4349 = vmatpush1.bf16.msra.mxu0 %v4303
        %4350 = vmatprep.subr.bf16.mxu0 %v4307
        %4351 = vmatpush1.bf16.msra.mxu0 %v4306
        %4352 = vmatprep.subr.bf16.mxu0 %v4310
        %4353 = vmatpush1.bf16.msra.mxu0 %v4309
        %4354 = vmatprep.subr.bf16.mxu0 %v4313
        %4355 = vmatpush1.bf16.msra.mxu0 %v4312
        %4356 = vmatprep.subr.bf16.mxu0 %v4316
        %4357 = vmatpush1.bf16.msra.mxu0 %v4315
        %4358 = vmatprep.subr.bf16.mxu0 0
        %4359 = vmatpush1.bf16.msra.mxu0 0
        %4360 = vmatprep.subr.bf16.mxu0 0
        %4361 = vmatpush1.bf16.msra.mxu0 0
        %4362 = vmatprep.subr.bf16.mxu0 0
        %4363 = vmatpush1.bf16.msra.mxu0 0
        %4364 = vmatprep.subr.bf16.mxu0 0
        %4365 = vmatpush1.bf16.msra.mxu0 0
        %4366 = vmatprep.subr.bf16.mxu0 0
        %4367 = vmatpush1.bf16.msra.mxu0 0
        %4368 = vmatprep.subr.bf16.mxu0 0
        %4369 = vmatpush1.bf16.msra.mxu0 0
        %4370 = vmatprep.subr.bf16.mxu0 0
        %4371 = vmatpush1.bf16.msra.mxu0 0
        %4372 = vmatprep.subr.bf16.mxu0 0
        %4373 = vmatpush1.bf16.msra.mxu0 0
        %4374 = vmatprep.mubr.bf16.mxu0 0
        %4375 = vmatmul.mubr.bf16.gmra.mrb[0].mxu0 %v4154
        %v4376 = vpop.f32.mrb[0].mxu0
        %v4377 = vadd.f32 %v4202, %v4376
        %v4378 = vpop.f32.mrb[0].mxu0
        %v4379 = vadd.f32 %v4206, %v4378
        %v4380 = vpop.f32.mrb[0].mxu0
        %v4381 = vadd.f32 %v4202, %v4380
        %v4382 = vpop.f32.mrb[0].mxu0
        %v4383 = vadd.f32 %v4206, %v4382
        %4384 = vmatprep.mubr.bf16.mxu0 0
        %4385 = vmatmul.mubr.bf16.gmra.mrb[0].mxu0 %v4157
        %v4386 = vpop.f32.mrb[0].mxu0
        %v4387 = vadd.f32 %v4202, %v4386
        %v4388 = vpop.f32.mrb[0].mxu0
        %v4389 = vadd.f32 %v4206, %v4388
        %v4390 = vpop.f32.mrb[0].mxu0
        %v4391 = vadd.f32 %v4202, %v4390
        %v4392 = vpop.f32.mrb[0].mxu0
        %v4393 = vadd.f32 %v4206, %v4392
        %4394 = vmatprep.mubr.bf16.mxu0 0
        %4395 = vmatmul.mubr.bf16.gmra.mrb[0].mxu0 %v4160
        %v4396 = vpop.f32.mrb[0].mxu0
        %v4397 = vadd.f32 %v4202, %v4396
        %v4398 = vpop.f32.mrb[0].mxu0
        %v4399 = vadd.f32 %v4206, %v4398
        %v4400 = vpop.f32.mrb[0].mxu0
        %v4401 = vadd.f32 %v4202, %v4400
        %v4402 = vpop.f32.mrb[0].mxu0
        %v4403 = vadd.f32 %v4206, %v4402
        %4404 = vmatprep.mubr.bf16.mxu0 0
        %4405 = vmatmul.mubr.bf16.gmra.mrb[0].mxu0 %v4163
        %v4406 = vpop.f32.mrb[0].mxu0
        %v4407 = vadd.f32 %v4202, %v4406
        %v4408 = vpop.f32.mrb[0].mxu0
        %v4409 = vadd.f32 %v4206, %v4408
        %v4410 = vpop.f32.mrb[0].mxu0
        %v4411 = vadd.f32 %v4202, %v4410
        %v4412 = vpop.f32.mrb[0].mxu0
        %v4413 = vadd.f32 %v4206, %v4412
        %4414 = vdwg.mxu0
        %4415 = vmatprep.subr.bf16.mxu0 0
        %4416 = vmatpush1.bf16.msra.mxu0 %v4296
        %4417 = vmatprep.subr.bf16.mxu0 0
        %4418 = vmatpush1.bf16.msra.mxu0 %v4299
        %4419 = vmatprep.subr.bf16.mxu0 0
        %4420 = vmatpush1.bf16.msra.mxu0 %v4302
        %4421 = vmatprep.subr.bf16.mxu0 0
        %4422 = vmatpush1.bf16.msra.mxu0 %v4305
        %4423 = vmatprep.subr.bf16.mxu0 0
        %4424 = vmatpush1.bf16.msra.mxu0 %v4308
        %4425 = vmatprep.subr.bf16.mxu0 0
        %4426 = vmatpush1.bf16.msra.mxu0 %v4311
        %4427 = vmatprep.subr.bf16.mxu0 0
        %4428 = vmatpush1.bf16.msra.mxu0 %v4314
        %4429 = vmatprep.subr.bf16.mxu0 0
        %4430 = vmatpush1.bf16.msra.mxu0 %v4317
        %4431 = vmatprep.subr.bf16.mxu0 0
        %4432 = vmatpush1.bf16.msra.mxu0 0
        %4433 = vmatprep.subr.bf16.mxu0 0
        %4434 = vmatpush1.bf16.msra.mxu0 0
        %4435 = vmatprep.subr.bf16.mxu0 0
        %4436 = vmatpush1.bf16.msra.mxu0 0
        %4437 = vmatprep.subr.bf16.mxu0 0
        %4438 = vmatpush1.bf16.msra.mxu0 0
        %4439 = vmatprep.subr.bf16.mxu0 0
        %4440 = vmatpush1.bf16.msra.mxu0 0
        %4441 = vmatprep.subr.bf16.mxu0 0
        %4442 = vmatpush1.bf16.msra.mxu0 0
        %4443 = vmatprep.subr.bf16.mxu0 0
        %4444 = vmatpush1.bf16.msra.mxu0 0
        %4445 = vmatprep.subr.bf16.mxu0 0
        %4446 = vmatpush1.bf16.msra.mxu0 0
        %4447 = vmatprep.mubr.bf16.mxu0 0
        %4448 = vmatmul.mubr.bf16.gmra.mrb[0].mxu0 %v4154
        %v4449 = vpop.f32.mrb[0].mxu0
        %v4450 = vadd.f32 %v4210, %v4449
        %v4451 = vpop.f32.mrb[0].mxu0
        %v4452 = vpop.f32.mrb[0].mxu0
        %v4453 = vadd.f32 %v4210, %v4452
        %v4454 = vpop.f32.mrb[0].mxu0
        %4455 = vmatprep.mubr.bf16.mxu0 0
        %4456 = vmatmul.mubr.bf16.gmra.mrb[0].mxu0 %v4157
        %v4457 = vpop.f32.mrb[0].mxu0
        %v4458 = vadd.f32 %v4210, %v4457
        %v4459 = vpop.f32.mrb[0].mxu0
        %v4460 = vpop.f32.mrb[0].mxu0
        %v4461 = vadd.f32 %v4210, %v4460
        %v4462 = vpop.f32.mrb[0].mxu0
        %4463 = vmatprep.mubr.bf16.mxu0 0
        %4464 = vmatmul.mubr.bf16.gmra.mrb[0].mxu0 %v4160
        %v4465 = vpop.f32.mrb[0].mxu0
        %v4466 = vadd.f32 %v4210, %v4465
        %v4467 = vpop.f32.mrb[0].mxu0
        %v4468 = vpop.f32.mrb[0].mxu0
        %v4469 = vadd.f32 %v4210, %v4468
        %v4470 = vpop.f32.mrb[0].mxu0
        %4471 = vmatprep.mubr.bf16.mxu0 0
        %4472 = vmatmul.mubr.bf16.gmra.mrb[0].mxu0 %v4163
        %v4473 = vpop.f32.mrb[0].mxu0
        %v4474 = vadd.f32 %v4210, %v4473
        %v4475 = vpop.f32.mrb[0].mxu0
        %v4476 = vpop.f32.mrb[0].mxu0
        %v4477 = vadd.f32 %v4210, %v4476
        %v4478 = vpop.f32.mrb[0].mxu0
        %4479 = vdwg.mxu0
        %v4480 = vadd.f32 %v4377, %v349
        %v4481 = vadd.f32 %v4379, %v350
        %v4482 = vadd.f32 %v4450, %v351
        %v4483 = vadd.f32 %v4381, %v352
        %v4484 = vadd.f32 %v4383, %v353
        %v4485 = vadd.f32 %v4453, %v354
        %v4486 = vadd.f32 %v4387, %v355
        %v4487 = vadd.f32 %v4389, %v356
        %v4488 = vadd.f32 %v4458, %v357
        %v4489 = vadd.f32 %v4391, %v358
        %v4490 = vadd.f32 %v4393, %v359
        %v4491 = vadd.f32 %v4461, %v360
        %v4492 = vadd.f32 %v4397, %v361
        %v4493 = vadd.f32 %v4399, %v362
        %v4494 = vadd.f32 %v4466, %v363
        %v4495 = vadd.f32 %v4401, %v364
        %v4496 = vadd.f32 %v4403, %v365
        %v4497 = vadd.f32 %v4469, %v366
        %v4498 = vadd.f32 %v4407, %v367
        %v4499 = vadd.f32 %v4409, %v368
        %v4500 = vadd.f32 %v4474, %v369
        %v4501 = vadd.f32 %v4411, %v370
        %v4502 = vadd.f32 %v4413, %v371
        %v4503 = vadd.f32 %v4477, %v372
        %v4504 = vmax.f32 %v4480, 0.0
        %v4505 = vmax.f32 %v4481, 0.0
        %v4506 = vmax.f32 %v4482, 0.0
        %v4507 = vmax.f32 %v4483, 0.0
        %v4508 = vmax.f32 %v4484, 0.0
        %v4509 = vmax.f32 %v4485, 0.0
        %v4510 = vmax.f32 %v4486, 0.0
        %v4511 = vmax.f32 %v4487, 0.0
        %v4512 = vmax.f32 %v4488, 0.0
        %v4513 = vmax.f32 %v4489, 0.0
        %v4514 = vmax.f32 %v4490, 0.0
        %v4515 = vmax.f32 %v4491, 0.0
        %v4516 = vmax.f32 %v4492, 0.0
        %v4517 = vmax.f32 %v4493, 0.0
        %v4518 = vmax.f32 %v4494, 0.0
        %v4519 = vmax.f32 %v4495, 0.0
        %v4520 = vmax.f32 %v4496, 0.0
        %v4521 = vmax.f32 %v4497, 0.0
        %v4522 = vmax.f32 %v4498, 0.0
        %v4523 = vmax.f32 %v4499, 0.0
        %v4524 = vmax.f32 %v4500, 0.0
        %v4525 = vmax.f32 %v4501, 0.0
        %v4526 = vmax.f32 %v4502, 0.0
        %v4527 = vmax.f32 %v4503, 0.0
        %4528 = vst [vmem:[%s340] sm:$0xff] %v4504
        %4529 = vst [vmem:[%s340 + $0x8] sm:$0xff] %v4505
        %4530 = vst.msk [vmem:[%s340 + $0x10] sm:$0xff] %vm552, %v4506
        %4531 = vst [vmem:[%s340 + $0x18] sm:$0xff] %v4507
        %4532 = vst [vmem:[%s340 + $0x20] sm:$0xff] %v4508
        %4533 = vst.msk [vmem:[%s340 + $0x28] sm:$0xff] %vm552, %v4509
        %4534 = vst [vmem:[%s340 + $0x30] sm:$0xff] %v4510
        %4535 = vst [vmem:[%s340 + $0x38] sm:$0xff] %v4511
        %4536 = vst.msk [vmem:[%s340 + $0x40] sm:$0xff] %vm552, %v4512
        %4537 = vst [vmem:[%s340 + $0x48] sm:$0xff] %v4513
        %4538 = vst [vmem:[%s340 + $0x50] sm:$0xff] %v4514
        %4539 = vst.msk [vmem:[%s340 + $0x58] sm:$0xff] %vm552, %v4515
        %4540 = vst [vmem:[%s340 + $0x60] sm:$0xff] %v4516
        %4541 = vst [vmem:[%s340 + $0x68] sm:$0xff] %v4517
        %4542 = vst.msk [vmem:[%s340 + $0x70] sm:$0xff] %vm552, %v4518
        %4543 = vst [vmem:[%s340 + $0x78] sm:$0xff] %v4519
        %4544 = vst [vmem:[%s340 + $0x80] sm:$0xff] %v4520
        %4545 = vst.msk [vmem:[%s340 + $0x88] sm:$0xff] %vm552, %v4521
        %4546 = vst [vmem:[%s340 + $0x90] sm:$0xff] %v4522
        %4547 = vst [vmem:[%s340 + $0x98] sm:$0xff] %v4523
        %4548 = vst.msk [vmem:[%s340 + $0xa0] sm:$0xff] %vm552, %v4524
        %4549 = vst [vmem:[%s340 + $0xa8] sm:$0xff] %v4525
        %4550 = vst [vmem:[%s340 + $0xb0] sm:$0xff] %v4526
        %4551 = vst.msk [vmem:[%s340 + $0xb8] sm:$0xff] %vm552, %v4527
        %s4552 = sand.u32 %s226, 1
        %s4553 = scalar_lea.sflag [#allocation6], %s4552
        %s4554 = sand.u32 %s226, 1
        %s4555 = smul.addr %s4554, 192
        %s4556 = scalar_lea.vmem [#allocation7], %s4555
        // Predicated region
        $region61: #{tpu_custom_call.1} parent=55 // pred_check
          %p4557 = pneg %p236
        $region62: #{tpu_custom_call.1} parent=55 // pred_check_branch
          %4559 = sbr.rel (%p4557) target = $region64
        $region63: #{tpu_custom_call.1} parent=55 // pred_region
          %s4561 = ssub.s32 3072, 3072
          %4562 = vsyncadd %s4553, %s4561
          %s4563 = smul.addr %s24, 24
          %s4564 = smul.addr %s4563, 128
          %s4565 = scalar_lea.hbm %s9, %s4564
          %s4566 = sshll.u32 %s4556, 4
          %s4567 = int_to_ptr.vmem [resolvable:$true] %s4566
          %4572 = dma.vmem_to_hbm [thread:$0]  %s4567, 3072, %s4565, %s4553, 384, 384, 24
        $region64: #{tpu_custom_call.1} parent=55 // pred_fallthru
          _
      $region56: #{tpu_custom_call.1} parent=5 // pred_fallthru
        _
      %p4573 = scmp.le.s32.totalorder 2, %s19
      // Predicated region
      $region65: #{tpu_custom_call.1} parent=5 // pred_check
        %p4574 = pneg %p4573
      $region66: #{tpu_custom_call.1} parent=5 // pred_check_branch
        %4576 = sbr.rel (%p4574) target = $region68
      $region67: #{tpu_custom_call.1} parent=5 // pred_region
        %s4577 = ssub.s32 %s19, 2
        // Predicated region
        $region69: #{tpu_custom_call.1} parent=67 // pred_check
          %p4578 = pneg %p242
        $region70: #{tpu_custom_call.1} parent=67 // pred_check_branch
          %4580 = sbr.rel (%p4578) target = $region72
        $region71: #{tpu_custom_call.1} parent=67 // pred_region
          %s4581 = sand.u32 %s227, 1
          %s4582 = scalar_lea.sflag [#allocation6], %s4581
          %s4583 = sand.u32 %s227, 1
          %s4584 = smul.addr %s4583, 192
          %s4585 = scalar_lea.vmem [#allocation7], %s4584
          %4586 = dma.done %s4582, 3072
        $region72: #{tpu_custom_call.1} parent=67 // pred_fallthru
          _
      $region68: #{tpu_custom_call.1} parent=5 // pred_fallthru
        _
    $region6: #{tpu_custom_call.1} parent=1 // loop_footer
      %s23 = sadd.s32 1, %s19
    $region7: #{tpu_custom_call.1} parent=1 // loop_footer_branch
      %18 = sbr.rel target = $region3
    $region8: #{tpu_custom_call.1} parent=1 // loop_exit
      _
    %4587 = vsyncpa [#allocation5], 1
    %s4588 = scalar_lea.sflag [#allocation5], 1
    %4589 = vsyncpa %s4588, 1
    %4590 = vsyncpa [#allocation6], 1
    %s4591 = scalar_lea.sflag [#allocation6], 1
    %4592 = vsyncpa %s4591, 1

</llo_original>
